<compile_context>
chip_gen: v7x
topology: tpu7x:2x2x1
jax: 0.10.0
libtpu: 0.0.40
codegen_flags: <defaults>
</compile_context>

<pallas_src>
import numpy as np
import jax
import jax.numpy as jnp
from jax.experimental import pallas as pl
from jax.experimental.pallas import tpu as pltpu


# ----------------------------- fused Pallas kernel -----------------------------

def _cnn_fused_kernel(x_ref, w1b_ref, b1_ref, s1_ref, w2b_ref, b2_ref, s2_ref,
                      wout_ref, bout_ref, o_ref, pad2_ref):
    f32 = jnp.float32

    # ---- conv1 (5x5, pad 2, Cin=1) as banded matmuls, split by output-w parity ----
    # acc[pw][h, w'*16 + co] = conv1_preact[co, h, 2*w' + pw]   (h in [0,28), w' in [0,14))
    def conv1_acc(pw):
        acc = jnp.dot(x_ref[0:28, :], w1b_ref[pw, 0, :, :],
                      preferred_element_type=f32)
        for kh in range(1, 5):
            acc = acc + jnp.dot(x_ref[kh:kh + 28, :], w1b_ref[pw, kh, :, :],
                                preferred_element_type=f32)
        return acc                                                        # (28, 224)

    z1 = jnp.maximum(conv1_acc(0), conv1_acc(1)) + b1_ref[...]            # w-pool + bias
    z1 = jnp.maximum(z1, 0.0)                                             # ReLU
    # h-direction of the 2x2 max-pool via 0/1 row-selection matmuls (even/odd rows)
    p1 = jnp.maximum(jnp.dot(s1_ref[0, :, :], z1, preferred_element_type=f32),
                     jnp.dot(s1_ref[1, :, :], z1, preferred_element_type=f32))  # (14, 224)

    # ---- zero-pad rows for conv2 (w padding is folded into the band weights) ----
    pad2_ref[...] = jnp.zeros_like(pad2_ref)
    pad2_ref[2:16, :] = p1                                                # (18, 224) scratch

    # ---- conv2 (5x5, pad 2, 16->32) as banded matmuls, split by output-w parity ----
    def conv2_acc(pw):
        acc = jnp.dot(pad2_ref[0:14, :], w2b_ref[pw, 0, :, :],
                      preferred_element_type=f32)
        for kh in range(1, 5):
            acc = acc + jnp.dot(pad2_ref[kh:kh + 14, :], w2b_ref[pw, kh, :, :],
                                preferred_element_type=f32)
        return acc                                                        # (14, 224)

    z2 = jnp.maximum(conv2_acc(0), conv2_acc(1)) + b2_ref[...]
    z2 = jnp.maximum(z2, 0.0)
    p2 = jnp.maximum(jnp.dot(s2_ref[0, :, :], z2, preferred_element_type=f32),
                     jnp.dot(s2_ref[1, :, :], z2, preferred_element_type=f32))  # (7, 224)
    # p2[h2, w2*32 + co]  ==  NHWC (7,7,32) pooled output, flattened over (w2, co)

    # ---- Linear 1568 -> 10 (NCHW flatten permutation baked into wout_ref) ----
    out = bout_ref[...]                                                   # (1, 10)
    for h in range(7):
        out = out + jnp.dot(p2[h:h + 1, :], wout_ref[h, :, :],
                            preferred_element_type=f32)
    o_ref[...] = out


# ----------------------------- weight preparation -----------------------------

def prepare_params(params):
    """One-time repack of PyTorch-layout params into kernel-friendly constants."""
    w1 = np.asarray(params["w1"], np.float32)      # (16, 1, 5, 5)  OIHW
    b1 = np.asarray(params["b1"], np.float32)      # (16,)
    w2 = np.asarray(params["w2"], np.float32)      # (32, 16, 5, 5) OIHW
    b2 = np.asarray(params["b2"], np.float32)      # (32,)
    w_out = np.asarray(params["w_out"], np.float32)  # (10, 1568)
    b_out = np.asarray(params["b_out"], np.float32)  # (10,)

    # conv1 band:  out[h, ow*16+co] = sum_j xpad[h+kh, j] * W1b[pw, kh, j, ow*16+co]
    W1b = np.zeros((2, 5, 32, 14 * 16), np.float32)
    for pw in range(2):
        for kh in range(5):
            for ow in range(14):
                for kw in range(5):
                    j = 2 * ow + pw + kw
                    W1b[pw, kh, j, ow * 16:(ow + 1) * 16] = w1[:, 0, kh, kw]
    b1row = np.tile(b1, 14)[None, :]                                  # (1, 224)

    # conv2 band: rows = (w_in in [0,14)) x (ci in [0,16)), cols = (w2 in [0,7)) x (co in [0,32))
    w2_hwio = np.transpose(w2, (2, 3, 1, 0))                          # (kh, kw, ci, co)
    W2b = np.zeros((2, 5, 14 * 16, 7 * 32), np.float32)
    for pw in range(2):
        for kh in range(5):
            for ow in range(7):
                for kw in range(5):
                    wi = 2 * ow + pw + kw - 2                         # w padding folded in here
                    if 0 <= wi < 14:
                        W2b[pw, kh, wi * 16:(wi + 1) * 16,
                            ow * 32:(ow + 1) * 32] = w2_hwio[kh, kw]
    b2row = np.tile(b2, 7)[None, :]                                   # (1, 224)

    # 2x2-pool row-selection matrices (even / odd rows)
    S1 = np.zeros((2, 14, 28), np.float32)
    S2 = np.zeros((2, 7, 14), np.float32)
    for p in range(2):
        for i in range(14):
            S1[p, i, 2 * i + p] = 1.0
        for i in range(7):
            S2[p, i, 2 * i + p] = 1.0

    # Linear weights with PyTorch's NCHW x.view(B,-1) permutation baked in:
    #   Wout3[h2, w2*32+co, n] = w_out[n, co*49 + h2*7 + w2]
    Wout3 = w_out.reshape(10, 32, 7, 7).transpose(2, 3, 1, 0).reshape(7, 7 * 32, 10)
    bout = b_out[None, :]                                             # (1, 10)

    cvt = lambda a: jnp.asarray(a, jnp.float32)
    return dict(W1b=cvt(W1b), b1row=cvt(b1row), S1=cvt(S1),
                W2b=cvt(W2b), b2row=cvt(b2row), S2=cvt(S2),
                Wout3=cvt(Wout3), bout=cvt(bout))


# ----------------------------- forward wrapper -----------------------------

def cnn_forward(prepped, x_nchw):
    B = x_nchw.shape[0]
    x = x_nchw.reshape(B, 28, 28)                        # Cin == 1
    xpad = jnp.pad(x, ((0, 0), (2, 2), (2, 2)))          # (B, 32, 32): conv zero padding

    out = pl.pallas_call(
        _cnn_fused_kernel,
        grid=(B,),
        in_specs=[
            pl.BlockSpec((None, 32, 32), lambda i: (i, 0, 0)),       # padded image
            pl.BlockSpec((2, 5, 32, 224), lambda i: (0, 0, 0, 0)),   # conv1 band weights
            pl.BlockSpec((1, 224), lambda i: (0, 0)),                # conv1 bias row
            pl.BlockSpec((2, 14, 28), lambda i: (0, 0, 0)),          # pool1 row selectors
            pl.BlockSpec((2, 5, 224, 224), lambda i: (0, 0, 0, 0)),  # conv2 band weights
            pl.BlockSpec((1, 224), lambda i: (0, 0)),                # conv2 bias row
            pl.BlockSpec((2, 7, 14), lambda i: (0, 0, 0)),           # pool2 row selectors
            pl.BlockSpec((7, 224, 10), lambda i: (0, 0, 0)),         # linear weights (permuted)
            pl.BlockSpec((1, 10), lambda i: (0, 0)),                 # linear bias
        ],
        out_specs=pl.BlockSpec((None, 1, 10), lambda i: (i, 0, 0)),
        out_shape=jax.ShapeDtypeStruct((B, 1, 10), jnp.float32),
        scratch_shapes=[pltpu.VMEM((18, 224), jnp.float32)],         # h-padded pool1 output
        compiler_params=pltpu.CompilerParams(dimension_semantics=("parallel",)),
    )(xpad, prepped["W1b"], prepped["b1row"], prepped["S1"],
      prepped["W2b"], prepped["b2row"], prepped["S2"],
      prepped["Wout3"], prepped["bout"])
    return out.reshape(B, 10)


# ----------------------------- params / reference -----------------------------

def init_params(key):
    ks = jax.random.split(key, 6)

    def u(k, shape, fan_in):
        bound = 1.0 / jnp.sqrt(jnp.float32(fan_in))
        return jax.random.uniform(k, shape, jnp.float32, -bound, bound)

    return {
        "w1": u(ks[0], (16, 1, 5, 5), 1 * 5 * 5),
        "b1": u(ks[1], (16,), 1 * 5 * 5),
        "w2": u(ks[2], (32, 16, 5, 5), 16 * 5 * 5),
        "b2": u(ks[3], (32,), 16 * 5 * 5),
        "w_out": u(ks[4], (10, 32 * 7 * 7), 32 * 7 * 7),
        "b_out": u(ks[5], (10,), 32 * 7 * 7),
    }


def reference_forward(params, x_nchw):
    def conv(x, w, b):
        y = jax.lax.conv_general_dilated(
            x, w, window_strides=(1, 1), padding=((2, 2), (2, 2)),
            dimension_numbers=("NCHW", "OIHW", "NCHW"))
        return jax.nn.relu(y + b.reshape(1, -1, 1, 1))

    def pool(x):
        return jax.lax.reduce_window(x, -jnp.inf, jax.lax.max,
                                     (1, 1, 2, 2), (1, 1, 2, 2), "VALID")

    x = pool(conv(x_nchw, params["w1"], params["b1"]))
    x = pool(conv(x, params["w2"], params["b2"]))
    x = x.reshape(x.shape[0], -1)
    return x @ params["w_out"].T + params["b_out"]


if __name__ == "__main__":
    key = jax.random.PRNGKey(0)
    pkey, xkey = jax.random.split(key)
    params = init_params(pkey)
    prepped = prepare_params(params)

    # MNIST-shaped input (the 32*7*7 Linear in the module pins spatial size to 28x28)
    x = jax.random.normal(xkey, (2, 1, 28, 28), jnp.float32)

    fwd = jax.jit(cnn_forward)
    out = jax.block_until_ready(fwd(prepped, x))
    ref = jax.block_until_ready(reference_forward(params, x))

    assert out.shape == (2, 10), out.shape
    max_err = float(jnp.max(jnp.abs(out - ref)))
    assert jnp.allclose(out, ref, atol=2e-3, rtol=2e-3), max_err

    print("KERNEL_OK")
</pallas_src>

<mosaic_0001>
module attributes {stable_mosaic.version = 11 : i64} {
  func.func @_cnn_fused_kernel(%arg0: i32, %arg1: memref<1x32x32xf32, #tpu.memory_space<vmem>>, %arg2: memref<2x5x32x224xf32, #tpu.memory_space<vmem>>, %arg3: memref<1x224xf32, #tpu.memory_space<vmem>>, %arg4: memref<2x14x28xf32, #tpu.memory_space<vmem>>, %arg5: memref<2x5x224x224xf32, #tpu.memory_space<vmem>>, %arg6: memref<1x224xf32, #tpu.memory_space<vmem>>, %arg7: memref<2x7x14xf32, #tpu.memory_space<vmem>>, %arg8: memref<7x224x10xf32, #tpu.memory_space<vmem>>, %arg9: memref<1x10xf32, #tpu.memory_space<vmem>>, %arg10: memref<1x1x10xf32, #tpu.memory_space<vmem>>, %arg11: memref<18x224xf32, #tpu.memory_space<vmem>>) attributes {dimension_semantics = [#tpu.dimension_semantics<parallel>], iteration_bounds = array<i64: 2>, scalar_prefetch = 0 : i64, scratch_operands = 1 : i64, tpu.core_type = #tpu.core_type<tc>, window_params = [{transform_indices = @transform_0, window_bounds = array<i64: 1, 32, 32>}, {pipeline_mode = #tpu.pipeline_mode<synchronous>, transform_indices = @transform_1, window_bounds = array<i64: 2, 5, 32, 224>}, {pipeline_mode = #tpu.pipeline_mode<synchronous>, transform_indices = @transform_2, window_bounds = array<i64: 1, 224>}, {pipeline_mode = #tpu.pipeline_mode<synchronous>, transform_indices = @transform_3, window_bounds = array<i64: 2, 14, 28>}, {pipeline_mode = #tpu.pipeline_mode<synchronous>, transform_indices = @transform_4, window_bounds = array<i64: 2, 5, 224, 224>}, {pipeline_mode = #tpu.pipeline_mode<synchronous>, transform_indices = @transform_5, window_bounds = array<i64: 1, 224>}, {pipeline_mode = #tpu.pipeline_mode<synchronous>, transform_indices = @transform_6, window_bounds = array<i64: 2, 7, 14>}, {pipeline_mode = #tpu.pipeline_mode<synchronous>, transform_indices = @transform_7, window_bounds = array<i64: 7, 224, 10>}, {pipeline_mode = #tpu.pipeline_mode<synchronous>, transform_indices = @transform_8, window_bounds = array<i64: 1, 10>}, {transform_indices = @transform_9, window_bounds = array<i64: 1, 1, 10>}]} {
    %c0 = arith.constant 0 : index
    %c0_0 = arith.constant 0 : index
    %c0_1 = arith.constant 0 : index
    %0 = vector.load %arg1[%c0, %c0_0, %c0_1] : memref<1x32x32xf32, #tpu.memory_space<vmem>>, vector<1x28x32xf32>
    %1 = vector.shape_cast %0 : vector<1x28x32xf32> to vector<28x32xf32>
    %c0_2 = arith.constant 0 : index
    %c0_3 = arith.constant 0 : index
    %c0_4 = arith.constant 0 : index
    %c0_5 = arith.constant 0 : index
    %2 = vector.load %arg2[%c0_2, %c0_3, %c0_4, %c0_5] : memref<2x5x32x224xf32, #tpu.memory_space<vmem>>, vector<1x1x32x224xf32>
    %3 = vector.shape_cast %2 : vector<1x1x32x224xf32> to vector<32x224xf32>
    %cst = arith.constant dense<0.000000e+00> : vector<28x224xf32>
    %4 = tpu.matmul %1, %3, %cst {dimension_numbers = #tpu.dot_dimension_numbers<[1], [0], [0], [1], [0, 0, 1, 1], [], []>} : vector<28x32xf32>, vector<32x224xf32>, vector<28x224xf32> -> vector<28x224xf32>
    %c0_6 = arith.constant 0 : index
    %c1 = arith.constant 1 : index
    %c0_7 = arith.constant 0 : index
    %5 = vector.load %arg1[%c0_6, %c1, %c0_7] : memref<1x32x32xf32, #tpu.memory_space<vmem>>, vector<1x28x32xf32>
    %6 = vector.shape_cast %5 : vector<1x28x32xf32> to vector<28x32xf32>
    %c0_8 = arith.constant 0 : index
    %c1_9 = arith.constant 1 : index
    %c0_10 = arith.constant 0 : index
    %c0_11 = arith.constant 0 : index
    %7 = vector.load %arg2[%c0_8, %c1_9, %c0_10, %c0_11] : memref<2x5x32x224xf32, #tpu.memory_space<vmem>>, vector<1x1x32x224xf32>
    %8 = vector.shape_cast %7 : vector<1x1x32x224xf32> to vector<32x224xf32>
    %cst_12 = arith.constant dense<0.000000e+00> : vector<28x224xf32>
    %9 = tpu.matmul %6, %8, %cst_12 {dimension_numbers = #tpu.dot_dimension_numbers<[1], [0], [0], [1], [0, 0, 1, 1], [], []>} : vector<28x32xf32>, vector<32x224xf32>, vector<28x224xf32> -> vector<28x224xf32>
    %10 = arith.addf %4, %9 : vector<28x224xf32>
    %c0_13 = arith.constant 0 : index
    %c2 = arith.constant 2 : index
    %c0_14 = arith.constant 0 : index
    %11 = vector.load %arg1[%c0_13, %c2, %c0_14] : memref<1x32x32xf32, #tpu.memory_space<vmem>>, vector<1x28x32xf32>
    %12 = vector.shape_cast %11 : vector<1x28x32xf32> to vector<28x32xf32>
    %c0_15 = arith.constant 0 : index
    %c2_16 = arith.constant 2 : index
    %c0_17 = arith.constant 0 : index
    %c0_18 = arith.constant 0 : index
    %13 = vector.load %arg2[%c0_15, %c2_16, %c0_17, %c0_18] : memref<2x5x32x224xf32, #tpu.memory_space<vmem>>, vector<1x1x32x224xf32>
    %14 = vector.shape_cast %13 : vector<1x1x32x224xf32> to vector<32x224xf32>
    %cst_19 = arith.constant dense<0.000000e+00> : vector<28x224xf32>
    %15 = tpu.matmul %12, %14, %cst_19 {dimension_numbers = #tpu.dot_dimension_numbers<[1], [0], [0], [1], [0, 0, 1, 1], [], []>} : vector<28x32xf32>, vector<32x224xf32>, vector<28x224xf32> -> vector<28x224xf32>
    %16 = arith.addf %10, %15 : vector<28x224xf32>
    %c0_20 = arith.constant 0 : index
    %c3 = arith.constant 3 : index
    %c0_21 = arith.constant 0 : index
    %17 = vector.load %arg1[%c0_20, %c3, %c0_21] : memref<1x32x32xf32, #tpu.memory_space<vmem>>, vector<1x28x32xf32>
    %18 = vector.shape_cast %17 : vector<1x28x32xf32> to vector<28x32xf32>
    %c0_22 = arith.constant 0 : index
    %c3_23 = arith.constant 3 : index
    %c0_24 = arith.constant 0 : index
    %c0_25 = arith.constant 0 : index
    %19 = vector.load %arg2[%c0_22, %c3_23, %c0_24, %c0_25] : memref<2x5x32x224xf32, #tpu.memory_space<vmem>>, vector<1x1x32x224xf32>
    %20 = vector.shape_cast %19 : vector<1x1x32x224xf32> to vector<32x224xf32>
    %cst_26 = arith.constant dense<0.000000e+00> : vector<28x224xf32>
    %21 = tpu.matmul %18, %20, %cst_26 {dimension_numbers = #tpu.dot_dimension_numbers<[1], [0], [0], [1], [0, 0, 1, 1], [], []>} : vector<28x32xf32>, vector<32x224xf32>, vector<28x224xf32> -> vector<28x224xf32>
    %22 = arith.addf %16, %21 : vector<28x224xf32>
    %c0_27 = arith.constant 0 : index
    %c4 = arith.constant 4 : index
    %c0_28 = arith.constant 0 : index
    %23 = vector.load %arg1[%c0_27, %c4, %c0_28] : memref<1x32x32xf32, #tpu.memory_space<vmem>>, vector<1x28x32xf32>
    %24 = vector.shape_cast %23 : vector<1x28x32xf32> to vector<28x32xf32>
    %c0_29 = arith.constant 0 : index
    %c4_30 = arith.constant 4 : index
    %c0_31 = arith.constant 0 : index
    %c0_32 = arith.constant 0 : index
    %25 = vector.load %arg2[%c0_29, %c4_30, %c0_31, %c0_32] : memref<2x5x32x224xf32, #tpu.memory_space<vmem>>, vector<1x1x32x224xf32>
    %26 = vector.shape_cast %25 : vector<1x1x32x224xf32> to vector<32x224xf32>
    %cst_33 = arith.constant dense<0.000000e+00> : vector<28x224xf32>
    %27 = tpu.matmul %24, %26, %cst_33 {dimension_numbers = #tpu.dot_dimension_numbers<[1], [0], [0], [1], [0, 0, 1, 1], [], []>} : vector<28x32xf32>, vector<32x224xf32>, vector<28x224xf32> -> vector<28x224xf32>
    %28 = arith.addf %22, %27 : vector<28x224xf32>
    %c0_34 = arith.constant 0 : index
    %c0_35 = arith.constant 0 : index
    %c0_36 = arith.constant 0 : index
    %29 = vector.load %arg1[%c0_34, %c0_35, %c0_36] : memref<1x32x32xf32, #tpu.memory_space<vmem>>, vector<1x28x32xf32>
    %30 = vector.shape_cast %29 : vector<1x28x32xf32> to vector<28x32xf32>
    %c1_37 = arith.constant 1 : index
    %c0_38 = arith.constant 0 : index
    %c0_39 = arith.constant 0 : index
    %c0_40 = arith.constant 0 : index
    %31 = vector.load %arg2[%c1_37, %c0_38, %c0_39, %c0_40] : memref<2x5x32x224xf32, #tpu.memory_space<vmem>>, vector<1x1x32x224xf32>
    %32 = vector.shape_cast %31 : vector<1x1x32x224xf32> to vector<32x224xf32>
    %cst_41 = arith.constant dense<0.000000e+00> : vector<28x224xf32>
    %33 = tpu.matmul %30, %32, %cst_41 {dimension_numbers = #tpu.dot_dimension_numbers<[1], [0], [0], [1], [0, 0, 1, 1], [], []>} : vector<28x32xf32>, vector<32x224xf32>, vector<28x224xf32> -> vector<28x224xf32>
    %c0_42 = arith.constant 0 : index
    %c1_43 = arith.constant 1 : index
    %c0_44 = arith.constant 0 : index
    %34 = vector.load %arg1[%c0_42, %c1_43, %c0_44] : memref<1x32x32xf32, #tpu.memory_space<vmem>>, vector<1x28x32xf32>
    %35 = vector.shape_cast %34 : vector<1x28x32xf32> to vector<28x32xf32>
    %c1_45 = arith.constant 1 : index
    %c1_46 = arith.constant 1 : index
    %c0_47 = arith.constant 0 : index
    %c0_48 = arith.constant 0 : index
    %36 = vector.load %arg2[%c1_45, %c1_46, %c0_47, %c0_48] : memref<2x5x32x224xf32, #tpu.memory_space<vmem>>, vector<1x1x32x224xf32>
    %37 = vector.shape_cast %36 : vector<1x1x32x224xf32> to vector<32x224xf32>
    %cst_49 = arith.constant dense<0.000000e+00> : vector<28x224xf32>
    %38 = tpu.matmul %35, %37, %cst_49 {dimension_numbers = #tpu.dot_dimension_numbers<[1], [0], [0], [1], [0, 0, 1, 1], [], []>} : vector<28x32xf32>, vector<32x224xf32>, vector<28x224xf32> -> vector<28x224xf32>
    %39 = arith.addf %33, %38 : vector<28x224xf32>
    %c0_50 = arith.constant 0 : index
    %c2_51 = arith.constant 2 : index
    %c0_52 = arith.constant 0 : index
    %40 = vector.load %arg1[%c0_50, %c2_51, %c0_52] : memref<1x32x32xf32, #tpu.memory_space<vmem>>, vector<1x28x32xf32>
    %41 = vector.shape_cast %40 : vector<1x28x32xf32> to vector<28x32xf32>
    %c1_53 = arith.constant 1 : index
    %c2_54 = arith.constant 2 : index
    %c0_55 = arith.constant 0 : index
    %c0_56 = arith.constant 0 : index
    %42 = vector.load %arg2[%c1_53, %c2_54, %c0_55, %c0_56] : memref<2x5x32x224xf32, #tpu.memory_space<vmem>>, vector<1x1x32x224xf32>
    %43 = vector.shape_cast %42 : vector<1x1x32x224xf32> to vector<32x224xf32>
    %cst_57 = arith.constant dense<0.000000e+00> : vector<28x224xf32>
    %44 = tpu.matmul %41, %43, %cst_57 {dimension_numbers = #tpu.dot_dimension_numbers<[1], [0], [0], [1], [0, 0, 1, 1], [], []>} : vector<28x32xf32>, vector<32x224xf32>, vector<28x224xf32> -> vector<28x224xf32>
    %45 = arith.addf %39, %44 : vector<28x224xf32>
    %c0_58 = arith.constant 0 : index
    %c3_59 = arith.constant 3 : index
    %c0_60 = arith.constant 0 : index
    %46 = vector.load %arg1[%c0_58, %c3_59, %c0_60] : memref<1x32x32xf32, #tpu.memory_space<vmem>>, vector<1x28x32xf32>
    %47 = vector.shape_cast %46 : vector<1x28x32xf32> to vector<28x32xf32>
    %c1_61 = arith.constant 1 : index
    %c3_62 = arith.constant 3 : index
    %c0_63 = arith.constant 0 : index
    %c0_64 = arith.constant 0 : index
    %48 = vector.load %arg2[%c1_61, %c3_62, %c0_63, %c0_64] : memref<2x5x32x224xf32, #tpu.memory_space<vmem>>, vector<1x1x32x224xf32>
    %49 = vector.shape_cast %48 : vector<1x1x32x224xf32> to vector<32x224xf32>
    %cst_65 = arith.constant dense<0.000000e+00> : vector<28x224xf32>
    %50 = tpu.matmul %47, %49, %cst_65 {dimension_numbers = #tpu.dot_dimension_numbers<[1], [0], [0], [1], [0, 0, 1, 1], [], []>} : vector<28x32xf32>, vector<32x224xf32>, vector<28x224xf32> -> vector<28x224xf32>
    %51 = arith.addf %45, %50 : vector<28x224xf32>
    %c0_66 = arith.constant 0 : index
    %c4_67 = arith.constant 4 : index
    %c0_68 = arith.constant 0 : index
    %52 = vector.load %arg1[%c0_66, %c4_67, %c0_68] : memref<1x32x32xf32, #tpu.memory_space<vmem>>, vector<1x28x32xf32>
    %53 = vector.shape_cast %52 : vector<1x28x32xf32> to vector<28x32xf32>
    %c1_69 = arith.constant 1 : index
    %c4_70 = arith.constant 4 : index
    %c0_71 = arith.constant 0 : index
    %c0_72 = arith.constant 0 : index
    %54 = vector.load %arg2[%c1_69, %c4_70, %c0_71, %c0_72] : memref<2x5x32x224xf32, #tpu.memory_space<vmem>>, vector<1x1x32x224xf32>
    %55 = vector.shape_cast %54 : vector<1x1x32x224xf32> to vector<32x224xf32>
    %cst_73 = arith.constant dense<0.000000e+00> : vector<28x224xf32>
    %56 = tpu.matmul %53, %55, %cst_73 {dimension_numbers = #tpu.dot_dimension_numbers<[1], [0], [0], [1], [0, 0, 1, 1], [], []>} : vector<28x32xf32>, vector<32x224xf32>, vector<28x224xf32> -> vector<28x224xf32>
    %57 = arith.addf %51, %56 : vector<28x224xf32>
    %58 = arith.maximumf %28, %57 : vector<28x224xf32>
    %c0_74 = arith.constant 0 : index
    %c0_75 = arith.constant 0 : index
    %59 = vector.load %arg3[%c0_74, %c0_75] : memref<1x224xf32, #tpu.memory_space<vmem>>, vector<1x224xf32>
    %60 = vector.broadcast %59 : vector<1x224xf32> to vector<28x224xf32>
    %61 = arith.addf %58, %60 : vector<28x224xf32>
    %cst_76 = arith.constant 0.000000e+00 : f32
    %62 = vector.broadcast %cst_76 : f32 to vector<28x224xf32>
    %63 = arith.maximumf %61, %62 : vector<28x224xf32>
    %c0_77 = arith.constant 0 : index
    %c0_78 = arith.constant 0 : index
    %c0_79 = arith.constant 0 : index
    %64 = vector.load %arg4[%c0_77, %c0_78, %c0_79] : memref<2x14x28xf32, #tpu.memory_space<vmem>>, vector<1x14x28xf32>
    %65 = vector.shape_cast %64 : vector<1x14x28xf32> to vector<14x28xf32>
    %cst_80 = arith.constant dense<0.000000e+00> : vector<14x224xf32>
    %66 = tpu.matmul %65, %63, %cst_80 {dimension_numbers = #tpu.dot_dimension_numbers<[1], [0], [0], [1], [0, 0, 1, 1], [], []>} : vector<14x28xf32>, vector<28x224xf32>, vector<14x224xf32> -> vector<14x224xf32>
    %c1_81 = arith.constant 1 : index
    %c0_82 = arith.constant 0 : index
    %c0_83 = arith.constant 0 : index
    %67 = vector.load %arg4[%c1_81, %c0_82, %c0_83] : memref<2x14x28xf32, #tpu.memory_space<vmem>>, vector<1x14x28xf32>
    %68 = vector.shape_cast %67 : vector<1x14x28xf32> to vector<14x28xf32>
    %cst_84 = arith.constant dense<0.000000e+00> : vector<14x224xf32>
    %69 = tpu.matmul %68, %63, %cst_84 {dimension_numbers = #tpu.dot_dimension_numbers<[1], [0], [0], [1], [0, 0, 1, 1], [], []>} : vector<14x28xf32>, vector<28x224xf32>, vector<14x224xf32> -> vector<14x224xf32>
    %70 = arith.maximumf %66, %69 : vector<14x224xf32>
    %cst_85 = arith.constant 0.000000e+00 : f32
    %71 = vector.broadcast %cst_85 : f32 to vector<18x224xf32>
    %c0_86 = arith.constant 0 : index
    %c0_87 = arith.constant 0 : index
    %72 = vector.load %arg11[%c0_86, %c0_87] : memref<18x224xf32, #tpu.memory_space<vmem>>, vector<18x224xf32>
    tpu.vector_store %arg11[%c0_86, %c0_87], %71 {strides = array<i32>} : memref<18x224xf32, #tpu.memory_space<vmem>>, vector<18x224xf32>,
    %c2_88 = arith.constant 2 : index
    %c0_89 = arith.constant 0 : index
    %73 = vector.load %arg11[%c2_88, %c0_89] : memref<18x224xf32, #tpu.memory_space<vmem>>, vector<14x224xf32>
    tpu.vector_store %arg11[%c2_88, %c0_89], %70 {strides = array<i32>} : memref<18x224xf32, #tpu.memory_space<vmem>>, vector<14x224xf32>,
    %c0_90 = arith.constant 0 : index
    %c0_91 = arith.constant 0 : index
    %74 = vector.load %arg11[%c0_90, %c0_91] : memref<18x224xf32, #tpu.memory_space<vmem>>, vector<14x224xf32>
    %c0_92 = arith.constant 0 : index
    %c0_93 = arith.constant 0 : index
    %c0_94 = arith.constant 0 : index
    %c0_95 = arith.constant 0 : index
    %75 = vector.load %arg5[%c0_92, %c0_93, %c0_94, %c0_95] : memref<2x5x224x224xf32, #tpu.memory_space<vmem>>, vector<1x1x224x224xf32>
    %76 = vector.shape_cast %75 : vector<1x1x224x224xf32> to vector<224x224xf32>
    %cst_96 = arith.constant dense<0.000000e+00> : vector<14x224xf32>
    %77 = tpu.matmul %74, %76, %cst_96 {dimension_numbers = #tpu.dot_dimension_numbers<[1], [0], [0], [1], [0, 0, 1, 1], [], []>} : vector<14x224xf32>, vector<224x224xf32>, vector<14x224xf32> -> vector<14x224xf32>
    %c1_97 = arith.constant 1 : index
    %c0_98 = arith.constant 0 : index
    %78 = vector.load %arg11[%c1_97, %c0_98] : memref<18x224xf32, #tpu.memory_space<vmem>>, vector<14x224xf32>
    %c0_99 = arith.constant 0 : index
    %c1_100 = arith.constant 1 : index
    %c0_101 = arith.constant 0 : index
    %c0_102 = arith.constant 0 : index
    %79 = vector.load %arg5[%c0_99, %c1_100, %c0_101, %c0_102] : memref<2x5x224x224xf32, #tpu.memory_space<vmem>>, vector<1x1x224x224xf32>
    %80 = vector.shape_cast %79 : vector<1x1x224x224xf32> to vector<224x224xf32>
    %cst_103 = arith.constant dense<0.000000e+00> : vector<14x224xf32>
    %81 = tpu.matmul %78, %80, %cst_103 {dimension_numbers = #tpu.dot_dimension_numbers<[1], [0], [0], [1], [0, 0, 1, 1], [], []>} : vector<14x224xf32>, vector<224x224xf32>, vector<14x224xf32> -> vector<14x224xf32>
    %82 = arith.addf %77, %81 : vector<14x224xf32>
    %c2_104 = arith.constant 2 : index
    %c0_105 = arith.constant 0 : index
    %83 = vector.load %arg11[%c2_104, %c0_105] : memref<18x224xf32, #tpu.memory_space<vmem>>, vector<14x224xf32>
    %c0_106 = arith.constant 0 : index
    %c2_107 = arith.constant 2 : index
    %c0_108 = arith.constant 0 : index
    %c0_109 = arith.constant 0 : index
    %84 = vector.load %arg5[%c0_106, %c2_107, %c0_108, %c0_109] : memref<2x5x224x224xf32, #tpu.memory_space<vmem>>, vector<1x1x224x224xf32>
    %85 = vector.shape_cast %84 : vector<1x1x224x224xf32> to vector<224x224xf32>
    %cst_110 = arith.constant dense<0.000000e+00> : vector<14x224xf32>
    %86 = tpu.matmul %83, %85, %cst_110 {dimension_numbers = #tpu.dot_dimension_numbers<[1], [0], [0], [1], [0, 0, 1, 1], [], []>} : vector<14x224xf32>, vector<224x224xf32>, vector<14x224xf32> -> vector<14x224xf32>
    %87 = arith.addf %82, %86 : vector<14x224xf32>
    %c3_111 = arith.constant 3 : index
    %c0_112 = arith.constant 0 : index
    %88 = vector.load %arg11[%c3_111, %c0_112] : memref<18x224xf32, #tpu.memory_space<vmem>>, vector<14x224xf32>
    %c0_113 = arith.constant 0 : index
    %c3_114 = arith.constant 3 : index
    %c0_115 = arith.constant 0 : index
    %c0_116 = arith.constant 0 : index
    %89 = vector.load %arg5[%c0_113, %c3_114, %c0_115, %c0_116] : memref<2x5x224x224xf32, #tpu.memory_space<vmem>>, vector<1x1x224x224xf32>
    %90 = vector.shape_cast %89 : vector<1x1x224x224xf32> to vector<224x224xf32>
    %cst_117 = arith.constant dense<0.000000e+00> : vector<14x224xf32>
    %91 = tpu.matmul %88, %90, %cst_117 {dimension_numbers = #tpu.dot_dimension_numbers<[1], [0], [0], [1], [0, 0, 1, 1], [], []>} : vector<14x224xf32>, vector<224x224xf32>, vector<14x224xf32> -> vector<14x224xf32>
    %92 = arith.addf %87, %91 : vector<14x224xf32>
    %c4_118 = arith.constant 4 : index
    %c0_119 = arith.constant 0 : index
    %93 = vector.load %arg11[%c4_118, %c0_119] : memref<18x224xf32, #tpu.memory_space<vmem>>, vector<14x224xf32>
    %c0_120 = arith.constant 0 : index
    %c4_121 = arith.constant 4 : index
    %c0_122 = arith.constant 0 : index
    %c0_123 = arith.constant 0 : index
    %94 = vector.load %arg5[%c0_120, %c4_121, %c0_122, %c0_123] : memref<2x5x224x224xf32, #tpu.memory_space<vmem>>, vector<1x1x224x224xf32>
    %95 = vector.shape_cast %94 : vector<1x1x224x224xf32> to vector<224x224xf32>
    %cst_124 = arith.constant dense<0.000000e+00> : vector<14x224xf32>
    %96 = tpu.matmul %93, %95, %cst_124 {dimension_numbers = #tpu.dot_dimension_numbers<[1], [0], [0], [1], [0, 0, 1, 1], [], []>} : vector<14x224xf32>, vector<224x224xf32>, vector<14x224xf32> -> vector<14x224xf32>
    %97 = arith.addf %92, %96 : vector<14x224xf32>
    %c0_125 = arith.constant 0 : index
    %c0_126 = arith.constant 0 : index
    %98 = vector.load %arg11[%c0_125, %c0_126] : memref<18x224xf32, #tpu.memory_space<vmem>>, vector<14x224xf32>
    %c1_127 = arith.constant 1 : index
    %c0_128 = arith.constant 0 : index
    %c0_129 = arith.constant 0 : index
    %c0_130 = arith.constant 0 : index
    %99 = vector.load %arg5[%c1_127, %c0_128, %c0_129, %c0_130] : memref<2x5x224x224xf32, #tpu.memory_space<vmem>>, vector<1x1x224x224xf32>
    %100 = vector.shape_cast %99 : vector<1x1x224x224xf32> to vector<224x224xf32>
    %cst_131 = arith.constant dense<0.000000e+00> : vector<14x224xf32>
    %101 = tpu.matmul %98, %100, %cst_131 {dimension_numbers = #tpu.dot_dimension_numbers<[1], [0], [0], [1], [0, 0, 1, 1], [], []>} : vector<14x224xf32>, vector<224x224xf32>, vector<14x224xf32> -> vector<14x224xf32>
    %c1_132 = arith.constant 1 : index
    %c0_133 = arith.constant 0 : index
    %102 = vector.load %arg11[%c1_132, %c0_133] : memref<18x224xf32, #tpu.memory_space<vmem>>, vector<14x224xf32>
    %c1_134 = arith.constant 1 : index
    %c1_135 = arith.constant 1 : index
    %c0_136 = arith.constant 0 : index
    %c0_137 = arith.constant 0 : index
    %103 = vector.load %arg5[%c1_134, %c1_135, %c0_136, %c0_137] : memref<2x5x224x224xf32, #tpu.memory_space<vmem>>, vector<1x1x224x224xf32>
    %104 = vector.shape_cast %103 : vector<1x1x224x224xf32> to vector<224x224xf32>
    %cst_138 = arith.constant dense<0.000000e+00> : vector<14x224xf32>
    %105 = tpu.matmul %102, %104, %cst_138 {dimension_numbers = #tpu.dot_dimension_numbers<[1], [0], [0], [1], [0, 0, 1, 1], [], []>} : vector<14x224xf32>, vector<224x224xf32>, vector<14x224xf32> -> vector<14x224xf32>
    %106 = arith.addf %101, %105 : vector<14x224xf32>
    %c2_139 = arith.constant 2 : index
    %c0_140 = arith.constant 0 : index
    %107 = vector.load %arg11[%c2_139, %c0_140] : memref<18x224xf32, #tpu.memory_space<vmem>>, vector<14x224xf32>
    %c1_141 = arith.constant 1 : index
    %c2_142 = arith.constant 2 : index
    %c0_143 = arith.constant 0 : index
    %c0_144 = arith.constant 0 : index
    %108 = vector.load %arg5[%c1_141, %c2_142, %c0_143, %c0_144] : memref<2x5x224x224xf32, #tpu.memory_space<vmem>>, vector<1x1x224x224xf32>
    %109 = vector.shape_cast %108 : vector<1x1x224x224xf32> to vector<224x224xf32>
    %cst_145 = arith.constant dense<0.000000e+00> : vector<14x224xf32>
    %110 = tpu.matmul %107, %109, %cst_145 {dimension_numbers = #tpu.dot_dimension_numbers<[1], [0], [0], [1], [0, 0, 1, 1], [], []>} : vector<14x224xf32>, vector<224x224xf32>, vector<14x224xf32> -> vector<14x224xf32>
    %111 = arith.addf %106, %110 : vector<14x224xf32>
    %c3_146 = arith.constant 3 : index
    %c0_147 = arith.constant 0 : index
    %112 = vector.load %arg11[%c3_146, %c0_147] : memref<18x224xf32, #tpu.memory_space<vmem>>, vector<14x224xf32>
    %c1_148 = arith.constant 1 : index
    %c3_149 = arith.constant 3 : index
    %c0_150 = arith.constant 0 : index
    %c0_151 = arith.constant 0 : index
    %113 = vector.load %arg5[%c1_148, %c3_149, %c0_150, %c0_151] : memref<2x5x224x224xf32, #tpu.memory_space<vmem>>, vector<1x1x224x224xf32>
    %114 = vector.shape_cast %113 : vector<1x1x224x224xf32> to vector<224x224xf32>
    %cst_152 = arith.constant dense<0.000000e+00> : vector<14x224xf32>
    %115 = tpu.matmul %112, %114, %cst_152 {dimension_numbers = #tpu.dot_dimension_numbers<[1], [0], [0], [1], [0, 0, 1, 1], [], []>} : vector<14x224xf32>, vector<224x224xf32>, vector<14x224xf32> -> vector<14x224xf32>
    %116 = arith.addf %111, %115 : vector<14x224xf32>
    %c4_153 = arith.constant 4 : index
    %c0_154 = arith.constant 0 : index
    %117 = vector.load %arg11[%c4_153, %c0_154] : memref<18x224xf32, #tpu.memory_space<vmem>>, vector<14x224xf32>
    %c1_155 = arith.constant 1 : index
    %c4_156 = arith.constant 4 : index
    %c0_157 = arith.constant 0 : index
    %c0_158 = arith.constant 0 : index
    %118 = vector.load %arg5[%c1_155, %c4_156, %c0_157, %c0_158] : memref<2x5x224x224xf32, #tpu.memory_space<vmem>>, vector<1x1x224x224xf32>
    %119 = vector.shape_cast %118 : vector<1x1x224x224xf32> to vector<224x224xf32>
    %cst_159 = arith.constant dense<0.000000e+00> : vector<14x224xf32>
    %120 = tpu.matmul %117, %119, %cst_159 {dimension_numbers = #tpu.dot_dimension_numbers<[1], [0], [0], [1], [0, 0, 1, 1], [], []>} : vector<14x224xf32>, vector<224x224xf32>, vector<14x224xf32> -> vector<14x224xf32>
    %121 = arith.addf %116, %120 : vector<14x224xf32>
    %122 = arith.maximumf %97, %121 : vector<14x224xf32>
    %c0_160 = arith.constant 0 : index
    %c0_161 = arith.constant 0 : index
    %123 = vector.load %arg6[%c0_160, %c0_161] : memref<1x224xf32, #tpu.memory_space<vmem>>, vector<1x224xf32>
    %124 = vector.broadcast %123 : vector<1x224xf32> to vector<14x224xf32>
    %125 = arith.addf %122, %124 : vector<14x224xf32>
    %cst_162 = arith.constant 0.000000e+00 : f32
    %126 = vector.broadcast %cst_162 : f32 to vector<14x224xf32>
    %127 = arith.maximumf %125, %126 : vector<14x224xf32>
    %c0_163 = arith.constant 0 : index
    %c0_164 = arith.constant 0 : index
    %c0_165 = arith.constant 0 : index
    %128 = vector.load %arg7[%c0_163, %c0_164, %c0_165] : memref<2x7x14xf32, #tpu.memory_space<vmem>>, vector<1x7x14xf32>
    %129 = vector.shape_cast %128 : vector<1x7x14xf32> to vector<7x14xf32>
    %cst_166 = arith.constant dense<0.000000e+00> : vector<7x224xf32>
    %130 = tpu.matmul %129, %127, %cst_166 {dimension_numbers = #tpu.dot_dimension_numbers<[1], [0], [0], [1], [0, 0, 1, 1], [], []>} : vector<7x14xf32>, vector<14x224xf32>, vector<7x224xf32> -> vector<7x224xf32>
    %c1_167 = arith.constant 1 : index
    %c0_168 = arith.constant 0 : index
    %c0_169 = arith.constant 0 : index
    %131 = vector.load %arg7[%c1_167, %c0_168, %c0_169] : memref<2x7x14xf32, #tpu.memory_space<vmem>>, vector<1x7x14xf32>
    %132 = vector.shape_cast %131 : vector<1x7x14xf32> to vector<7x14xf32>
    %cst_170 = arith.constant dense<0.000000e+00> : vector<7x224xf32>
    %133 = tpu.matmul %132, %127, %cst_170 {dimension_numbers = #tpu.dot_dimension_numbers<[1], [0], [0], [1], [0, 0, 1, 1], [], []>} : vector<7x14xf32>, vector<14x224xf32>, vector<7x224xf32> -> vector<7x224xf32>
    %134 = arith.maximumf %130, %133 : vector<7x224xf32>
    %c0_171 = arith.constant 0 : index
    %c0_172 = arith.constant 0 : index
    %135 = vector.load %arg9[%c0_171, %c0_172] : memref<1x10xf32, #tpu.memory_space<vmem>>, vector<1x10xf32>
    %136 = vector.extract_strided_slice %134 {offsets = [0, 0], sizes = [1, 224], strides = [1, 1]} : vector<7x224xf32> to vector<1x224xf32>
    %c0_173 = arith.constant 0 : index
    %c0_174 = arith.constant 0 : index
    %c0_175 = arith.constant 0 : index
    %137 = vector.load %arg8[%c0_173, %c0_174, %c0_175] : memref<7x224x10xf32, #tpu.memory_space<vmem>>, vector<1x224x10xf32>
    %138 = vector.shape_cast %137 : vector<1x224x10xf32> to vector<224x10xf32>
    %cst_176 = arith.constant dense<0.000000e+00> : vector<1x10xf32>
    %139 = tpu.matmul %136, %138, %cst_176 {dimension_numbers = #tpu.dot_dimension_numbers<[1], [0], [0], [1], [0, 0, 1, 1], [], []>} : vector<1x224xf32>, vector<224x10xf32>, vector<1x10xf32> -> vector<1x10xf32>
    %140 = arith.addf %135, %139 : vector<1x10xf32>
    %141 = vector.extract_strided_slice %134 {offsets = [1, 0], sizes = [1, 224], strides = [1, 1]} : vector<7x224xf32> to vector<1x224xf32>
    %c1_177 = arith.constant 1 : index
    %c0_178 = arith.constant 0 : index
    %c0_179 = arith.constant 0 : index
    %142 = vector.load %arg8[%c1_177, %c0_178, %c0_179] : memref<7x224x10xf32, #tpu.memory_space<vmem>>, vector<1x224x10xf32>
    %143 = vector.shape_cast %142 : vector<1x224x10xf32> to vector<224x10xf32>
    %cst_180 = arith.constant dense<0.000000e+00> : vector<1x10xf32>
    %144 = tpu.matmul %141, %143, %cst_180 {dimension_numbers = #tpu.dot_dimension_numbers<[1], [0], [0], [1], [0, 0, 1, 1], [], []>} : vector<1x224xf32>, vector<224x10xf32>, vector<1x10xf32> -> vector<1x10xf32>
    %145 = arith.addf %140, %144 : vector<1x10xf32>
    %146 = vector.extract_strided_slice %134 {offsets = [2, 0], sizes = [1, 224], strides = [1, 1]} : vector<7x224xf32> to vector<1x224xf32>
    %c2_181 = arith.constant 2 : index
    %c0_182 = arith.constant 0 : index
    %c0_183 = arith.constant 0 : index
    %147 = vector.load %arg8[%c2_181, %c0_182, %c0_183] : memref<7x224x10xf32, #tpu.memory_space<vmem>>, vector<1x224x10xf32>
    %148 = vector.shape_cast %147 : vector<1x224x10xf32> to vector<224x10xf32>
    %cst_184 = arith.constant dense<0.000000e+00> : vector<1x10xf32>
    %149 = tpu.matmul %146, %148, %cst_184 {dimension_numbers = #tpu.dot_dimension_numbers<[1], [0], [0], [1], [0, 0, 1, 1], [], []>} : vector<1x224xf32>, vector<224x10xf32>, vector<1x10xf32> -> vector<1x10xf32>
    %150 = arith.addf %145, %149 : vector<1x10xf32>
    %151 = vector.extract_strided_slice %134 {offsets = [3, 0], sizes = [1, 224], strides = [1, 1]} : vector<7x224xf32> to vector<1x224xf32>
    %c3_185 = arith.constant 3 : index
    %c0_186 = arith.constant 0 : index
    %c0_187 = arith.constant 0 : index
    %152 = vector.load %arg8[%c3_185, %c0_186, %c0_187] : memref<7x224x10xf32, #tpu.memory_space<vmem>>, vector<1x224x10xf32>
    %153 = vector.shape_cast %152 : vector<1x224x10xf32> to vector<224x10xf32>
    %cst_188 = arith.constant dense<0.000000e+00> : vector<1x10xf32>
    %154 = tpu.matmul %151, %153, %cst_188 {dimension_numbers = #tpu.dot_dimension_numbers<[1], [0], [0], [1], [0, 0, 1, 1], [], []>} : vector<1x224xf32>, vector<224x10xf32>, vector<1x10xf32> -> vector<1x10xf32>
    %155 = arith.addf %150, %154 : vector<1x10xf32>
    %156 = vector.extract_strided_slice %134 {offsets = [4, 0], sizes = [1, 224], strides = [1, 1]} : vector<7x224xf32> to vector<1x224xf32>
    %c4_189 = arith.constant 4 : index
    %c0_190 = arith.constant 0 : index
    %c0_191 = arith.constant 0 : index
    %157 = vector.load %arg8[%c4_189, %c0_190, %c0_191] : memref<7x224x10xf32, #tpu.memory_space<vmem>>, vector<1x224x10xf32>
    %158 = vector.shape_cast %157 : vector<1x224x10xf32> to vector<224x10xf32>
    %cst_192 = arith.constant dense<0.000000e+00> : vector<1x10xf32>
    %159 = tpu.matmul %156, %158, %cst_192 {dimension_numbers = #tpu.dot_dimension_numbers<[1], [0], [0], [1], [0, 0, 1, 1], [], []>} : vector<1x224xf32>, vector<224x10xf32>, vector<1x10xf32> -> vector<1x10xf32>
    %160 = arith.addf %155, %159 : vector<1x10xf32>
    %161 = vector.extract_strided_slice %134 {offsets = [5, 0], sizes = [1, 224], strides = [1, 1]} : vector<7x224xf32> to vector<1x224xf32>
    %c5 = arith.constant 5 : index
    %c0_193 = arith.constant 0 : index
    %c0_194 = arith.constant 0 : index
    %162 = vector.load %arg8[%c5, %c0_193, %c0_194] : memref<7x224x10xf32, #tpu.memory_space<vmem>>, vector<1x224x10xf32>
    %163 = vector.shape_cast %162 : vector<1x224x10xf32> to vector<224x10xf32>
    %cst_195 = arith.constant dense<0.000000e+00> : vector<1x10xf32>
    %164 = tpu.matmul %161, %163, %cst_195 {dimension_numbers = #tpu.dot_dimension_numbers<[1], [0], [0], [1], [0, 0, 1, 1], [], []>} : vector<1x224xf32>, vector<224x10xf32>, vector<1x10xf32> -> vector<1x10xf32>
    %165 = arith.addf %160, %164 : vector<1x10xf32>
    %166 = vector.extract_strided_slice %134 {offsets = [6, 0], sizes = [1, 224], strides = [1, 1]} : vector<7x224xf32> to vector<1x224xf32>
    %c6 = arith.constant 6 : index
    %c0_196 = arith.constant 0 : index
    %c0_197 = arith.constant 0 : index
    %167 = vector.load %arg8[%c6, %c0_196, %c0_197] : memref<7x224x10xf32, #tpu.memory_space<vmem>>, vector<1x224x10xf32>
    %168 = vector.shape_cast %167 : vector<1x224x10xf32> to vector<224x10xf32>
    %cst_198 = arith.constant dense<0.000000e+00> : vector<1x10xf32>
    %169 = tpu.matmul %166, %168, %cst_198 {dimension_numbers = #tpu.dot_dimension_numbers<[1], [0], [0], [1], [0, 0, 1, 1], [], []>} : vector<1x224xf32>, vector<224x10xf32>, vector<1x10xf32> -> vector<1x10xf32>
    %170 = arith.addf %165, %169 : vector<1x10xf32>
    %c0_199 = arith.constant 0 : index
    %c0_200 = arith.constant 0 : index
    %c0_201 = arith.constant 0 : index
    %171 = vector.load %arg10[%c0_199, %c0_200, %c0_201] : memref<1x1x10xf32, #tpu.memory_space<vmem>>, vector<1x1x10xf32>
    %172 = vector.shape_cast %171 : vector<1x1x10xf32> to vector<1x10xf32>
    %173 = vector.shape_cast %170 : vector<1x10xf32> to vector<1x1x10xf32>
    tpu.vector_store %arg10[%c0_199, %c0_200, %c0_201], %173 {strides = array<i32>} : memref<1x1x10xf32, #tpu.memory_space<vmem>>, vector<1x1x10xf32>,
    return
  }
  func.func @transform_0(%arg0: i32) -> (i32, i32, i32) {
    %c0_i32 = arith.constant 0 : i32
    %c0_i32_0 = arith.constant 0 : i32
    %c0_i32_1 = arith.constant 0 : i32
    return %arg0, %c0_i32, %c0_i32_0 : i32, i32, i32
  }
  func.func @transform_1(%arg0: i32) -> (i32, i32, i32, i32) {
    %c0_i32 = arith.constant 0 : i32
    %c0_i32_0 = arith.constant 0 : i32
    %c0_i32_1 = arith.constant 0 : i32
    %c0_i32_2 = arith.constant 0 : i32
    %c0_i32_3 = arith.constant 0 : i32
    return %c0_i32, %c0_i32_0, %c0_i32_1, %c0_i32_2 : i32, i32, i32, i32
  }
  func.func @transform_2(%arg0: i32) -> (i32, i32) {
    %c0_i32 = arith.constant 0 : i32
    %c0_i32_0 = arith.constant 0 : i32
    %c0_i32_1 = arith.constant 0 : i32
    return %c0_i32, %c0_i32_0 : i32, i32
  }
  func.func @transform_3(%arg0: i32) -> (i32, i32, i32) {
    %c0_i32 = arith.constant 0 : i32
    %c0_i32_0 = arith.constant 0 : i32
    %c0_i32_1 = arith.constant 0 : i32
    %c0_i32_2 = arith.constant 0 : i32
    return %c0_i32, %c0_i32_0, %c0_i32_1 : i32, i32, i32
  }
  func.func @transform_4(%arg0: i32) -> (i32, i32, i32, i32) {
    %c0_i32 = arith.constant 0 : i32
    %c0_i32_0 = arith.constant 0 : i32
    %c0_i32_1 = arith.constant 0 : i32
    %c0_i32_2 = arith.constant 0 : i32
    %c0_i32_3 = arith.constant 0 : i32
    return %c0_i32, %c0_i32_0, %c0_i32_1, %c0_i32_2 : i32, i32, i32, i32
  }
  func.func @transform_5(%arg0: i32) -> (i32, i32) {
    %c0_i32 = arith.constant 0 : i32
    %c0_i32_0 = arith.constant 0 : i32
    %c0_i32_1 = arith.constant 0 : i32
    return %c0_i32, %c0_i32_0 : i32, i32
  }
  func.func @transform_6(%arg0: i32) -> (i32, i32, i32) {
    %c0_i32 = arith.constant 0 : i32
    %c0_i32_0 = arith.constant 0 : i32
    %c0_i32_1 = arith.constant 0 : i32
    %c0_i32_2 = arith.constant 0 : i32
    return %c0_i32, %c0_i32_0, %c0_i32_1 : i32, i32, i32
  }
  func.func @transform_7(%arg0: i32) -> (i32, i32, i32) {
    %c0_i32 = arith.constant 0 : i32
    %c0_i32_0 = arith.constant 0 : i32
    %c0_i32_1 = arith.constant 0 : i32
    %c0_i32_2 = arith.constant 0 : i32
    return %c0_i32, %c0_i32_0, %c0_i32_1 : i32, i32, i32
  }
  func.func @transform_8(%arg0: i32) -> (i32, i32) {
    %c0_i32 = arith.constant 0 : i32
    %c0_i32_0 = arith.constant 0 : i32
    %c0_i32_1 = arith.constant 0 : i32
    return %c0_i32, %c0_i32_0 : i32, i32
  }
  func.func @transform_9(%arg0: i32) -> (i32, i32, i32) {
    %c0_i32 = arith.constant 0 : i32
    %c0_i32_0 = arith.constant 0 : i32
    %c0_i32_1 = arith.constant 0 : i32
    return %arg0, %c0_i32, %c0_i32_0 : i32, i32, i32
  }
}

</mosaic_0001>

<llo_original>
// kernel: cnn_forward.1
$region0: #{cnn_forward.1}
  #allocation0 [shape = 'u32[]', space=smem, size = 0x4, offset = 0x4, fixed_abs, tag = 'smem constant byte address 0x4 - core index']
  #allocation1 [shape = 'u32[144,128]{1,0:T(1,128)}', space=vmem, size = 0x12000, scoped, tag = 'internal scratch']
  #allocation2 [shape = 'f32[18,224]{1,0:T(8,128)}', space=vmem, size = 0x6000, scoped, tag = 'scratch operand']
  %s0 = inlined_call_operand.vmem [shape: f32[2,32,32], index: 0, kind: input, shape index: {}]
  %s1 = inlined_call_operand.hbm [shape: f32[2,5,32,224], index: 1, kind: input, shape index: {}]
  %s2 = inlined_call_operand.hbm [shape: f32[1,224], index: 2, kind: input, shape index: {}]
  %s3 = inlined_call_operand.vmem [shape: f32[2,14,28], index: 3, kind: input, shape index: {}]
  %s4 = inlined_call_operand.hbm [shape: f32[2,5,224,224], index: 4, kind: input, shape index: {}]
  %s5 = inlined_call_operand.hbm [shape: f32[1,224], index: 5, kind: input, shape index: {}]
  %s6 = inlined_call_operand.vmem [shape: f32[2,7,14], index: 6, kind: input, shape index: {}]
  %s7 = inlined_call_operand.vmem [shape: f32[7,224,10], index: 7, kind: input, shape index: {}]
  %s8 = inlined_call_operand.hbm [shape: f32[1,10], index: 8, kind: input, shape index: {}]
  %s9 = inlined_call_operand.hbm [shape: f32[2,1,10], index: 9, kind: output, shape index: {}]
  %s10 = sld [smem:[#allocation0]]
  $region89: #{cnn_forward.1} parent=0
    _
  %s12 = ssub.s32 1, %s10
  %s13 = scalar_select 0, %s12, %s10
  $region1: #{cnn_forward.1} parent=0
    #allocation3 [shape = 'u8[327680]{0}', space=vmem, size = 0x50000, scoped, tag = 'input window, operand 1, single buffered']
    #allocation4 [shape = 's32[2]{0}', space=sflag, size = 0x8, scoped, tag = 'scoped memory for cnn_forward.1']
    #allocation5 [shape = 's32[2]{0}', space=sflag, size = 0x8, scoped, tag = 'scoped memory for cnn_forward.1']
    #allocation6 [shape = 'u8[1024]{0}', space=vmem, size = 0x400, scoped, tag = 'input window, operand 2, single buffered']
    #allocation7 [shape = 's32[1]{0}', space=sflag, size = 0x4, scoped, tag = 'scoped memory for cnn_forward.1']
    #allocation8 [shape = 'u8[2293760]{0}', space=vmem, size = 0x230000, scoped, tag = 'input window, operand 4, single buffered']
    #allocation9 [shape = 'u8[1024]{0}', space=vmem, size = 0x400, scoped, tag = 'input window, operand 5, single buffered']
    #allocation10 [shape = 's32[1]{0}', space=sflag, size = 0x4, scoped, tag = 'scoped memory for cnn_forward.1']
    #allocation11 [shape = 'u8[512]{0}', space=vmem, size = 0x400, scoped, tag = 'input window, operand 8, single buffered']
    #allocation12 [shape = 'u8[1024]{0}', space=vmem, size = 0x400, scoped, tag = 'output window, operand 0']
    %14 = vsyncpa [#allocation4], 0
    %15 = vsyncpa [#allocation7], 0
    %16 = vsyncpa [#allocation10], 0
    %17 = vsyncpa [#allocation5], 0
    %s18 = scalar_lea.sflag [#allocation5], 1
    %19 = vsyncpa %s18, 0
    loop: start=0, step=1, limit=4
    $region2: #{cnn_forward.1} parent=1 // loop_pre_header
      _
    $region3: #{cnn_forward.1} parent=1 // loop_header
      %s21 = sphi 0, %s25
      %p22 = scmp.ge.s32.totalorder %s21, 4
      %s31 = sphi 0, %s33
      %s34 = sphi 0, %s31
      %s35 = sphi 0, %s34
      %s51 = sphi 0, %s35
      %s55 = sphi 0, %s55
      %s57 = sphi 0, %s55
      %s58 = sphi 0, %s57
      %s72 = sphi 0, %s58
      %s76 = sphi 0, %s76
      %s78 = sphi 0, %s76
      %s79 = sphi 0, %s78
      %s93 = sphi 0, %s79
      %s97 = sphi 0, %s97
      %s99 = sphi 0, %s97
      %s100 = sphi 0, %s99
      %s114 = sphi 0, %s100
      %s118 = sphi 0, %s118
      %s120 = sphi 0, %s118
      %s121 = sphi 0, %s120
      %s135 = sphi 0, %s121
      %s139 = sphi 0, %s139
      %s141 = sphi 0, %s139
      %s142 = sphi 0, %s141
      %s156 = sphi 0, %s142
      %s160 = sphi 0, %s160
      %s162 = sphi 0, %s160
      %s163 = sphi 0, %s162
      %s177 = sphi 0, %s163
      %s181 = sphi 0, %s181
      %s183 = sphi 0, %s181
      %s184 = sphi 0, %s183
      %s198 = sphi 0, %s184
      %s202 = sphi 0, %s202
      %s204 = sphi 0, %s202
      %s205 = sphi 0, %s204
      %s219 = sphi 0, %s205
      %s225 = sphi 0, %s227
      %s228 = sphi 0, %s225
      %s229 = sphi 0, %s228
      %s245 = sphi 0, %s229
    $region4: #{cnn_forward.1} parent=1 // loop_header_branch
      %24 = sbr.rel (%p22) target = $region8
    $region5: #{cnn_forward.1} parent=1 // loop_body
      %s26 = ssub.s32 %s21, 1
      %s27 = ssub.s32 %s21, 2
      %s28 = sadd.s32 %s21, 1
      %s29 = ssub.s32 %s21, %s28
      %p30 = scmp.eq.s32.totalorder %s29, 0
      %s32 = sadd.s32 %s31, 1
      %s33 = scalar_select %p30, %s31, %s32
      %p36 = pneg %p30
      %p37 = scmp.eq.s32.totalorder %s21, 1
      %p38 = por %p36, %p37
      %p39 = scmp.ne.s32.totalorder %s31, %s34
      %p40 = scmp.eq.s32.totalorder %s21, 0
      %p41 = por %p39, %p40
      %p42 = scmp.ne.s32.totalorder %s31, %s34
      %p43 = scmp.eq.s32.totalorder %s26, 1
      %p44 = por %p42, %p43
      %p45 = scmp.ne.s32.totalorder %s34, %s35
      %p46 = scmp.eq.s32.totalorder %s26, 0
      %p47 = por %p45, %p46
      %p48 = scmp.ne.s32.totalorder %s34, %s35
      %p49 = scmp.eq.s32.totalorder %s27, 1
      %p50 = por %p48, %p49
      %p52 = scmp.ne.s32.totalorder %s35, %s51
      %p53 = scmp.eq.s32.totalorder %s27, 0
      %p54 = por %p52, %p53
      %s56 = sadd.s32 %s55, 1
      %p59 = scmp.eq.s32.totalorder %s21, 1
      %p60 = scmp.ne.s32.totalorder %s55, %s57
      %p61 = scmp.eq.s32.totalorder %s21, 0
      %p62 = por %p60, %p61
      %p63 = scmp.ne.s32.totalorder %s55, %s57
      %p64 = scmp.eq.s32.totalorder %s26, 1
      %p65 = por %p63, %p64
      %p66 = scmp.ne.s32.totalorder %s57, %s58
      %p67 = scmp.eq.s32.totalorder %s26, 0
      %p68 = por %p66, %p67
      %p69 = scmp.ne.s32.totalorder %s57, %s58
      %p70 = scmp.eq.s32.totalorder %s27, 1
      %p71 = por %p69, %p70
      %p73 = scmp.ne.s32.totalorder %s58, %s72
      %p74 = scmp.eq.s32.totalorder %s27, 0
      %p75 = por %p73, %p74
      %s77 = sadd.s32 %s76, 1
      %p80 = scmp.eq.s32.totalorder %s21, 1
      %p81 = scmp.ne.s32.totalorder %s76, %s78
      %p82 = scmp.eq.s32.totalorder %s21, 0
      %p83 = por %p81, %p82
      %p84 = scmp.ne.s32.totalorder %s76, %s78
      %p85 = scmp.eq.s32.totalorder %s26, 1
      %p86 = por %p84, %p85
      %p87 = scmp.ne.s32.totalorder %s78, %s79
      %p88 = scmp.eq.s32.totalorder %s26, 0
      %p89 = por %p87, %p88
      %p90 = scmp.ne.s32.totalorder %s78, %s79
      %p91 = scmp.eq.s32.totalorder %s27, 1
      %p92 = por %p90, %p91
      %p94 = scmp.ne.s32.totalorder %s79, %s93
      %p95 = scmp.eq.s32.totalorder %s27, 0
      %p96 = por %p94, %p95
      %s98 = sadd.s32 %s97, 1
      %p101 = scmp.eq.s32.totalorder %s21, 1
      %p102 = scmp.ne.s32.totalorder %s97, %s99
      %p103 = scmp.eq.s32.totalorder %s21, 0
      %p104 = por %p102, %p103
      %p105 = scmp.ne.s32.totalorder %s97, %s99
      %p106 = scmp.eq.s32.totalorder %s26, 1
      %p107 = por %p105, %p106
      %p108 = scmp.ne.s32.totalorder %s99, %s100
      %p109 = scmp.eq.s32.totalorder %s26, 0
      %p110 = por %p108, %p109
      %p111 = scmp.ne.s32.totalorder %s99, %s100
      %p112 = scmp.eq.s32.totalorder %s27, 1
      %p113 = por %p111, %p112
      %p115 = scmp.ne.s32.totalorder %s100, %s114
      %p116 = scmp.eq.s32.totalorder %s27, 0
      %p117 = por %p115, %p116
      %s119 = sadd.s32 %s118, 1
      %p122 = scmp.eq.s32.totalorder %s21, 1
      %p123 = scmp.ne.s32.totalorder %s118, %s120
      %p124 = scmp.eq.s32.totalorder %s21, 0
      %p125 = por %p123, %p124
      %p126 = scmp.ne.s32.totalorder %s118, %s120
      %p127 = scmp.eq.s32.totalorder %s26, 1
      %p128 = por %p126, %p127
      %p129 = scmp.ne.s32.totalorder %s120, %s121
      %p130 = scmp.eq.s32.totalorder %s26, 0
      %p131 = por %p129, %p130
      %p132 = scmp.ne.s32.totalorder %s120, %s121
      %p133 = scmp.eq.s32.totalorder %s27, 1
      %p134 = por %p132, %p133
      %p136 = scmp.ne.s32.totalorder %s121, %s135
      %p137 = scmp.eq.s32.totalorder %s27, 0
      %p138 = por %p136, %p137
      %s140 = sadd.s32 %s139, 1
      %p143 = scmp.eq.s32.totalorder %s21, 1
      %p144 = scmp.ne.s32.totalorder %s139, %s141
      %p145 = scmp.eq.s32.totalorder %s21, 0
      %p146 = por %p144, %p145
      %p147 = scmp.ne.s32.totalorder %s139, %s141
      %p148 = scmp.eq.s32.totalorder %s26, 1
      %p149 = por %p147, %p148
      %p150 = scmp.ne.s32.totalorder %s141, %s142
      %p151 = scmp.eq.s32.totalorder %s26, 0
      %p152 = por %p150, %p151
      %p153 = scmp.ne.s32.totalorder %s141, %s142
      %p154 = scmp.eq.s32.totalorder %s27, 1
      %p155 = por %p153, %p154
      %p157 = scmp.ne.s32.totalorder %s142, %s156
      %p158 = scmp.eq.s32.totalorder %s27, 0
      %p159 = por %p157, %p158
      %s161 = sadd.s32 %s160, 1
      %p164 = scmp.eq.s32.totalorder %s21, 1
      %p165 = scmp.ne.s32.totalorder %s160, %s162
      %p166 = scmp.eq.s32.totalorder %s21, 0
      %p167 = por %p165, %p166
      %p168 = scmp.ne.s32.totalorder %s160, %s162
      %p169 = scmp.eq.s32.totalorder %s26, 1
      %p170 = por %p168, %p169
      %p171 = scmp.ne.s32.totalorder %s162, %s163
      %p172 = scmp.eq.s32.totalorder %s26, 0
      %p173 = por %p171, %p172
      %p174 = scmp.ne.s32.totalorder %s162, %s163
      %p175 = scmp.eq.s32.totalorder %s27, 1
      %p176 = por %p174, %p175
      %p178 = scmp.ne.s32.totalorder %s163, %s177
      %p179 = scmp.eq.s32.totalorder %s27, 0
      %p180 = por %p178, %p179
      %s182 = sadd.s32 %s181, 1
      %p185 = scmp.eq.s32.totalorder %s21, 1
      %p186 = scmp.ne.s32.totalorder %s181, %s183
      %p187 = scmp.eq.s32.totalorder %s21, 0
      %p188 = por %p186, %p187
      %p189 = scmp.ne.s32.totalorder %s181, %s183
      %p190 = scmp.eq.s32.totalorder %s26, 1
      %p191 = por %p189, %p190
      %p192 = scmp.ne.s32.totalorder %s183, %s184
      %p193 = scmp.eq.s32.totalorder %s26, 0
      %p194 = por %p192, %p193
      %p195 = scmp.ne.s32.totalorder %s183, %s184
      %p196 = scmp.eq.s32.totalorder %s27, 1
      %p197 = por %p195, %p196
      %p199 = scmp.ne.s32.totalorder %s184, %s198
      %p200 = scmp.eq.s32.totalorder %s27, 0
      %p201 = por %p199, %p200
      %s203 = sadd.s32 %s202, 1
      %p206 = scmp.eq.s32.totalorder %s21, 1
      %p207 = scmp.ne.s32.totalorder %s202, %s204
      %p208 = scmp.eq.s32.totalorder %s21, 0
      %p209 = por %p207, %p208
      %p210 = scmp.ne.s32.totalorder %s202, %s204
      %p211 = scmp.eq.s32.totalorder %s26, 1
      %p212 = por %p210, %p211
      %p213 = scmp.ne.s32.totalorder %s204, %s205
      %p214 = scmp.eq.s32.totalorder %s26, 0
      %p215 = por %p213, %p214
      %p216 = scmp.ne.s32.totalorder %s204, %s205
      %p217 = scmp.eq.s32.totalorder %s27, 1
      %p218 = por %p216, %p217
      %p220 = scmp.ne.s32.totalorder %s205, %s219
      %p221 = scmp.eq.s32.totalorder %s27, 0
      %p222 = por %p220, %p221
      %s223 = ssub.s32 %s21, %s28
      %p224 = scmp.eq.s32.totalorder %s223, 0
      %s226 = sadd.s32 %s225, 1
      %s227 = scalar_select %p224, %s225, %s226
      %p230 = pneg %p224
      %p231 = scmp.eq.s32.totalorder %s21, 1
      %p232 = por %p230, %p231
      %p233 = scmp.ne.s32.totalorder %s225, %s228
      %p234 = scmp.eq.s32.totalorder %s21, 0
      %p235 = por %p233, %p234
      %p236 = scmp.ne.s32.totalorder %s225, %s228
      %p237 = scmp.eq.s32.totalorder %s26, 1
      %p238 = por %p236, %p237
      %p239 = scmp.ne.s32.totalorder %s228, %s229
      %p240 = scmp.eq.s32.totalorder %s26, 0
      %p241 = por %p239, %p240
      %p242 = scmp.ne.s32.totalorder %s228, %s229
      %p243 = scmp.eq.s32.totalorder %s27, 1
      %p244 = por %p242, %p243
      %p246 = scmp.ne.s32.totalorder %s229, %s245
      %p247 = scmp.eq.s32.totalorder %s27, 0
      %p248 = por %p246, %p247
      %p249 = scmp.le.s32.totalorder 1, %s21
      %p250 = scmp.lt.s32.totalorder %s21, 3
      %p251 = pnand %p249, %p250
      %p252 = pneg %p251
      // Predicated region
      $region9: #{cnn_forward.1} parent=5 // pred_check
        _
      $region10: #{cnn_forward.1} parent=5 // pred_check_branch
        %254 = sbr.rel (%p251) target = $region12
      $region11: #{cnn_forward.1} parent=5 // pred_region
        %s255 = ssub.s32 %s21, 1
        // Predicated region
        $region13: #{cnn_forward.1} parent=11 // pred_check
          %p256 = pneg %p68
        $region14: #{cnn_forward.1} parent=11 // pred_check_branch
          %258 = sbr.rel (%p256) target = $region16
        $region15: #{cnn_forward.1} parent=11 // pred_region
          %s260 = ssub.s32 10240, 10240
          %261 = vsyncadd [#allocation4], %s260
          %s262 = sshll.u32 [#allocation3], 4
          %s263 = int_to_ptr.vmem [resolvable:$true] %s262
          %268 = dma.hbm_to_vmem [thread:$0]  %s1, 10240, %s263, [#allocation4], 256, 256, 16
        $region16: #{cnn_forward.1} parent=11 // pred_fallthru
          _
        // Predicated region
        $region17: #{cnn_forward.1} parent=11 // pred_check
          %p269 = pneg %p89
        $region18: #{cnn_forward.1} parent=11 // pred_check_branch
          %271 = sbr.rel (%p269) target = $region20
        $region19: #{cnn_forward.1} parent=11 // pred_region
          %s273 = ssub.s32 32, 32
          %274 = vsyncadd [#allocation7], %s273
          %s276 = sshll.u32 [#allocation6], 4
          %s277 = int_to_ptr.vmem [resolvable:$true] %s276
          %279 = dma.hbm_to_vmem [thread:$0]  %s2, 32, %s277, [#allocation7]
        $region20: #{cnn_forward.1} parent=11 // pred_fallthru
          _
        // Predicated region
        $region21: #{cnn_forward.1} parent=11 // pred_check
          %p280 = pneg %p110
        $region22: #{cnn_forward.1} parent=11 // pred_check_branch
          %282 = sbr.rel (%p280) target = $region24
        $region23: #{cnn_forward.1} parent=11 // pred_region
          _
        $region24: #{cnn_forward.1} parent=11 // pred_fallthru
          _
        // Predicated region
        $region25: #{cnn_forward.1} parent=11 // pred_check
          %p283 = pneg %p131
        $region26: #{cnn_forward.1} parent=11 // pred_check_branch
          %285 = sbr.rel (%p283) target = $region28
        $region27: #{cnn_forward.1} parent=11 // pred_region
          %s287 = ssub.s32 71680, 71680
          %288 = vsyncadd [#allocation7], %s287
          %s289 = sshll.u32 [#allocation8], 4
          %s290 = int_to_ptr.vmem [resolvable:$true] %s289
          %295 = dma.hbm_to_vmem [thread:$0]  %s4, 71680, %s290, [#allocation7], 256, 256, 16
        $region28: #{cnn_forward.1} parent=11 // pred_fallthru
          _
        // Predicated region
        $region29: #{cnn_forward.1} parent=11 // pred_check
          %p296 = pneg %p152
        $region30: #{cnn_forward.1} parent=11 // pred_check_branch
          %298 = sbr.rel (%p296) target = $region32
        $region31: #{cnn_forward.1} parent=11 // pred_region
          %s300 = ssub.s32 32, 32
          %301 = vsyncadd [#allocation10], %s300
          %s303 = sshll.u32 [#allocation9], 4
          %s304 = int_to_ptr.vmem [resolvable:$true] %s303
          %306 = dma.hbm_to_vmem [thread:$0]  %s5, 32, %s304, [#allocation10]
        $region32: #{cnn_forward.1} parent=11 // pred_fallthru
          _
        // Predicated region
        $region33: #{cnn_forward.1} parent=11 // pred_check
          %p307 = pneg %p173
        $region34: #{cnn_forward.1} parent=11 // pred_check_branch
          %309 = sbr.rel (%p307) target = $region36
        $region35: #{cnn_forward.1} parent=11 // pred_region
          _
        $region36: #{cnn_forward.1} parent=11 // pred_fallthru
          _
        // Predicated region
        $region37: #{cnn_forward.1} parent=11 // pred_check
          %p310 = pneg %p194
        $region38: #{cnn_forward.1} parent=11 // pred_check_branch
          %312 = sbr.rel (%p310) target = $region40
        $region39: #{cnn_forward.1} parent=11 // pred_region
          _
        $region40: #{cnn_forward.1} parent=11 // pred_fallthru
          _
        // Predicated region
        $region41: #{cnn_forward.1} parent=11 // pred_check
          %p313 = pneg %p215
        $region42: #{cnn_forward.1} parent=11 // pred_check_branch
          %315 = sbr.rel (%p313) target = $region44
        $region43: #{cnn_forward.1} parent=11 // pred_region
          %s317 = ssub.s32 16, 16
          %318 = vsyncadd [#allocation10], %s317
          %s320 = sshll.u32 [#allocation11], 4
          %s321 = int_to_ptr.vmem [resolvable:$true] %s320
          %323 = dma.hbm_to_vmem [thread:$0]  %s8, 16, %s321, [#allocation10]
        $region44: #{cnn_forward.1} parent=11 // pred_fallthru
          _
      $region12: #{cnn_forward.1} parent=5 // pred_fallthru
        _
      %p324 = scmp.lt.s32.totalorder %s21, 2
      // Predicated region
      $region45: #{cnn_forward.1} parent=5 // pred_check
        %p325 = pneg %p324
      $region46: #{cnn_forward.1} parent=5 // pred_check_branch
        %327 = sbr.rel (%p325) target = $region48
      $region47: #{cnn_forward.1} parent=5 // pred_region
        // Predicated region
        $region49: #{cnn_forward.1} parent=47 // pred_check
          %p328 = pneg %p41
        $region50: #{cnn_forward.1} parent=47 // pred_check_branch
          %330 = sbr.rel (%p328) target = $region52
        $region51: #{cnn_forward.1} parent=47 // pred_region
          %p331 = scmp.lt.s32.totalorder %s21, 1
          %s332 = scalar_select %p331, %s21, 1
          %s333 = smul.addr %s332, 4
          %s334 = smul.addr %s333, 8
          %s335 = scalar_lea.vmem %s0, %s334
        $region52: #{cnn_forward.1} parent=47 // pred_fallthru
          _
      $region48: #{cnn_forward.1} parent=5 // pred_fallthru
        _
      %p336 = scmp.le.s32.totalorder 1, %s21
      %p337 = scmp.lt.s32.totalorder %s21, 3
      %p338 = pnand %p336, %p337
      %p339 = pneg %p338
      // Predicated region
      $region53: #{cnn_forward.1} parent=5 // pred_check
        _
      $region54: #{cnn_forward.1} parent=5 // pred_check_branch
        %341 = sbr.rel (%p338) target = $region56
      $region55: #{cnn_forward.1} parent=5 // pred_region
        %s342 = ssub.s32 %s21, 1
        // Predicated region
        $region57: #{cnn_forward.1} parent=55 // pred_check
          %p343 = pneg %p68
        $region58: #{cnn_forward.1} parent=55 // pred_check_branch
          %345 = sbr.rel (%p343) target = $region60
        $region59: #{cnn_forward.1} parent=55 // pred_region
          %346 = dma.done [#allocation4], 10240
        $region60: #{cnn_forward.1} parent=55 // pred_fallthru
          _
        // Predicated region
        $region61: #{cnn_forward.1} parent=55 // pred_check
          %p347 = pneg %p89
        $region62: #{cnn_forward.1} parent=55 // pred_check_branch
          %349 = sbr.rel (%p347) target = $region64
        $region63: #{cnn_forward.1} parent=55 // pred_region
          %350 = dma.done [#allocation7], 32
        $region64: #{cnn_forward.1} parent=55 // pred_fallthru
          _
        // Predicated region
        $region65: #{cnn_forward.1} parent=55 // pred_check
          %p351 = pneg %p131
        $region66: #{cnn_forward.1} parent=55 // pred_check_branch
          %353 = sbr.rel (%p351) target = $region68
        $region67: #{cnn_forward.1} parent=55 // pred_region
          %354 = dma.done [#allocation7], 71680
        $region68: #{cnn_forward.1} parent=55 // pred_fallthru
          _
        // Predicated region
        $region69: #{cnn_forward.1} parent=55 // pred_check
          %p355 = pneg %p152
        $region70: #{cnn_forward.1} parent=55 // pred_check_branch
          %357 = sbr.rel (%p355) target = $region72
        $region71: #{cnn_forward.1} parent=55 // pred_region
          %358 = dma.done [#allocation10], 32
        $region72: #{cnn_forward.1} parent=55 // pred_fallthru
          _
        // Predicated region
        $region73: #{cnn_forward.1} parent=55 // pred_check
          %p359 = pneg %p215
        $region74: #{cnn_forward.1} parent=55 // pred_check_branch
          %361 = sbr.rel (%p359) target = $region76
        $region75: #{cnn_forward.1} parent=55 // pred_region
          %362 = dma.done [#allocation10], 16
        $region76: #{cnn_forward.1} parent=55 // pred_fallthru
          _
        %p363 = scmp.lt.s32.totalorder %s26, 1
        %s364 = scalar_select %p363, %s26, 1
        %s365 = smul.addr %s364, 4
        %s366 = smul.addr %s365, 8
        %s367 = scalar_lea.vmem %s0, %s366
        %p368 = pneg %p47
        %p369 = pneg %p44
        %p370 = pneg %p68
        %p371 = pneg %p65
        %p372 = pneg %p89
        %p373 = pneg %p86
        %p374 = pneg %p110
        %p375 = pneg %p107
        %p376 = pneg %p131
        %p377 = pneg %p128
        %p378 = pneg %p152
        %p379 = pneg %p149
        %p380 = pneg %p173
        %p381 = pneg %p170
        %p382 = pneg %p194
        %p383 = pneg %p191
        %p384 = pneg %p215
        %p385 = pneg %p212
        %p386 = pneg %p241
        %p387 = pneg %p238
        %s388 = sand.u32 %s228, 1
        %s389 = scalar_lea.sflag [#allocation5], %s388
        %s390 = sand.u32 %s228, 1
        %s391 = scalar_lea.vmem [#allocation12], %s390
        %p392 = scmp.lt.s32.totalorder %s26, 1
        %s393 = scalar_select %p392, %s26, 1
        %s394 = smul.addr %s393, 4
        %s395 = smul.addr %s394, 8
        %s396 = scalar_lea.vmem %s0, %s395
        %v397 = vld [vmem:[%s396] sm:$0xff]
        %v398 = vld [vmem:[%s396 + $0x8] sm:$0xff]
        %v399 = vld [vmem:[%s396 + $0x10] sm:$0xff]
        %v400 = vld [vmem:[%s396 + $0x18] sm:$0xf]
        %v401 = vld [vmem:[#allocation3] sm:$0xff]
        %v402 = vld [vmem:[#allocation3 + $0x8] sm:$0xff]
        %v403 = vld [vmem:[#allocation3 + $0x10] sm:$0xff]
        %v404 = vld [vmem:[#allocation3 + $0x18] sm:$0xff]
        %v405 = vld [vmem:[#allocation3 + $0x20] sm:$0xff]
        %v406 = vld [vmem:[#allocation3 + $0x28] sm:$0xff]
        %v407 = vld [vmem:[#allocation3 + $0x30] sm:$0xff]
        %v408 = vld [vmem:[#allocation3 + $0x38] sm:$0xff]
        %v409 = vld [vmem:[%s396 + $0x1] sm:$0xff]
        %v410 = vld [vmem:[%s396 + $0x9] sm:$0xff]
        %v411 = vld [vmem:[%s396 + $0x11] sm:$0xff]
        %v412 = vld [vmem:[%s396 + $0x19] sm:$0xf]
        %s413 = scalar_lea.vmem [#allocation3], 64
        %v414 = vld [vmem:[%s413] sm:$0xff]
        %v415 = vld [vmem:[%s413 + $0x8] sm:$0xff]
        %v416 = vld [vmem:[%s413 + $0x10] sm:$0xff]
        %v417 = vld [vmem:[%s413 + $0x18] sm:$0xff]
        %v418 = vld [vmem:[%s413 + $0x20] sm:$0xff]
        %v419 = vld [vmem:[%s413 + $0x28] sm:$0xff]
        %v420 = vld [vmem:[%s413 + $0x30] sm:$0xff]
        %v421 = vld [vmem:[%s413 + $0x38] sm:$0xff]
        %vm422 = vcmask 261120
        %v424 = vsel %vm422, %v409, 0
        %v427 = vsel %vm422, %v410, 0
        %v430 = vsel %vm422, %v411, 0
        %v433 = vsel %vm422, %v412, 0
        %435 = vmatprep.subr.mxu0 %v415
        %436 = vmatpush1.msra.mxu0 %v414
        %437 = vmatprep.subr.mxu0 %v417
        %438 = vmatpush1.msra.mxu0 %v416
        %439 = vmatprep.subr.mxu0 %v419
        %440 = vmatpush1.msra.mxu0 %v418
        %441 = vmatprep.subr.mxu0 %v421
        %442 = vmatpush1.msra.mxu0 %v420
        %443 = vmatprep.subr.mxu0 0.0
        %444 = vmatpush1.msra.mxu0 0.0
        %445 = vmatprep.subr.mxu0 0.0
        %446 = vmatpush1.msra.mxu0 0.0
        %447 = vmatprep.subr.mxu0 0.0
        %448 = vmatpush1.msra.mxu0 0.0
        %449 = vmatprep.subr.mxu0 0.0
        %450 = vmatpush1.msra.mxu0 0.0
        %451 = vmatprep.subr.mxu0 0.0
        %452 = vmatpush1.msra.mxu0 0.0
        %453 = vmatprep.subr.mxu0 0.0
        %454 = vmatpush1.msra.mxu0 0.0
        %455 = vmatprep.subr.mxu0 0.0
        %456 = vmatpush1.msra.mxu0 0.0
        %457 = vmatprep.subr.mxu0 0.0
        %458 = vmatpush1.msra.mxu0 0.0
        %459 = vmatprep.subr.mxu0 0.0
        %460 = vmatpush1.msra.mxu0 0.0
        %461 = vmatprep.subr.mxu0 0.0
        %462 = vmatpush1.msra.mxu0 0.0
        %463 = vmatprep.subr.mxu0 0.0
        %464 = vmatpush1.msra.mxu0 0.0
        %465 = vmatprep.subr.mxu0 0.0
        %466 = vmatpush1.msra.mxu0 0.0
        %467 = vmatprep.subr.mxu0 0.0
        %468 = vmatpush1.msra.mxu0 0.0
        %469 = vmatprep.subr.mxu0 0.0
        %470 = vmatpush1.msra.mxu0 0.0
        %471 = vmatprep.subr.mxu0 0.0
        %472 = vmatpush1.msra.mxu0 0.0
        %473 = vmatprep.subr.mxu0 0.0
        %474 = vmatpush1.msra.mxu0 0.0
        %475 = vmatprep.subr.mxu0 0.0
        %476 = vmatpush1.msra.mxu0 0.0
        %477 = vmatprep.subr.mxu0 0.0
        %478 = vmatpush1.msra.mxu0 0.0
        %479 = vmatprep.subr.mxu0 0.0
        %480 = vmatpush1.msra.mxu0 0.0
        %481 = vmatprep.subr.mxu0 0.0
        %482 = vmatpush1.msra.mxu0 0.0
        %483 = vmatprep.subr.mxu0 0.0
        %484 = vmatpush1.msra.mxu0 0.0
        %485 = vmatprep.subr.mxu0 0.0
        %486 = vmatpush1.msra.mxu0 0.0
        %487 = vmatprep.subr.mxu0 0.0
        %488 = vmatpush1.msra.mxu0 0.0
        %489 = vmatprep.subr.mxu0 0.0
        %490 = vmatpush1.msra.mxu0 0.0
        %491 = vmatprep.subr.mxu0 0.0
        %492 = vmatpush1.msra.mxu0 0.0
        %493 = vmatprep.subr.mxu0 0.0
        %494 = vmatpush1.msra.mxu0 0.0
        %495 = vmatprep.subr.mxu0 0.0
        %496 = vmatpush1.msra.mxu0 0.0
        %497 = vmatprep.subr.mxu0 0.0
        %498 = vmatpush1.msra.mxu0 0.0
        %499 = vmatprep.mubr.f32.mxu0 0.0
        %500 = vmatmul.mubr.f32.gmra.mrb[0].mxu0 %v424
        %v501 = vpop.f32.mrb[0].mxu0
        %v502 = vadd.f32 0.0, %v501
        %v503 = vpop.f32.mrb[0].mxu0
        %v504 = vadd.f32 0.0, %v503
        %505 = vmatprep.mubr.f32.mxu0 0.0
        %506 = vmatmul.mubr.f32.gmra.mrb[0].mxu0 %v427
        %v507 = vpop.f32.mrb[0].mxu0
        %v508 = vadd.f32 0.0, %v507
        %v509 = vpop.f32.mrb[0].mxu0
        %v510 = vadd.f32 0.0, %v509
        %511 = vmatprep.mubr.f32.mxu0 0.0
        %512 = vmatmul.mubr.f32.gmra.mrb[0].mxu0 %v430
        %v513 = vpop.f32.mrb[0].mxu0
        %v514 = vadd.f32 0.0, %v513
        %v515 = vpop.f32.mrb[0].mxu0
        %v516 = vadd.f32 0.0, %v515
        %517 = vmatprep.mubr.f32.mxu0 0.0
        %518 = vmatmul.mubr.f32.gmra.mrb[0].mxu0 %v433
        %v519 = vpop.f32.mrb[0].mxu0
        %v520 = vadd.f32 0.0, %v519
        %v521 = vpop.f32.mrb[0].mxu0
        %v522 = vadd.f32 0.0, %v521
        %523 = vdwg.mxu0
        %v525 = vsel %vm422, %v397, 0
        %v528 = vsel %vm422, %v398, 0
        %v531 = vsel %vm422, %v399, 0
        %v534 = vsel %vm422, %v400, 0
        %536 = vmatprep.subr.mxu0 %v402
        %537 = vmatpush1.msra.mxu0 %v401
        %538 = vmatprep.subr.mxu0 %v404
        %539 = vmatpush1.msra.mxu0 %v403
        %540 = vmatprep.subr.mxu0 %v406
        %541 = vmatpush1.msra.mxu0 %v405
        %542 = vmatprep.subr.mxu0 %v408
        %543 = vmatpush1.msra.mxu0 %v407
        %544 = vmatprep.subr.mxu0 0.0
        %545 = vmatpush1.msra.mxu0 0.0
        %546 = vmatprep.subr.mxu0 0.0
        %547 = vmatpush1.msra.mxu0 0.0
        %548 = vmatprep.subr.mxu0 0.0
        %549 = vmatpush1.msra.mxu0 0.0
        %550 = vmatprep.subr.mxu0 0.0
        %551 = vmatpush1.msra.mxu0 0.0
        %552 = vmatprep.subr.mxu0 0.0
        %553 = vmatpush1.msra.mxu0 0.0
        %554 = vmatprep.subr.mxu0 0.0
        %555 = vmatpush1.msra.mxu0 0.0
        %556 = vmatprep.subr.mxu0 0.0
        %557 = vmatpush1.msra.mxu0 0.0
        %558 = vmatprep.subr.mxu0 0.0
        %559 = vmatpush1.msra.mxu0 0.0
        %560 = vmatprep.subr.mxu0 0.0
        %561 = vmatpush1.msra.mxu0 0.0
        %562 = vmatprep.subr.mxu0 0.0
        %563 = vmatpush1.msra.mxu0 0.0
        %564 = vmatprep.subr.mxu0 0.0
        %565 = vmatpush1.msra.mxu0 0.0
        %566 = vmatprep.subr.mxu0 0.0
        %567 = vmatpush1.msra.mxu0 0.0
        %568 = vmatprep.subr.mxu0 0.0
        %569 = vmatpush1.msra.mxu0 0.0
        %570 = vmatprep.subr.mxu0 0.0
        %571 = vmatpush1.msra.mxu0 0.0
        %572 = vmatprep.subr.mxu0 0.0
        %573 = vmatpush1.msra.mxu0 0.0
        %574 = vmatprep.subr.mxu0 0.0
        %575 = vmatpush1.msra.mxu0 0.0
        %576 = vmatprep.subr.mxu0 0.0
        %577 = vmatpush1.msra.mxu0 0.0
        %578 = vmatprep.subr.mxu0 0.0
        %579 = vmatpush1.msra.mxu0 0.0
        %580 = vmatprep.subr.mxu0 0.0
        %581 = vmatpush1.msra.mxu0 0.0
        %582 = vmatprep.subr.mxu0 0.0
        %583 = vmatpush1.msra.mxu0 0.0
        %584 = vmatprep.subr.mxu0 0.0
        %585 = vmatpush1.msra.mxu0 0.0
        %586 = vmatprep.subr.mxu0 0.0
        %587 = vmatpush1.msra.mxu0 0.0
        %588 = vmatprep.subr.mxu0 0.0
        %589 = vmatpush1.msra.mxu0 0.0
        %590 = vmatprep.subr.mxu0 0.0
        %591 = vmatpush1.msra.mxu0 0.0
        %592 = vmatprep.subr.mxu0 0.0
        %593 = vmatpush1.msra.mxu0 0.0
        %594 = vmatprep.subr.mxu0 0.0
        %595 = vmatpush1.msra.mxu0 0.0
        %596 = vmatprep.subr.mxu0 0.0
        %597 = vmatpush1.msra.mxu0 0.0
        %598 = vmatprep.subr.mxu0 0.0
        %599 = vmatpush1.msra.mxu0 0.0
        %600 = vmatprep.mubr.f32.mxu0 0.0
        %601 = vmatmul.mubr.f32.gmra.mrb[0].mxu0 %v525
        %v602 = vpop.f32.mrb[0].mxu0
        %v603 = vadd.f32 %v502, %v602
        %v604 = vpop.f32.mrb[0].mxu0
        %v605 = vadd.f32 %v504, %v604
        %606 = vmatprep.mubr.f32.mxu0 0.0
        %607 = vmatmul.mubr.f32.gmra.mrb[0].mxu0 %v528
        %v608 = vpop.f32.mrb[0].mxu0
        %v609 = vadd.f32 %v508, %v608
        %v610 = vpop.f32.mrb[0].mxu0
        %v611 = vadd.f32 %v510, %v610
        %612 = vmatprep.mubr.f32.mxu0 0.0
        %613 = vmatmul.mubr.f32.gmra.mrb[0].mxu0 %v531
        %v614 = vpop.f32.mrb[0].mxu0
        %v615 = vadd.f32 %v514, %v614
        %v616 = vpop.f32.mrb[0].mxu0
        %v617 = vadd.f32 %v516, %v616
        %618 = vmatprep.mubr.f32.mxu0 0.0
        %619 = vmatmul.mubr.f32.gmra.mrb[0].mxu0 %v534
        %v620 = vpop.f32.mrb[0].mxu0
        %v621 = vadd.f32 %v520, %v620
        %v622 = vpop.f32.mrb[0].mxu0
        %v623 = vadd.f32 %v522, %v622
        %624 = vdwg.mxu0
        %v625 = vld [vmem:[%s396 + $0x2] sm:$0xff]
        %v626 = vld [vmem:[%s396 + $0xa] sm:$0xff]
        %v627 = vld [vmem:[%s396 + $0x12] sm:$0xff]
        %v628 = vld [vmem:[%s396 + $0x1a] sm:$0xf]
        %s629 = scalar_lea.vmem [#allocation3], 128
        %v630 = vld [vmem:[%s629] sm:$0xff]
        %v631 = vld [vmem:[%s629 + $0x8] sm:$0xff]
        %v632 = vld [vmem:[%s629 + $0x10] sm:$0xff]
        %v633 = vld [vmem:[%s629 + $0x18] sm:$0xff]
        %v634 = vld [vmem:[%s629 + $0x20] sm:$0xff]
        %v635 = vld [vmem:[%s629 + $0x28] sm:$0xff]
        %v636 = vld [vmem:[%s629 + $0x30] sm:$0xff]
        %v637 = vld [vmem:[%s629 + $0x38] sm:$0xff]
        %v639 = vsel %vm422, %v625, 0
        %v642 = vsel %vm422, %v626, 0
        %v645 = vsel %vm422, %v627, 0
        %v648 = vsel %vm422, %v628, 0
        %650 = vmatprep.subr.mxu0 %v631
        %651 = vmatpush1.msra.mxu0 %v630
        %652 = vmatprep.subr.mxu0 %v633
        %653 = vmatpush1.msra.mxu0 %v632
        %654 = vmatprep.subr.mxu0 %v635
        %655 = vmatpush1.msra.mxu0 %v634
        %656 = vmatprep.subr.mxu0 %v637
        %657 = vmatpush1.msra.mxu0 %v636
        %658 = vmatprep.subr.mxu0 0.0
        %659 = vmatpush1.msra.mxu0 0.0
        %660 = vmatprep.subr.mxu0 0.0
        %661 = vmatpush1.msra.mxu0 0.0
        %662 = vmatprep.subr.mxu0 0.0
        %663 = vmatpush1.msra.mxu0 0.0
        %664 = vmatprep.subr.mxu0 0.0
        %665 = vmatpush1.msra.mxu0 0.0
        %666 = vmatprep.subr.mxu0 0.0
        %667 = vmatpush1.msra.mxu0 0.0
        %668 = vmatprep.subr.mxu0 0.0
        %669 = vmatpush1.msra.mxu0 0.0
        %670 = vmatprep.subr.mxu0 0.0
        %671 = vmatpush1.msra.mxu0 0.0
        %672 = vmatprep.subr.mxu0 0.0
        %673 = vmatpush1.msra.mxu0 0.0
        %674 = vmatprep.subr.mxu0 0.0
        %675 = vmatpush1.msra.mxu0 0.0
        %676 = vmatprep.subr.mxu0 0.0
        %677 = vmatpush1.msra.mxu0 0.0
        %678 = vmatprep.subr.mxu0 0.0
        %679 = vmatpush1.msra.mxu0 0.0
        %680 = vmatprep.subr.mxu0 0.0
        %681 = vmatpush1.msra.mxu0 0.0
        %682 = vmatprep.subr.mxu0 0.0
        %683 = vmatpush1.msra.mxu0 0.0
        %684 = vmatprep.subr.mxu0 0.0
        %685 = vmatpush1.msra.mxu0 0.0
        %686 = vmatprep.subr.mxu0 0.0
        %687 = vmatpush1.msra.mxu0 0.0
        %688 = vmatprep.subr.mxu0 0.0
        %689 = vmatpush1.msra.mxu0 0.0
        %690 = vmatprep.subr.mxu0 0.0
        %691 = vmatpush1.msra.mxu0 0.0
        %692 = vmatprep.subr.mxu0 0.0
        %693 = vmatpush1.msra.mxu0 0.0
        %694 = vmatprep.subr.mxu0 0.0
        %695 = vmatpush1.msra.mxu0 0.0
        %696 = vmatprep.subr.mxu0 0.0
        %697 = vmatpush1.msra.mxu0 0.0
        %698 = vmatprep.subr.mxu0 0.0
        %699 = vmatpush1.msra.mxu0 0.0
        %700 = vmatprep.subr.mxu0 0.0
        %701 = vmatpush1.msra.mxu0 0.0
        %702 = vmatprep.subr.mxu0 0.0
        %703 = vmatpush1.msra.mxu0 0.0
        %704 = vmatprep.subr.mxu0 0.0
        %705 = vmatpush1.msra.mxu0 0.0
        %706 = vmatprep.subr.mxu0 0.0
        %707 = vmatpush1.msra.mxu0 0.0
        %708 = vmatprep.subr.mxu0 0.0
        %709 = vmatpush1.msra.mxu0 0.0
        %710 = vmatprep.subr.mxu0 0.0
        %711 = vmatpush1.msra.mxu0 0.0
        %712 = vmatprep.subr.mxu0 0.0
        %713 = vmatpush1.msra.mxu0 0.0
        %714 = vmatprep.mubr.f32.mxu0 0.0
        %715 = vmatmul.mubr.f32.gmra.mrb[0].mxu0 %v639
        %v716 = vpop.f32.mrb[0].mxu0
        %v717 = vadd.f32 0.0, %v716
        %v718 = vpop.f32.mrb[0].mxu0
        %v719 = vadd.f32 0.0, %v718
        %720 = vmatprep.mubr.f32.mxu0 0.0
        %721 = vmatmul.mubr.f32.gmra.mrb[0].mxu0 %v642
        %v722 = vpop.f32.mrb[0].mxu0
        %v723 = vadd.f32 0.0, %v722
        %v724 = vpop.f32.mrb[0].mxu0
        %v725 = vadd.f32 0.0, %v724
        %726 = vmatprep.mubr.f32.mxu0 0.0
        %727 = vmatmul.mubr.f32.gmra.mrb[0].mxu0 %v645
        %v728 = vpop.f32.mrb[0].mxu0
        %v729 = vadd.f32 0.0, %v728
        %v730 = vpop.f32.mrb[0].mxu0
        %v731 = vadd.f32 0.0, %v730
        %732 = vmatprep.mubr.f32.mxu0 0.0
        %733 = vmatmul.mubr.f32.gmra.mrb[0].mxu0 %v648
        %v734 = vpop.f32.mrb[0].mxu0
        %v735 = vadd.f32 0.0, %v734
        %v736 = vpop.f32.mrb[0].mxu0
        %v737 = vadd.f32 0.0, %v736
        %738 = vdwg.mxu0
        %v739 = vadd.f32 %v603, %v717
        %v740 = vadd.f32 %v605, %v719
        %v741 = vadd.f32 %v609, %v723
        %v742 = vadd.f32 %v611, %v725
        %v743 = vadd.f32 %v615, %v729
        %v744 = vadd.f32 %v617, %v731
        %v745 = vadd.f32 %v621, %v735
        %v746 = vadd.f32 %v623, %v737
        %v747 = vld [vmem:[%s396 + $0x3] sm:$0xff]
        %v748 = vld [vmem:[%s396 + $0xb] sm:$0xff]
        %v749 = vld [vmem:[%s396 + $0x13] sm:$0xff]
        %v750 = vld [vmem:[%s396 + $0x1b] sm:$0xf]
        %s751 = scalar_lea.vmem [#allocation3], 192
        %v752 = vld [vmem:[%s751] sm:$0xff]
        %v753 = vld [vmem:[%s751 + $0x8] sm:$0xff]
        %v754 = vld [vmem:[%s751 + $0x10] sm:$0xff]
        %v755 = vld [vmem:[%s751 + $0x18] sm:$0xff]
        %v756 = vld [vmem:[%s751 + $0x20] sm:$0xff]
        %v757 = vld [vmem:[%s751 + $0x28] sm:$0xff]
        %v758 = vld [vmem:[%s751 + $0x30] sm:$0xff]
        %v759 = vld [vmem:[%s751 + $0x38] sm:$0xff]
        %v761 = vsel %vm422, %v747, 0
        %v764 = vsel %vm422, %v748, 0
        %v767 = vsel %vm422, %v749, 0
        %v770 = vsel %vm422, %v750, 0
        %772 = vmatprep.subr.mxu0 %v753
        %773 = vmatpush1.msra.mxu0 %v752
        %774 = vmatprep.subr.mxu0 %v755
        %775 = vmatpush1.msra.mxu0 %v754
        %776 = vmatprep.subr.mxu0 %v757
        %777 = vmatpush1.msra.mxu0 %v756
        %778 = vmatprep.subr.mxu0 %v759
        %779 = vmatpush1.msra.mxu0 %v758
        %780 = vmatprep.subr.mxu0 0.0
        %781 = vmatpush1.msra.mxu0 0.0
        %782 = vmatprep.subr.mxu0 0.0
        %783 = vmatpush1.msra.mxu0 0.0
        %784 = vmatprep.subr.mxu0 0.0
        %785 = vmatpush1.msra.mxu0 0.0
        %786 = vmatprep.subr.mxu0 0.0
        %787 = vmatpush1.msra.mxu0 0.0
        %788 = vmatprep.subr.mxu0 0.0
        %789 = vmatpush1.msra.mxu0 0.0
        %790 = vmatprep.subr.mxu0 0.0
        %791 = vmatpush1.msra.mxu0 0.0
        %792 = vmatprep.subr.mxu0 0.0
        %793 = vmatpush1.msra.mxu0 0.0
        %794 = vmatprep.subr.mxu0 0.0
        %795 = vmatpush1.msra.mxu0 0.0
        %796 = vmatprep.subr.mxu0 0.0
        %797 = vmatpush1.msra.mxu0 0.0
        %798 = vmatprep.subr.mxu0 0.0
        %799 = vmatpush1.msra.mxu0 0.0
        %800 = vmatprep.subr.mxu0 0.0
        %801 = vmatpush1.msra.mxu0 0.0
        %802 = vmatprep.subr.mxu0 0.0
        %803 = vmatpush1.msra.mxu0 0.0
        %804 = vmatprep.subr.mxu0 0.0
        %805 = vmatpush1.msra.mxu0 0.0
        %806 = vmatprep.subr.mxu0 0.0
        %807 = vmatpush1.msra.mxu0 0.0
        %808 = vmatprep.subr.mxu0 0.0
        %809 = vmatpush1.msra.mxu0 0.0
        %810 = vmatprep.subr.mxu0 0.0
        %811 = vmatpush1.msra.mxu0 0.0
        %812 = vmatprep.subr.mxu0 0.0
        %813 = vmatpush1.msra.mxu0 0.0
        %814 = vmatprep.subr.mxu0 0.0
        %815 = vmatpush1.msra.mxu0 0.0
        %816 = vmatprep.subr.mxu0 0.0
        %817 = vmatpush1.msra.mxu0 0.0
        %818 = vmatprep.subr.mxu0 0.0
        %819 = vmatpush1.msra.mxu0 0.0
        %820 = vmatprep.subr.mxu0 0.0
        %821 = vmatpush1.msra.mxu0 0.0
        %822 = vmatprep.subr.mxu0 0.0
        %823 = vmatpush1.msra.mxu0 0.0
        %824 = vmatprep.subr.mxu0 0.0
        %825 = vmatpush1.msra.mxu0 0.0
        %826 = vmatprep.subr.mxu0 0.0
        %827 = vmatpush1.msra.mxu0 0.0
        %828 = vmatprep.subr.mxu0 0.0
        %829 = vmatpush1.msra.mxu0 0.0
        %830 = vmatprep.subr.mxu0 0.0
        %831 = vmatpush1.msra.mxu0 0.0
        %832 = vmatprep.subr.mxu0 0.0
        %833 = vmatpush1.msra.mxu0 0.0
        %834 = vmatprep.subr.mxu0 0.0
        %835 = vmatpush1.msra.mxu0 0.0
        %836 = vmatprep.mubr.f32.mxu0 0.0
        %837 = vmatmul.mubr.f32.gmra.mrb[0].mxu0 %v761
        %v838 = vpop.f32.mrb[0].mxu0
        %v839 = vadd.f32 0.0, %v838
        %v840 = vpop.f32.mrb[0].mxu0
        %v841 = vadd.f32 0.0, %v840
        %842 = vmatprep.mubr.f32.mxu0 0.0
        %843 = vmatmul.mubr.f32.gmra.mrb[0].mxu0 %v764
        %v844 = vpop.f32.mrb[0].mxu0
        %v845 = vadd.f32 0.0, %v844
        %v846 = vpop.f32.mrb[0].mxu0
        %v847 = vadd.f32 0.0, %v846
        %848 = vmatprep.mubr.f32.mxu0 0.0
        %849 = vmatmul.mubr.f32.gmra.mrb[0].mxu0 %v767
        %v850 = vpop.f32.mrb[0].mxu0
        %v851 = vadd.f32 0.0, %v850
        %v852 = vpop.f32.mrb[0].mxu0
        %v853 = vadd.f32 0.0, %v852
        %854 = vmatprep.mubr.f32.mxu0 0.0
        %855 = vmatmul.mubr.f32.gmra.mrb[0].mxu0 %v770
        %v856 = vpop.f32.mrb[0].mxu0
        %v857 = vadd.f32 0.0, %v856
        %v858 = vpop.f32.mrb[0].mxu0
        %v859 = vadd.f32 0.0, %v858
        %860 = vdwg.mxu0
        %v861 = vadd.f32 %v739, %v839
        %v862 = vadd.f32 %v740, %v841
        %v863 = vadd.f32 %v741, %v845
        %v864 = vadd.f32 %v742, %v847
        %v865 = vadd.f32 %v743, %v851
        %v866 = vadd.f32 %v744, %v853
        %v867 = vadd.f32 %v745, %v857
        %v868 = vadd.f32 %v746, %v859
        %v869 = vld [vmem:[%s396 + $0x4] sm:$0xff]
        %v870 = vld [vmem:[%s396 + $0xc] sm:$0xff]
        %v871 = vld [vmem:[%s396 + $0x14] sm:$0xff]
        %v872 = vld [vmem:[%s396 + $0x1c] sm:$0xf]
        %s873 = scalar_lea.vmem [#allocation3], 256
        %v874 = vld [vmem:[%s873] sm:$0xff]
        %v875 = vld [vmem:[%s873 + $0x8] sm:$0xff]
        %v876 = vld [vmem:[%s873 + $0x10] sm:$0xff]
        %v877 = vld [vmem:[%s873 + $0x18] sm:$0xff]
        %v878 = vld [vmem:[%s873 + $0x20] sm:$0xff]
        %v879 = vld [vmem:[%s873 + $0x28] sm:$0xff]
        %v880 = vld [vmem:[%s873 + $0x30] sm:$0xff]
        %v881 = vld [vmem:[%s873 + $0x38] sm:$0xff]
        %v883 = vsel %vm422, %v869, 0
        %v886 = vsel %vm422, %v870, 0
        %v889 = vsel %vm422, %v871, 0
        %v892 = vsel %vm422, %v872, 0
        %894 = vmatprep.subr.mxu0 %v875
        %895 = vmatpush1.msra.mxu0 %v874
        %896 = vmatprep.subr.mxu0 %v877
        %897 = vmatpush1.msra.mxu0 %v876
        %898 = vmatprep.subr.mxu0 %v879
        %899 = vmatpush1.msra.mxu0 %v878
        %900 = vmatprep.subr.mxu0 %v881
        %901 = vmatpush1.msra.mxu0 %v880
        %902 = vmatprep.subr.mxu0 0.0
        %903 = vmatpush1.msra.mxu0 0.0
        %904 = vmatprep.subr.mxu0 0.0
        %905 = vmatpush1.msra.mxu0 0.0
        %906 = vmatprep.subr.mxu0 0.0
        %907 = vmatpush1.msra.mxu0 0.0
        %908 = vmatprep.subr.mxu0 0.0
        %909 = vmatpush1.msra.mxu0 0.0
        %910 = vmatprep.subr.mxu0 0.0
        %911 = vmatpush1.msra.mxu0 0.0
        %912 = vmatprep.subr.mxu0 0.0
        %913 = vmatpush1.msra.mxu0 0.0
        %914 = vmatprep.subr.mxu0 0.0
        %915 = vmatpush1.msra.mxu0 0.0
        %916 = vmatprep.subr.mxu0 0.0
        %917 = vmatpush1.msra.mxu0 0.0
        %918 = vmatprep.subr.mxu0 0.0
        %919 = vmatpush1.msra.mxu0 0.0
        %920 = vmatprep.subr.mxu0 0.0
        %921 = vmatpush1.msra.mxu0 0.0
        %922 = vmatprep.subr.mxu0 0.0
        %923 = vmatpush1.msra.mxu0 0.0
        %924 = vmatprep.subr.mxu0 0.0
        %925 = vmatpush1.msra.mxu0 0.0
        %926 = vmatprep.subr.mxu0 0.0
        %927 = vmatpush1.msra.mxu0 0.0
        %928 = vmatprep.subr.mxu0 0.0
        %929 = vmatpush1.msra.mxu0 0.0
        %930 = vmatprep.subr.mxu0 0.0
        %931 = vmatpush1.msra.mxu0 0.0
        %932 = vmatprep.subr.mxu0 0.0
        %933 = vmatpush1.msra.mxu0 0.0
        %934 = vmatprep.subr.mxu0 0.0
        %935 = vmatpush1.msra.mxu0 0.0
        %936 = vmatprep.subr.mxu0 0.0
        %937 = vmatpush1.msra.mxu0 0.0
        %938 = vmatprep.subr.mxu0 0.0
        %939 = vmatpush1.msra.mxu0 0.0
        %940 = vmatprep.subr.mxu0 0.0
        %941 = vmatpush1.msra.mxu0 0.0
        %942 = vmatprep.subr.mxu0 0.0
        %943 = vmatpush1.msra.mxu0 0.0
        %944 = vmatprep.subr.mxu0 0.0
        %945 = vmatpush1.msra.mxu0 0.0
        %946 = vmatprep.subr.mxu0 0.0
        %947 = vmatpush1.msra.mxu0 0.0
        %948 = vmatprep.subr.mxu0 0.0
        %949 = vmatpush1.msra.mxu0 0.0
        %950 = vmatprep.subr.mxu0 0.0
        %951 = vmatpush1.msra.mxu0 0.0
        %952 = vmatprep.subr.mxu0 0.0
        %953 = vmatpush1.msra.mxu0 0.0
        %954 = vmatprep.subr.mxu0 0.0
        %955 = vmatpush1.msra.mxu0 0.0
        %956 = vmatprep.subr.mxu0 0.0
        %957 = vmatpush1.msra.mxu0 0.0
        %958 = vmatprep.mubr.f32.mxu0 0.0
        %959 = vmatmul.mubr.f32.gmra.mrb[0].mxu0 %v883
        %v960 = vpop.f32.mrb[0].mxu0
        %v961 = vadd.f32 0.0, %v960
        %v962 = vpop.f32.mrb[0].mxu0
        %v963 = vadd.f32 0.0, %v962
        %964 = vmatprep.mubr.f32.mxu0 0.0
        %965 = vmatmul.mubr.f32.gmra.mrb[0].mxu0 %v886
        %v966 = vpop.f32.mrb[0].mxu0
        %v967 = vadd.f32 0.0, %v966
        %v968 = vpop.f32.mrb[0].mxu0
        %v969 = vadd.f32 0.0, %v968
        %970 = vmatprep.mubr.f32.mxu0 0.0
        %971 = vmatmul.mubr.f32.gmra.mrb[0].mxu0 %v889
        %v972 = vpop.f32.mrb[0].mxu0
        %v973 = vadd.f32 0.0, %v972
        %v974 = vpop.f32.mrb[0].mxu0
        %v975 = vadd.f32 0.0, %v974
        %976 = vmatprep.mubr.f32.mxu0 0.0
        %977 = vmatmul.mubr.f32.gmra.mrb[0].mxu0 %v892
        %v978 = vpop.f32.mrb[0].mxu0
        %v979 = vadd.f32 0.0, %v978
        %v980 = vpop.f32.mrb[0].mxu0
        %v981 = vadd.f32 0.0, %v980
        %982 = vdwg.mxu0
        %v983 = vadd.f32 %v861, %v961
        %v984 = vadd.f32 %v862, %v963
        %v985 = vadd.f32 %v863, %v967
        %v986 = vadd.f32 %v864, %v969
        %v987 = vadd.f32 %v865, %v973
        %v988 = vadd.f32 %v866, %v975
        %v989 = vadd.f32 %v867, %v979
        %v990 = vadd.f32 %v868, %v981
        %s991 = scalar_lea.vmem [#allocation3], 320
        %v992 = vld [vmem:[%s991] sm:$0xff]
        %v993 = vld [vmem:[%s991 + $0x8] sm:$0xff]
        %v994 = vld [vmem:[%s991 + $0x10] sm:$0xff]
        %v995 = vld [vmem:[%s991 + $0x18] sm:$0xff]
        %v996 = vld [vmem:[%s991 + $0x20] sm:$0xff]
        %v997 = vld [vmem:[%s991 + $0x28] sm:$0xff]
        %v998 = vld [vmem:[%s991 + $0x30] sm:$0xff]
        %v999 = vld [vmem:[%s991 + $0x38] sm:$0xff]
        %s1000 = scalar_lea.vmem [#allocation3], 384
        %v1001 = vld [vmem:[%s1000] sm:$0xff]
        %v1002 = vld [vmem:[%s1000 + $0x8] sm:$0xff]
        %v1003 = vld [vmem:[%s1000 + $0x10] sm:$0xff]
        %v1004 = vld [vmem:[%s1000 + $0x18] sm:$0xff]
        %v1005 = vld [vmem:[%s1000 + $0x20] sm:$0xff]
        %v1006 = vld [vmem:[%s1000 + $0x28] sm:$0xff]
        %v1007 = vld [vmem:[%s1000 + $0x30] sm:$0xff]
        %v1008 = vld [vmem:[%s1000 + $0x38] sm:$0xff]
        %1009 = vmatprep.subr.mxu0 %v1002
        %1010 = vmatpush1.msra.mxu0 %v1001
        %1011 = vmatprep.subr.mxu0 %v1004
        %1012 = vmatpush1.msra.mxu0 %v1003
        %1013 = vmatprep.subr.mxu0 %v1006
        %1014 = vmatpush1.msra.mxu0 %v1005
        %1015 = vmatprep.subr.mxu0 %v1008
        %1016 = vmatpush1.msra.mxu0 %v1007
        %1017 = vmatprep.subr.mxu0 0.0
        %1018 = vmatpush1.msra.mxu0 0.0
        %1019 = vmatprep.subr.mxu0 0.0
        %1020 = vmatpush1.msra.mxu0 0.0
        %1021 = vmatprep.subr.mxu0 0.0
        %1022 = vmatpush1.msra.mxu0 0.0
        %1023 = vmatprep.subr.mxu0 0.0
        %1024 = vmatpush1.msra.mxu0 0.0
        %1025 = vmatprep.subr.mxu0 0.0
        %1026 = vmatpush1.msra.mxu0 0.0
        %1027 = vmatprep.subr.mxu0 0.0
        %1028 = vmatpush1.msra.mxu0 0.0
        %1029 = vmatprep.subr.mxu0 0.0
        %1030 = vmatpush1.msra.mxu0 0.0
        %1031 = vmatprep.subr.mxu0 0.0
        %1032 = vmatpush1.msra.mxu0 0.0
        %1033 = vmatprep.subr.mxu0 0.0
        %1034 = vmatpush1.msra.mxu0 0.0
        %1035 = vmatprep.subr.mxu0 0.0
        %1036 = vmatpush1.msra.mxu0 0.0
        %1037 = vmatprep.subr.mxu0 0.0
        %1038 = vmatpush1.msra.mxu0 0.0
        %1039 = vmatprep.subr.mxu0 0.0
        %1040 = vmatpush1.msra.mxu0 0.0
        %1041 = vmatprep.subr.mxu0 0.0
        %1042 = vmatpush1.msra.mxu0 0.0
        %1043 = vmatprep.subr.mxu0 0.0
        %1044 = vmatpush1.msra.mxu0 0.0
        %1045 = vmatprep.subr.mxu0 0.0
        %1046 = vmatpush1.msra.mxu0 0.0
        %1047 = vmatprep.subr.mxu0 0.0
        %1048 = vmatpush1.msra.mxu0 0.0
        %1049 = vmatprep.subr.mxu0 0.0
        %1050 = vmatpush1.msra.mxu0 0.0
        %1051 = vmatprep.subr.mxu0 0.0
        %1052 = vmatpush1.msra.mxu0 0.0
        %1053 = vmatprep.subr.mxu0 0.0
        %1054 = vmatpush1.msra.mxu0 0.0
        %1055 = vmatprep.subr.mxu0 0.0
        %1056 = vmatpush1.msra.mxu0 0.0
        %1057 = vmatprep.subr.mxu0 0.0
        %1058 = vmatpush1.msra.mxu0 0.0
        %1059 = vmatprep.subr.mxu0 0.0
        %1060 = vmatpush1.msra.mxu0 0.0
        %1061 = vmatprep.subr.mxu0 0.0
        %1062 = vmatpush1.msra.mxu0 0.0
        %1063 = vmatprep.subr.mxu0 0.0
        %1064 = vmatpush1.msra.mxu0 0.0
        %1065 = vmatprep.subr.mxu0 0.0
        %1066 = vmatpush1.msra.mxu0 0.0
        %1067 = vmatprep.subr.mxu0 0.0
        %1068 = vmatpush1.msra.mxu0 0.0
        %1069 = vmatprep.subr.mxu0 0.0
        %1070 = vmatpush1.msra.mxu0 0.0
        %1071 = vmatprep.subr.mxu0 0.0
        %1072 = vmatpush1.msra.mxu0 0.0
        %1073 = vmatprep.mubr.f32.mxu0 0.0
        %1074 = vmatmul.mubr.f32.gmra.mrb[0].mxu0 %v424
        %v1075 = vpop.f32.mrb[0].mxu0
        %v1076 = vadd.f32 0.0, %v1075
        %v1077 = vpop.f32.mrb[0].mxu0
        %v1078 = vadd.f32 0.0, %v1077
        %1079 = vmatprep.mubr.f32.mxu0 0.0
        %1080 = vmatmul.mubr.f32.gmra.mrb[0].mxu0 %v427
        %v1081 = vpop.f32.mrb[0].mxu0
        %v1082 = vadd.f32 0.0, %v1081
        %v1083 = vpop.f32.mrb[0].mxu0
        %v1084 = vadd.f32 0.0, %v1083
        %1085 = vmatprep.mubr.f32.mxu0 0.0
        %1086 = vmatmul.mubr.f32.gmra.mrb[0].mxu0 %v430
        %v1087 = vpop.f32.mrb[0].mxu0
        %v1088 = vadd.f32 0.0, %v1087
        %v1089 = vpop.f32.mrb[0].mxu0
        %v1090 = vadd.f32 0.0, %v1089
        %1091 = vmatprep.mubr.f32.mxu0 0.0
        %1092 = vmatmul.mubr.f32.gmra.mrb[0].mxu0 %v433
        %v1093 = vpop.f32.mrb[0].mxu0
        %v1094 = vadd.f32 0.0, %v1093
        %v1095 = vpop.f32.mrb[0].mxu0
        %v1096 = vadd.f32 0.0, %v1095
        %1097 = vdwg.mxu0
        %1098 = vmatprep.subr.mxu0 %v993
        %1099 = vmatpush1.msra.mxu0 %v992
        %1100 = vmatprep.subr.mxu0 %v995
        %1101 = vmatpush1.msra.mxu0 %v994
        %1102 = vmatprep.subr.mxu0 %v997
        %1103 = vmatpush1.msra.mxu0 %v996
        %1104 = vmatprep.subr.mxu0 %v999
        %1105 = vmatpush1.msra.mxu0 %v998
        %1106 = vmatprep.subr.mxu0 0.0
        %1107 = vmatpush1.msra.mxu0 0.0
        %1108 = vmatprep.subr.mxu0 0.0
        %1109 = vmatpush1.msra.mxu0 0.0
        %1110 = vmatprep.subr.mxu0 0.0
        %1111 = vmatpush1.msra.mxu0 0.0
        %1112 = vmatprep.subr.mxu0 0.0
        %1113 = vmatpush1.msra.mxu0 0.0
        %1114 = vmatprep.subr.mxu0 0.0
        %1115 = vmatpush1.msra.mxu0 0.0
        %1116 = vmatprep.subr.mxu0 0.0
        %1117 = vmatpush1.msra.mxu0 0.0
        %1118 = vmatprep.subr.mxu0 0.0
        %1119 = vmatpush1.msra.mxu0 0.0
        %1120 = vmatprep.subr.mxu0 0.0
        %1121 = vmatpush1.msra.mxu0 0.0
        %1122 = vmatprep.subr.mxu0 0.0
        %1123 = vmatpush1.msra.mxu0 0.0
        %1124 = vmatprep.subr.mxu0 0.0
        %1125 = vmatpush1.msra.mxu0 0.0
        %1126 = vmatprep.subr.mxu0 0.0
        %1127 = vmatpush1.msra.mxu0 0.0
        %1128 = vmatprep.subr.mxu0 0.0
        %1129 = vmatpush1.msra.mxu0 0.0
        %1130 = vmatprep.subr.mxu0 0.0
        %1131 = vmatpush1.msra.mxu0 0.0
        %1132 = vmatprep.subr.mxu0 0.0
        %1133 = vmatpush1.msra.mxu0 0.0
        %1134 = vmatprep.subr.mxu0 0.0
        %1135 = vmatpush1.msra.mxu0 0.0
        %1136 = vmatprep.subr.mxu0 0.0
        %1137 = vmatpush1.msra.mxu0 0.0
        %1138 = vmatprep.subr.mxu0 0.0
        %1139 = vmatpush1.msra.mxu0 0.0
        %1140 = vmatprep.subr.mxu0 0.0
        %1141 = vmatpush1.msra.mxu0 0.0
        %1142 = vmatprep.subr.mxu0 0.0
        %1143 = vmatpush1.msra.mxu0 0.0
        %1144 = vmatprep.subr.mxu0 0.0
        %1145 = vmatpush1.msra.mxu0 0.0
        %1146 = vmatprep.subr.mxu0 0.0
        %1147 = vmatpush1.msra.mxu0 0.0
        %1148 = vmatprep.subr.mxu0 0.0
        %1149 = vmatpush1.msra.mxu0 0.0
        %1150 = vmatprep.subr.mxu0 0.0
        %1151 = vmatpush1.msra.mxu0 0.0
        %1152 = vmatprep.subr.mxu0 0.0
        %1153 = vmatpush1.msra.mxu0 0.0
        %1154 = vmatprep.subr.mxu0 0.0
        %1155 = vmatpush1.msra.mxu0 0.0
        %1156 = vmatprep.subr.mxu0 0.0
        %1157 = vmatpush1.msra.mxu0 0.0
        %1158 = vmatprep.subr.mxu0 0.0
        %1159 = vmatpush1.msra.mxu0 0.0
        %1160 = vmatprep.subr.mxu0 0.0
        %1161 = vmatpush1.msra.mxu0 0.0
        %1162 = vmatprep.mubr.f32.mxu0 0.0
        %1163 = vmatmul.mubr.f32.gmra.mrb[0].mxu0 %v525
        %v1164 = vpop.f32.mrb[0].mxu0
        %v1165 = vadd.f32 %v1076, %v1164
        %v1166 = vpop.f32.mrb[0].mxu0
        %v1167 = vadd.f32 %v1078, %v1166
        %1168 = vmatprep.mubr.f32.mxu0 0.0
        %1169 = vmatmul.mubr.f32.gmra.mrb[0].mxu0 %v528
        %v1170 = vpop.f32.mrb[0].mxu0
        %v1171 = vadd.f32 %v1082, %v1170
        %v1172 = vpop.f32.mrb[0].mxu0
        %v1173 = vadd.f32 %v1084, %v1172
        %1174 = vmatprep.mubr.f32.mxu0 0.0
        %1175 = vmatmul.mubr.f32.gmra.mrb[0].mxu0 %v531
        %v1176 = vpop.f32.mrb[0].mxu0
        %v1177 = vadd.f32 %v1088, %v1176
        %v1178 = vpop.f32.mrb[0].mxu0
        %v1179 = vadd.f32 %v1090, %v1178
        %1180 = vmatprep.mubr.f32.mxu0 0.0
        %1181 = vmatmul.mubr.f32.gmra.mrb[0].mxu0 %v534
        %v1182 = vpop.f32.mrb[0].mxu0
        %v1183 = vadd.f32 %v1094, %v1182
        %v1184 = vpop.f32.mrb[0].mxu0
        %v1185 = vadd.f32 %v1096, %v1184
        %1186 = vdwg.mxu0
        %s1187 = scalar_lea.vmem [#allocation3], 448
        %v1188 = vld [vmem:[%s1187] sm:$0xff]
        %v1189 = vld [vmem:[%s1187 + $0x8] sm:$0xff]
        %v1190 = vld [vmem:[%s1187 + $0x10] sm:$0xff]
        %v1191 = vld [vmem:[%s1187 + $0x18] sm:$0xff]
        %v1192 = vld [vmem:[%s1187 + $0x20] sm:$0xff]
        %v1193 = vld [vmem:[%s1187 + $0x28] sm:$0xff]
        %v1194 = vld [vmem:[%s1187 + $0x30] sm:$0xff]
        %v1195 = vld [vmem:[%s1187 + $0x38] sm:$0xff]
        %1196 = vmatprep.subr.mxu0 %v1189
        %1197 = vmatpush1.msra.mxu0 %v1188
        %1198 = vmatprep.subr.mxu0 %v1191
        %1199 = vmatpush1.msra.mxu0 %v1190
        %1200 = vmatprep.subr.mxu0 %v1193
        %1201 = vmatpush1.msra.mxu0 %v1192
        %1202 = vmatprep.subr.mxu0 %v1195
        %1203 = vmatpush1.msra.mxu0 %v1194
        %1204 = vmatprep.subr.mxu0 0.0
        %1205 = vmatpush1.msra.mxu0 0.0
        %1206 = vmatprep.subr.mxu0 0.0
        %1207 = vmatpush1.msra.mxu0 0.0
        %1208 = vmatprep.subr.mxu0 0.0
        %1209 = vmatpush1.msra.mxu0 0.0
        %1210 = vmatprep.subr.mxu0 0.0
        %1211 = vmatpush1.msra.mxu0 0.0
        %1212 = vmatprep.subr.mxu0 0.0
        %1213 = vmatpush1.msra.mxu0 0.0
        %1214 = vmatprep.subr.mxu0 0.0
        %1215 = vmatpush1.msra.mxu0 0.0
        %1216 = vmatprep.subr.mxu0 0.0
        %1217 = vmatpush1.msra.mxu0 0.0
        %1218 = vmatprep.subr.mxu0 0.0
        %1219 = vmatpush1.msra.mxu0 0.0
        %1220 = vmatprep.subr.mxu0 0.0
        %1221 = vmatpush1.msra.mxu0 0.0
        %1222 = vmatprep.subr.mxu0 0.0
        %1223 = vmatpush1.msra.mxu0 0.0
        %1224 = vmatprep.subr.mxu0 0.0
        %1225 = vmatpush1.msra.mxu0 0.0
        %1226 = vmatprep.subr.mxu0 0.0
        %1227 = vmatpush1.msra.mxu0 0.0
        %1228 = vmatprep.subr.mxu0 0.0
        %1229 = vmatpush1.msra.mxu0 0.0
        %1230 = vmatprep.subr.mxu0 0.0
        %1231 = vmatpush1.msra.mxu0 0.0
        %1232 = vmatprep.subr.mxu0 0.0
        %1233 = vmatpush1.msra.mxu0 0.0
        %1234 = vmatprep.subr.mxu0 0.0
        %1235 = vmatpush1.msra.mxu0 0.0
        %1236 = vmatprep.subr.mxu0 0.0
        %1237 = vmatpush1.msra.mxu0 0.0
        %1238 = vmatprep.subr.mxu0 0.0
        %1239 = vmatpush1.msra.mxu0 0.0
        %1240 = vmatprep.subr.mxu0 0.0
        %1241 = vmatpush1.msra.mxu0 0.0
        %1242 = vmatprep.subr.mxu0 0.0
        %1243 = vmatpush1.msra.mxu0 0.0
        %1244 = vmatprep.subr.mxu0 0.0
        %1245 = vmatpush1.msra.mxu0 0.0
        %1246 = vmatprep.subr.mxu0 0.0
        %1247 = vmatpush1.msra.mxu0 0.0
        %1248 = vmatprep.subr.mxu0 0.0
        %1249 = vmatpush1.msra.mxu0 0.0
        %1250 = vmatprep.subr.mxu0 0.0
        %1251 = vmatpush1.msra.mxu0 0.0
        %1252 = vmatprep.subr.mxu0 0.0
        %1253 = vmatpush1.msra.mxu0 0.0
        %1254 = vmatprep.subr.mxu0 0.0
        %1255 = vmatpush1.msra.mxu0 0.0
        %1256 = vmatprep.subr.mxu0 0.0
        %1257 = vmatpush1.msra.mxu0 0.0
        %1258 = vmatprep.subr.mxu0 0.0
        %1259 = vmatpush1.msra.mxu0 0.0
        %1260 = vmatprep.mubr.f32.mxu0 0.0
        %1261 = vmatmul.mubr.f32.gmra.mrb[0].mxu0 %v639
        %v1262 = vpop.f32.mrb[0].mxu0
        %v1263 = vadd.f32 0.0, %v1262
        %v1264 = vpop.f32.mrb[0].mxu0
        %v1265 = vadd.f32 0.0, %v1264
        %1266 = vmatprep.mubr.f32.mxu0 0.0
        %1267 = vmatmul.mubr.f32.gmra.mrb[0].mxu0 %v642
        %v1268 = vpop.f32.mrb[0].mxu0
        %v1269 = vadd.f32 0.0, %v1268
        %v1270 = vpop.f32.mrb[0].mxu0
        %v1271 = vadd.f32 0.0, %v1270
        %1272 = vmatprep.mubr.f32.mxu0 0.0
        %1273 = vmatmul.mubr.f32.gmra.mrb[0].mxu0 %v645
        %v1274 = vpop.f32.mrb[0].mxu0
        %v1275 = vadd.f32 0.0, %v1274
        %v1276 = vpop.f32.mrb[0].mxu0
        %v1277 = vadd.f32 0.0, %v1276
        %1278 = vmatprep.mubr.f32.mxu0 0.0
        %1279 = vmatmul.mubr.f32.gmra.mrb[0].mxu0 %v648
        %v1280 = vpop.f32.mrb[0].mxu0
        %v1281 = vadd.f32 0.0, %v1280
        %v1282 = vpop.f32.mrb[0].mxu0
        %v1283 = vadd.f32 0.0, %v1282
        %1284 = vdwg.mxu0
        %v1285 = vadd.f32 %v1165, %v1263
        %v1286 = vadd.f32 %v1167, %v1265
        %v1287 = vadd.f32 %v1171, %v1269
        %v1288 = vadd.f32 %v1173, %v1271
        %v1289 = vadd.f32 %v1177, %v1275
        %v1290 = vadd.f32 %v1179, %v1277
        %v1291 = vadd.f32 %v1183, %v1281
        %v1292 = vadd.f32 %v1185, %v1283
        %s1293 = scalar_lea.vmem [#allocation3], 512
        %v1294 = vld [vmem:[%s1293] sm:$0xff]
        %v1295 = vld [vmem:[%s1293 + $0x8] sm:$0xff]
        %v1296 = vld [vmem:[%s1293 + $0x10] sm:$0xff]
        %v1297 = vld [vmem:[%s1293 + $0x18] sm:$0xff]
        %v1298 = vld [vmem:[%s1293 + $0x20] sm:$0xff]
        %v1299 = vld [vmem:[%s1293 + $0x28] sm:$0xff]
        %v1300 = vld [vmem:[%s1293 + $0x30] sm:$0xff]
        %v1301 = vld [vmem:[%s1293 + $0x38] sm:$0xff]
        %1302 = vmatprep.subr.mxu0 %v1295
        %1303 = vmatpush1.msra.mxu0 %v1294
        %1304 = vmatprep.subr.mxu0 %v1297
        %1305 = vmatpush1.msra.mxu0 %v1296
        %1306 = vmatprep.subr.mxu0 %v1299
        %1307 = vmatpush1.msra.mxu0 %v1298
        %1308 = vmatprep.subr.mxu0 %v1301
        %1309 = vmatpush1.msra.mxu0 %v1300
        %1310 = vmatprep.subr.mxu0 0.0
        %1311 = vmatpush1.msra.mxu0 0.0
        %1312 = vmatprep.subr.mxu0 0.0
        %1313 = vmatpush1.msra.mxu0 0.0
        %1314 = vmatprep.subr.mxu0 0.0
        %1315 = vmatpush1.msra.mxu0 0.0
        %1316 = vmatprep.subr.mxu0 0.0
        %1317 = vmatpush1.msra.mxu0 0.0
        %1318 = vmatprep.subr.mxu0 0.0
        %1319 = vmatpush1.msra.mxu0 0.0
        %1320 = vmatprep.subr.mxu0 0.0
        %1321 = vmatpush1.msra.mxu0 0.0
        %1322 = vmatprep.subr.mxu0 0.0
        %1323 = vmatpush1.msra.mxu0 0.0
        %1324 = vmatprep.subr.mxu0 0.0
        %1325 = vmatpush1.msra.mxu0 0.0
        %1326 = vmatprep.subr.mxu0 0.0
        %1327 = vmatpush1.msra.mxu0 0.0
        %1328 = vmatprep.subr.mxu0 0.0
        %1329 = vmatpush1.msra.mxu0 0.0
        %1330 = vmatprep.subr.mxu0 0.0
        %1331 = vmatpush1.msra.mxu0 0.0
        %1332 = vmatprep.subr.mxu0 0.0
        %1333 = vmatpush1.msra.mxu0 0.0
        %1334 = vmatprep.subr.mxu0 0.0
        %1335 = vmatpush1.msra.mxu0 0.0
        %1336 = vmatprep.subr.mxu0 0.0
        %1337 = vmatpush1.msra.mxu0 0.0
        %1338 = vmatprep.subr.mxu0 0.0
        %1339 = vmatpush1.msra.mxu0 0.0
        %1340 = vmatprep.subr.mxu0 0.0
        %1341 = vmatpush1.msra.mxu0 0.0
        %1342 = vmatprep.subr.mxu0 0.0
        %1343 = vmatpush1.msra.mxu0 0.0
        %1344 = vmatprep.subr.mxu0 0.0
        %1345 = vmatpush1.msra.mxu0 0.0
        %1346 = vmatprep.subr.mxu0 0.0
        %1347 = vmatpush1.msra.mxu0 0.0
        %1348 = vmatprep.subr.mxu0 0.0
        %1349 = vmatpush1.msra.mxu0 0.0
        %1350 = vmatprep.subr.mxu0 0.0
        %1351 = vmatpush1.msra.mxu0 0.0
        %1352 = vmatprep.subr.mxu0 0.0
        %1353 = vmatpush1.msra.mxu0 0.0
        %1354 = vmatprep.subr.mxu0 0.0
        %1355 = vmatpush1.msra.mxu0 0.0
        %1356 = vmatprep.subr.mxu0 0.0
        %1357 = vmatpush1.msra.mxu0 0.0
        %1358 = vmatprep.subr.mxu0 0.0
        %1359 = vmatpush1.msra.mxu0 0.0
        %1360 = vmatprep.subr.mxu0 0.0
        %1361 = vmatpush1.msra.mxu0 0.0
        %1362 = vmatprep.subr.mxu0 0.0
        %1363 = vmatpush1.msra.mxu0 0.0
        %1364 = vmatprep.subr.mxu0 0.0
        %1365 = vmatpush1.msra.mxu0 0.0
        %1366 = vmatprep.mubr.f32.mxu0 0.0
        %1367 = vmatmul.mubr.f32.gmra.mrb[0].mxu0 %v761
        %v1368 = vpop.f32.mrb[0].mxu0
        %v1369 = vadd.f32 0.0, %v1368
        %v1370 = vpop.f32.mrb[0].mxu0
        %v1371 = vadd.f32 0.0, %v1370
        %1372 = vmatprep.mubr.f32.mxu0 0.0
        %1373 = vmatmul.mubr.f32.gmra.mrb[0].mxu0 %v764
        %v1374 = vpop.f32.mrb[0].mxu0
        %v1375 = vadd.f32 0.0, %v1374
        %v1376 = vpop.f32.mrb[0].mxu0
        %v1377 = vadd.f32 0.0, %v1376
        %1378 = vmatprep.mubr.f32.mxu0 0.0
        %1379 = vmatmul.mubr.f32.gmra.mrb[0].mxu0 %v767
        %v1380 = vpop.f32.mrb[0].mxu0
        %v1381 = vadd.f32 0.0, %v1380
        %v1382 = vpop.f32.mrb[0].mxu0
        %v1383 = vadd.f32 0.0, %v1382
        %1384 = vmatprep.mubr.f32.mxu0 0.0
        %1385 = vmatmul.mubr.f32.gmra.mrb[0].mxu0 %v770
        %v1386 = vpop.f32.mrb[0].mxu0
        %v1387 = vadd.f32 0.0, %v1386
        %v1388 = vpop.f32.mrb[0].mxu0
        %v1389 = vadd.f32 0.0, %v1388
        %1390 = vdwg.mxu0
        %v1391 = vadd.f32 %v1285, %v1369
        %v1392 = vadd.f32 %v1286, %v1371
        %v1393 = vadd.f32 %v1287, %v1375
        %v1394 = vadd.f32 %v1288, %v1377
        %v1395 = vadd.f32 %v1289, %v1381
        %v1396 = vadd.f32 %v1290, %v1383
        %v1397 = vadd.f32 %v1291, %v1387
        %v1398 = vadd.f32 %v1292, %v1389
        %s1399 = scalar_lea.vmem [#allocation3], 576
        %v1400 = vld [vmem:[%s1399] sm:$0xff]
        %v1401 = vld [vmem:[%s1399 + $0x8] sm:$0xff]
        %v1402 = vld [vmem:[%s1399 + $0x10] sm:$0xff]
        %v1403 = vld [vmem:[%s1399 + $0x18] sm:$0xff]
        %v1404 = vld [vmem:[%s1399 + $0x20] sm:$0xff]
        %v1405 = vld [vmem:[%s1399 + $0x28] sm:$0xff]
        %v1406 = vld [vmem:[%s1399 + $0x30] sm:$0xff]
        %v1407 = vld [vmem:[%s1399 + $0x38] sm:$0xff]
        %1408 = vmatprep.subr.mxu0 %v1401
        %1409 = vmatpush1.msra.mxu0 %v1400
        %1410 = vmatprep.subr.mxu0 %v1403
        %1411 = vmatpush1.msra.mxu0 %v1402
        %1412 = vmatprep.subr.mxu0 %v1405
        %1413 = vmatpush1.msra.mxu0 %v1404
        %1414 = vmatprep.subr.mxu0 %v1407
        %1415 = vmatpush1.msra.mxu0 %v1406
        %1416 = vmatprep.subr.mxu0 0.0
        %1417 = vmatpush1.msra.mxu0 0.0
        %1418 = vmatprep.subr.mxu0 0.0
        %1419 = vmatpush1.msra.mxu0 0.0
        %1420 = vmatprep.subr.mxu0 0.0
        %1421 = vmatpush1.msra.mxu0 0.0
        %1422 = vmatprep.subr.mxu0 0.0
        %1423 = vmatpush1.msra.mxu0 0.0
        %1424 = vmatprep.subr.mxu0 0.0
        %1425 = vmatpush1.msra.mxu0 0.0
        %1426 = vmatprep.subr.mxu0 0.0
        %1427 = vmatpush1.msra.mxu0 0.0
        %1428 = vmatprep.subr.mxu0 0.0
        %1429 = vmatpush1.msra.mxu0 0.0
        %1430 = vmatprep.subr.mxu0 0.0
        %1431 = vmatpush1.msra.mxu0 0.0
        %1432 = vmatprep.subr.mxu0 0.0
        %1433 = vmatpush1.msra.mxu0 0.0
        %1434 = vmatprep.subr.mxu0 0.0
        %1435 = vmatpush1.msra.mxu0 0.0
        %1436 = vmatprep.subr.mxu0 0.0
        %1437 = vmatpush1.msra.mxu0 0.0
        %1438 = vmatprep.subr.mxu0 0.0
        %1439 = vmatpush1.msra.mxu0 0.0
        %1440 = vmatprep.subr.mxu0 0.0
        %1441 = vmatpush1.msra.mxu0 0.0
        %1442 = vmatprep.subr.mxu0 0.0
        %1443 = vmatpush1.msra.mxu0 0.0
        %1444 = vmatprep.subr.mxu0 0.0
        %1445 = vmatpush1.msra.mxu0 0.0
        %1446 = vmatprep.subr.mxu0 0.0
        %1447 = vmatpush1.msra.mxu0 0.0
        %1448 = vmatprep.subr.mxu0 0.0
        %1449 = vmatpush1.msra.mxu0 0.0
        %1450 = vmatprep.subr.mxu0 0.0
        %1451 = vmatpush1.msra.mxu0 0.0
        %1452 = vmatprep.subr.mxu0 0.0
        %1453 = vmatpush1.msra.mxu0 0.0
        %1454 = vmatprep.subr.mxu0 0.0
        %1455 = vmatpush1.msra.mxu0 0.0
        %1456 = vmatprep.subr.mxu0 0.0
        %1457 = vmatpush1.msra.mxu0 0.0
        %1458 = vmatprep.subr.mxu0 0.0
        %1459 = vmatpush1.msra.mxu0 0.0
        %1460 = vmatprep.subr.mxu0 0.0
        %1461 = vmatpush1.msra.mxu0 0.0
        %1462 = vmatprep.subr.mxu0 0.0
        %1463 = vmatpush1.msra.mxu0 0.0
        %1464 = vmatprep.subr.mxu0 0.0
        %1465 = vmatpush1.msra.mxu0 0.0
        %1466 = vmatprep.subr.mxu0 0.0
        %1467 = vmatpush1.msra.mxu0 0.0
        %1468 = vmatprep.subr.mxu0 0.0
        %1469 = vmatpush1.msra.mxu0 0.0
        %1470 = vmatprep.subr.mxu0 0.0
        %1471 = vmatpush1.msra.mxu0 0.0
        %1472 = vmatprep.mubr.f32.mxu0 0.0
        %1473 = vmatmul.mubr.f32.gmra.mrb[0].mxu0 %v883
        %v1474 = vpop.f32.mrb[0].mxu0
        %v1475 = vadd.f32 0.0, %v1474
        %v1476 = vpop.f32.mrb[0].mxu0
        %v1477 = vadd.f32 0.0, %v1476
        %1478 = vmatprep.mubr.f32.mxu0 0.0
        %1479 = vmatmul.mubr.f32.gmra.mrb[0].mxu0 %v886
        %v1480 = vpop.f32.mrb[0].mxu0
        %v1481 = vadd.f32 0.0, %v1480
        %v1482 = vpop.f32.mrb[0].mxu0
        %v1483 = vadd.f32 0.0, %v1482
        %1484 = vmatprep.mubr.f32.mxu0 0.0
        %1485 = vmatmul.mubr.f32.gmra.mrb[0].mxu0 %v889
        %v1486 = vpop.f32.mrb[0].mxu0
        %v1487 = vadd.f32 0.0, %v1486
        %v1488 = vpop.f32.mrb[0].mxu0
        %v1489 = vadd.f32 0.0, %v1488
        %1490 = vmatprep.mubr.f32.mxu0 0.0
        %1491 = vmatmul.mubr.f32.gmra.mrb[0].mxu0 %v892
        %v1492 = vpop.f32.mrb[0].mxu0
        %v1493 = vadd.f32 0.0, %v1492
        %v1494 = vpop.f32.mrb[0].mxu0
        %v1495 = vadd.f32 0.0, %v1494
        %1496 = vdwg.mxu0
        %v1497 = vadd.f32 %v1391, %v1475
        %v1498 = vadd.f32 %v1392, %v1477
        %v1499 = vadd.f32 %v1393, %v1481
        %v1500 = vadd.f32 %v1394, %v1483
        %v1501 = vadd.f32 %v1395, %v1487
        %v1502 = vadd.f32 %v1396, %v1489
        %v1503 = vadd.f32 %v1397, %v1493
        %v1504 = vadd.f32 %v1398, %v1495
        %v1505 = vmax.f32 %v983, %v1497
        %v1506 = vmax.f32 %v984, %v1498
        %v1507 = vmax.f32 %v985, %v1499
        %v1508 = vmax.f32 %v986, %v1500
        %v1509 = vmax.f32 %v987, %v1501
        %v1510 = vmax.f32 %v988, %v1502
        %v1511 = vmax.f32 %v989, %v1503
        %v1512 = vmax.f32 %v990, %v1504
        %v1513 = vld [vmem:[#allocation6] sm:$0x3]
        %v1515 = vlaneseq
        %v1516 = vshrl.u32 %v1515, 7
        %v1517 = vsub.s32 0, %v1516
        %v1518 = vrot.slane %v1513, %v1517
        %v1519 = vlaneseq
        %v1520 = vshrl.u32 %v1519, 7
        %v1521 = vsub.s32 1, %v1520
        %v1522 = vrot.slane %v1513, %v1521
        %v1525 = vadd.f32 %v1505, %v1518
        %v1526 = vadd.f32 %v1506, %v1522
        %v1527 = vadd.f32 %v1507, %v1518
        %v1528 = vadd.f32 %v1508, %v1522
        %v1529 = vadd.f32 %v1509, %v1518
        %v1530 = vadd.f32 %v1510, %v1522
        %v1531 = vadd.f32 %v1511, %v1518
        %v1532 = vadd.f32 %v1512, %v1522
        %v1533 = vmax.f32 %v1525, 0.0
        %v1534 = vmax.f32 %v1526, 0.0
        %v1535 = vmax.f32 %v1527, 0.0
        %v1536 = vmax.f32 %v1528, 0.0
        %v1537 = vmax.f32 %v1529, 0.0
        %v1538 = vmax.f32 %v1530, 0.0
        %v1539 = vmax.f32 %v1531, 0.0
        %v1540 = vmax.f32 %v1532, 0.0
        %v1541 = vld [vmem:[%s3] sm:$0xff]
        %v1542 = vld [vmem:[%s3 + $0x8] sm:$0x3f]
        %vm1543 = vcmask 228352
        %v1545 = vsel %vm1543, %v1541, 0
        %v1548 = vsel %vm1543, %v1542, 0
        %vm1550 = vcmask 1043456
        %v1552 = vsel %vm1550, %v1539, 0
        %v1555 = vsel %vm1550, %v1540, 0
        %1557 = vmatprep.subr.mxu0 %v1534
        %1558 = vmatpush1.msra.mxu0 %v1533
        %1559 = vmatprep.subr.mxu0 %v1536
        %1560 = vmatpush1.msra.mxu0 %v1535
        %1561 = vmatprep.subr.mxu0 %v1538
        %1562 = vmatpush1.msra.mxu0 %v1537
        %1563 = vmatprep.subr.mxu0 %v1555
        %1564 = vmatpush1.msra.mxu0 %v1552
        %1565 = vmatprep.subr.mxu0 0.0
        %1566 = vmatpush1.msra.mxu0 0.0
        %1567 = vmatprep.subr.mxu0 0.0
        %1568 = vmatpush1.msra.mxu0 0.0
        %1569 = vmatprep.subr.mxu0 0.0
        %1570 = vmatpush1.msra.mxu0 0.0
        %1571 = vmatprep.subr.mxu0 0.0
        %1572 = vmatpush1.msra.mxu0 0.0
        %1573 = vmatprep.subr.mxu0 0.0
        %1574 = vmatpush1.msra.mxu0 0.0
        %1575 = vmatprep.subr.mxu0 0.0
        %1576 = vmatpush1.msra.mxu0 0.0
        %1577 = vmatprep.subr.mxu0 0.0
        %1578 = vmatpush1.msra.mxu0 0.0
        %1579 = vmatprep.subr.mxu0 0.0
        %1580 = vmatpush1.msra.mxu0 0.0
        %1581 = vmatprep.subr.mxu0 0.0
        %1582 = vmatpush1.msra.mxu0 0.0
        %1583 = vmatprep.subr.mxu0 0.0
        %1584 = vmatpush1.msra.mxu0 0.0
        %1585 = vmatprep.subr.mxu0 0.0
        %1586 = vmatpush1.msra.mxu0 0.0
        %1587 = vmatprep.subr.mxu0 0.0
        %1588 = vmatpush1.msra.mxu0 0.0
        %1589 = vmatprep.subr.mxu0 0.0
        %1590 = vmatpush1.msra.mxu0 0.0
        %1591 = vmatprep.subr.mxu0 0.0
        %1592 = vmatpush1.msra.mxu0 0.0
        %1593 = vmatprep.subr.mxu0 0.0
        %1594 = vmatpush1.msra.mxu0 0.0
        %1595 = vmatprep.subr.mxu0 0.0
        %1596 = vmatpush1.msra.mxu0 0.0
        %1597 = vmatprep.subr.mxu0 0.0
        %1598 = vmatpush1.msra.mxu0 0.0
        %1599 = vmatprep.subr.mxu0 0.0
        %1600 = vmatpush1.msra.mxu0 0.0
        %1601 = vmatprep.subr.mxu0 0.0
        %1602 = vmatpush1.msra.mxu0 0.0
        %1603 = vmatprep.subr.mxu0 0.0
        %1604 = vmatpush1.msra.mxu0 0.0
        %1605 = vmatprep.subr.mxu0 0.0
        %1606 = vmatpush1.msra.mxu0 0.0
        %1607 = vmatprep.subr.mxu0 0.0
        %1608 = vmatpush1.msra.mxu0 0.0
        %1609 = vmatprep.subr.mxu0 0.0
        %1610 = vmatpush1.msra.mxu0 0.0
        %1611 = vmatprep.subr.mxu0 0.0
        %1612 = vmatpush1.msra.mxu0 0.0
        %1613 = vmatprep.subr.mxu0 0.0
        %1614 = vmatpush1.msra.mxu0 0.0
        %1615 = vmatprep.subr.mxu0 0.0
        %1616 = vmatpush1.msra.mxu0 0.0
        %1617 = vmatprep.subr.mxu0 0.0
        %1618 = vmatpush1.msra.mxu0 0.0
        %1619 = vmatprep.subr.mxu0 0.0
        %1620 = vmatpush1.msra.mxu0 0.0
        %1621 = vmatprep.mubr.f32.mxu0 0.0
        %1622 = vmatmul.mubr.f32.gmra.mrb[0].mxu0 %v1545
        %v1623 = vpop.f32.mrb[0].mxu0
        %v1624 = vadd.f32 0.0, %v1623
        %v1625 = vpop.f32.mrb[0].mxu0
        %v1626 = vadd.f32 0.0, %v1625
        %1627 = vmatprep.mubr.f32.mxu0 0.0
        %1628 = vmatmul.mubr.f32.gmra.mrb[0].mxu0 %v1548
        %v1629 = vpop.f32.mrb[0].mxu0
        %v1630 = vadd.f32 0.0, %v1629
        %v1631 = vpop.f32.mrb[0].mxu0
        %v1632 = vadd.f32 0.0, %v1631
        %1633 = vdwg.mxu0
        %s1634 = scalar_lea.vmem %s3, 16
        %v1635 = vld [vmem:[%s1634] sm:$0xff]
        %v1636 = vld [vmem:[%s1634 + $0x8] sm:$0x3f]
        %v1638 = vsel %vm1543, %v1635, 0
        %v1641 = vsel %vm1543, %v1636, 0
        %1643 = vmatprep.subr.mxu0 %v1534
        %1644 = vmatpush1.msra.mxu0 %v1533
        %1645 = vmatprep.subr.mxu0 %v1536
        %1646 = vmatpush1.msra.mxu0 %v1535
        %1647 = vmatprep.subr.mxu0 %v1538
        %1648 = vmatpush1.msra.mxu0 %v1537
        %1649 = vmatprep.subr.mxu0 %v1555
        %1650 = vmatpush1.msra.mxu0 %v1552
        %1651 = vmatprep.subr.mxu0 0.0
        %1652 = vmatpush1.msra.mxu0 0.0
        %1653 = vmatprep.subr.mxu0 0.0
        %1654 = vmatpush1.msra.mxu0 0.0
        %1655 = vmatprep.subr.mxu0 0.0
        %1656 = vmatpush1.msra.mxu0 0.0
        %1657 = vmatprep.subr.mxu0 0.0
        %1658 = vmatpush1.msra.mxu0 0.0
        %1659 = vmatprep.subr.mxu0 0.0
        %1660 = vmatpush1.msra.mxu0 0.0
        %1661 = vmatprep.subr.mxu0 0.0
        %1662 = vmatpush1.msra.mxu0 0.0
        %1663 = vmatprep.subr.mxu0 0.0
        %1664 = vmatpush1.msra.mxu0 0.0
        %1665 = vmatprep.subr.mxu0 0.0
        %1666 = vmatpush1.msra.mxu0 0.0
        %1667 = vmatprep.subr.mxu0 0.0
        %1668 = vmatpush1.msra.mxu0 0.0
        %1669 = vmatprep.subr.mxu0 0.0
        %1670 = vmatpush1.msra.mxu0 0.0
        %1671 = vmatprep.subr.mxu0 0.0
        %1672 = vmatpush1.msra.mxu0 0.0
        %1673 = vmatprep.subr.mxu0 0.0
        %1674 = vmatpush1.msra.mxu0 0.0
        %1675 = vmatprep.subr.mxu0 0.0
        %1676 = vmatpush1.msra.mxu0 0.0
        %1677 = vmatprep.subr.mxu0 0.0
        %1678 = vmatpush1.msra.mxu0 0.0
        %1679 = vmatprep.subr.mxu0 0.0
        %1680 = vmatpush1.msra.mxu0 0.0
        %1681 = vmatprep.subr.mxu0 0.0
        %1682 = vmatpush1.msra.mxu0 0.0
        %1683 = vmatprep.subr.mxu0 0.0
        %1684 = vmatpush1.msra.mxu0 0.0
        %1685 = vmatprep.subr.mxu0 0.0
        %1686 = vmatpush1.msra.mxu0 0.0
        %1687 = vmatprep.subr.mxu0 0.0
        %1688 = vmatpush1.msra.mxu0 0.0
        %1689 = vmatprep.subr.mxu0 0.0
        %1690 = vmatpush1.msra.mxu0 0.0
        %1691 = vmatprep.subr.mxu0 0.0
        %1692 = vmatpush1.msra.mxu0 0.0
        %1693 = vmatprep.subr.mxu0 0.0
        %1694 = vmatpush1.msra.mxu0 0.0
        %1695 = vmatprep.subr.mxu0 0.0
        %1696 = vmatpush1.msra.mxu0 0.0
        %1697 = vmatprep.subr.mxu0 0.0
        %1698 = vmatpush1.msra.mxu0 0.0
        %1699 = vmatprep.subr.mxu0 0.0
        %1700 = vmatpush1.msra.mxu0 0.0
        %1701 = vmatprep.subr.mxu0 0.0
        %1702 = vmatpush1.msra.mxu0 0.0
        %1703 = vmatprep.subr.mxu0 0.0
        %1704 = vmatpush1.msra.mxu0 0.0
        %1705 = vmatprep.subr.mxu0 0.0
        %1706 = vmatpush1.msra.mxu0 0.0
        %1707 = vmatprep.mubr.f32.mxu0 0.0
        %1708 = vmatmul.mubr.f32.gmra.mrb[0].mxu0 %v1638
        %v1709 = vpop.f32.mrb[0].mxu0
        %v1710 = vadd.f32 0.0, %v1709
        %v1711 = vpop.f32.mrb[0].mxu0
        %v1712 = vadd.f32 0.0, %v1711
        %1713 = vmatprep.mubr.f32.mxu0 0.0
        %1714 = vmatmul.mubr.f32.gmra.mrb[0].mxu0 %v1641
        %v1715 = vpop.f32.mrb[0].mxu0
        %v1716 = vadd.f32 0.0, %v1715
        %v1717 = vpop.f32.mrb[0].mxu0
        %v1718 = vadd.f32 0.0, %v1717
        %1719 = vdwg.mxu0
        %v1720 = vmax.f32 %v1624, %v1710
        %v1721 = vmax.f32 %v1626, %v1712
        %v1722 = vmax.f32 %v1630, %v1716
        %v1723 = vmax.f32 %v1632, %v1718
        %1724 = vst [vmem:[#allocation2] sm:$0xff] 0.0
        %vm1725 = vcmask 785408
        %1726 = vst.msk [vmem:[#allocation2 + $0x8] sm:$0xff] %vm1725, 0.0
        %1727 = vst [vmem:[#allocation2 + $0x10] sm:$0xff] 0.0
        %1728 = vst.msk [vmem:[#allocation2 + $0x18] sm:$0xff] %vm1725, 0.0
        %1729 = vst [vmem:[#allocation2 + $0x20] sm:$0x3] 0.0
        %vm1730 = vcmask 779264
        %1731 = vst.msk [vmem:[#allocation2 + $0x28] sm:$0x3] %vm1730, 0.0
        %vm1736 = vcmask 1041408
        %v1737 = vrot.slane %v1720, 6
        %v1738 = vrot.slane %v1721, 6
        %v1739 = vrot.slane %v1722, 6
        %v1740 = vsel %vm1736, %v1737, %v1739
        %v1741 = vrot.slane %v1723, 6
        %v1742 = vsel %vm1736, %v1738, %v1741
        %1747 = vst [vmem:[#allocation2] sm:$0xfc] %v1737
        %vm1748 = vcmask 785410
        %1749 = vst.msk [vmem:[#allocation2 + $0x8] sm:$0xfc] %vm1748, %v1738
        %1750 = vst [vmem:[#allocation2 + $0x10] sm:$0xff] %v1740
        %1751 = vst.msk [vmem:[#allocation2 + $0x18] sm:$0xff] %vm1725, %v1742
        %v1752 = vld [vmem:[#allocation2] sm:$0xff]
        %v1753 = vld [vmem:[#allocation2 + $0x8] sm:$0xff]
        %v1754 = vld [vmem:[#allocation2 + $0x10] sm:$0x3f]
        %v1755 = vld [vmem:[#allocation2 + $0x18] sm:$0x3f]
        %v1756 = vld [vmem:[#allocation8] sm:$0xff]
        %v1757 = vld [vmem:[#allocation8 + $0x8] sm:$0xff]
        %v1758 = vld [vmem:[#allocation8 + $0x10] sm:$0xff]
        %v1759 = vld [vmem:[#allocation8 + $0x18] sm:$0xff]
        %v1760 = vld [vmem:[#allocation8 + $0x20] sm:$0xff]
        %v1761 = vld [vmem:[#allocation8 + $0x28] sm:$0xff]
        %v1762 = vld [vmem:[#allocation8 + $0x30] sm:$0xff]
        %v1763 = vld [vmem:[#allocation8 + $0x38] sm:$0xff]
        %v1764 = vld [vmem:[#allocation8 + $0x40] sm:$0xff]
        %v1765 = vld [vmem:[#allocation8 + $0x48] sm:$0xff]
        %v1766 = vld [vmem:[#allocation8 + $0x50] sm:$0xff]
        %v1767 = vld [vmem:[#allocation8 + $0x58] sm:$0xff]
        %v1768 = vld [vmem:[#allocation8 + $0x60] sm:$0xff]
        %v1769 = vld [vmem:[#allocation8 + $0x68] sm:$0xff]
        %v1770 = vld [vmem:[#allocation8 + $0x70] sm:$0xff]
        %v1771 = vld [vmem:[#allocation8 + $0x78] sm:$0xff]
        %v1772 = vld [vmem:[#allocation8 + $0x80] sm:$0xff]
        %v1773 = vld [vmem:[#allocation8 + $0x88] sm:$0xff]
        %v1774 = vld [vmem:[#allocation8 + $0x90] sm:$0xff]
        %v1775 = vld [vmem:[#allocation8 + $0x98] sm:$0xff]
        %v1776 = vld [vmem:[#allocation8 + $0xa0] sm:$0xff]
        %v1777 = vld [vmem:[#allocation8 + $0xa8] sm:$0xff]
        %v1778 = vld [vmem:[#allocation8 + $0xb0] sm:$0xff]
        %v1779 = vld [vmem:[#allocation8 + $0xb8] sm:$0xff]
        %v1780 = vld [vmem:[#allocation8 + $0xc0] sm:$0xff]
        %v1781 = vld [vmem:[#allocation8 + $0xc8] sm:$0xff]
        %v1782 = vld [vmem:[#allocation8 + $0xd0] sm:$0xff]
        %v1783 = vld [vmem:[#allocation8 + $0xd8] sm:$0xff]
        %v1784 = vld [vmem:[#allocation8 + $0xe0] sm:$0xff]
        %v1785 = vld [vmem:[#allocation8 + $0xe8] sm:$0xff]
        %v1786 = vld [vmem:[#allocation8 + $0xf0] sm:$0xff]
        %v1787 = vld [vmem:[#allocation8 + $0xf8] sm:$0xff]
        %v1788 = vld [vmem:[#allocation8 + $0x100] sm:$0xff]
        %v1789 = vld [vmem:[#allocation8 + $0x108] sm:$0xff]
        %v1790 = vld [vmem:[#allocation8 + $0x110] sm:$0xff]
        %v1791 = vld [vmem:[#allocation8 + $0x118] sm:$0xff]
        %v1792 = vld [vmem:[#allocation8 + $0x120] sm:$0xff]
        %v1793 = vld [vmem:[#allocation8 + $0x128] sm:$0xff]
        %v1794 = vld [vmem:[#allocation8 + $0x130] sm:$0xff]
        %v1795 = vld [vmem:[#allocation8 + $0x138] sm:$0xff]
        %v1796 = vld [vmem:[#allocation8 + $0x140] sm:$0xff]
        %v1797 = vld [vmem:[#allocation8 + $0x148] sm:$0xff]
        %v1798 = vld [vmem:[#allocation8 + $0x150] sm:$0xff]
        %v1799 = vld [vmem:[#allocation8 + $0x158] sm:$0xff]
        %v1800 = vld [vmem:[#allocation8 + $0x160] sm:$0xff]
        %v1801 = vld [vmem:[#allocation8 + $0x168] sm:$0xff]
        %v1802 = vld [vmem:[#allocation8 + $0x170] sm:$0xff]
        %v1803 = vld [vmem:[#allocation8 + $0x178] sm:$0xff]
        %v1804 = vld [vmem:[#allocation8 + $0x180] sm:$0xff]
        %v1805 = vld [vmem:[#allocation8 + $0x188] sm:$0xff]
        %v1806 = vld [vmem:[#allocation8 + $0x190] sm:$0xff]
        %v1807 = vld [vmem:[#allocation8 + $0x198] sm:$0xff]
        %v1808 = vld [vmem:[#allocation8 + $0x1a0] sm:$0xff]
        %v1809 = vld [vmem:[#allocation8 + $0x1a8] sm:$0xff]
        %v1810 = vld [vmem:[#allocation8 + $0x1b0] sm:$0xff]
        %v1811 = vld [vmem:[#allocation8 + $0x1b8] sm:$0xff]
        %v1812 = vld [vmem:[#allocation2] sm:$0xfe]
        %v1813 = vld [vmem:[#allocation2 + $0x8] sm:$0xfe]
        %v1814 = vld [vmem:[#allocation2 + $0x10] sm:$0x7f]
        %v1815 = vld [vmem:[#allocation2 + $0x18] sm:$0x7f]
        %s1816 = scalar_lea.vmem [#allocation8], 448
        %v1817 = vld [vmem:[%s1816] sm:$0xff]
        %v1818 = vld [vmem:[%s1816 + $0x8] sm:$0xff]
        %v1819 = vld [vmem:[%s1816 + $0x10] sm:$0xff]
        %v1820 = vld [vmem:[%s1816 + $0x18] sm:$0xff]
        %v1821 = vld [vmem:[%s1816 + $0x20] sm:$0xff]
        %v1822 = vld [vmem:[%s1816 + $0x28] sm:$0xff]
        %v1823 = vld [vmem:[%s1816 + $0x30] sm:$0xff]
        %v1824 = vld [vmem:[%s1816 + $0x38] sm:$0xff]
        %v1825 = vld [vmem:[%s1816 + $0x40] sm:$0xff]
        %v1826 = vld [vmem:[%s1816 + $0x48] sm:$0xff]
        %v1827 = vld [vmem:[%s1816 + $0x50] sm:$0xff]
        %v1828 = vld [vmem:[%s1816 + $0x58] sm:$0xff]
        %v1829 = vld [vmem:[%s1816 + $0x60] sm:$0xff]
        %v1830 = vld [vmem:[%s1816 + $0x68] sm:$0xff]
        %v1831 = vld [vmem:[%s1816 + $0x70] sm:$0xff]
        %v1832 = vld [vmem:[%s1816 + $0x78] sm:$0xff]
        %v1833 = vld [vmem:[%s1816 + $0x80] sm:$0xff]
        %v1834 = vld [vmem:[%s1816 + $0x88] sm:$0xff]
        %v1835 = vld [vmem:[%s1816 + $0x90] sm:$0xff]
        %v1836 = vld [vmem:[%s1816 + $0x98] sm:$0xff]
        %v1837 = vld [vmem:[%s1816 + $0xa0] sm:$0xff]
        %v1838 = vld [vmem:[%s1816 + $0xa8] sm:$0xff]
        %v1839 = vld [vmem:[%s1816 + $0xb0] sm:$0xff]
        %v1840 = vld [vmem:[%s1816 + $0xb8] sm:$0xff]
        %v1841 = vld [vmem:[%s1816 + $0xc0] sm:$0xff]
        %v1842 = vld [vmem:[%s1816 + $0xc8] sm:$0xff]
        %v1843 = vld [vmem:[%s1816 + $0xd0] sm:$0xff]
        %v1844 = vld [vmem:[%s1816 + $0xd8] sm:$0xff]
        %v1845 = vld [vmem:[%s1816 + $0xe0] sm:$0xff]
        %v1846 = vld [vmem:[%s1816 + $0xe8] sm:$0xff]
        %v1847 = vld [vmem:[%s1816 + $0xf0] sm:$0xff]
        %v1848 = vld [vmem:[%s1816 + $0xf8] sm:$0xff]
        %v1849 = vld [vmem:[%s1816 + $0x100] sm:$0xff]
        %v1850 = vld [vmem:[%s1816 + $0x108] sm:$0xff]
        %v1851 = vld [vmem:[%s1816 + $0x110] sm:$0xff]
        %v1852 = vld [vmem:[%s1816 + $0x118] sm:$0xff]
        %v1853 = vld [vmem:[%s1816 + $0x120] sm:$0xff]
        %v1854 = vld [vmem:[%s1816 + $0x128] sm:$0xff]
        %v1855 = vld [vmem:[%s1816 + $0x130] sm:$0xff]
        %v1856 = vld [vmem:[%s1816 + $0x138] sm:$0xff]
        %v1857 = vld [vmem:[%s1816 + $0x140] sm:$0xff]
        %v1858 = vld [vmem:[%s1816 + $0x148] sm:$0xff]
        %v1859 = vld [vmem:[%s1816 + $0x150] sm:$0xff]
        %v1860 = vld [vmem:[%s1816 + $0x158] sm:$0xff]
        %v1861 = vld [vmem:[%s1816 + $0x160] sm:$0xff]
        %v1862 = vld [vmem:[%s1816 + $0x168] sm:$0xff]
        %v1863 = vld [vmem:[%s1816 + $0x170] sm:$0xff]
        %v1864 = vld [vmem:[%s1816 + $0x178] sm:$0xff]
        %v1865 = vld [vmem:[%s1816 + $0x180] sm:$0xff]
        %v1866 = vld [vmem:[%s1816 + $0x188] sm:$0xff]
        %v1867 = vld [vmem:[%s1816 + $0x190] sm:$0xff]
        %v1868 = vld [vmem:[%s1816 + $0x198] sm:$0xff]
        %v1869 = vld [vmem:[%s1816 + $0x1a0] sm:$0xff]
        %v1870 = vld [vmem:[%s1816 + $0x1a8] sm:$0xff]
        %v1871 = vld [vmem:[%s1816 + $0x1b0] sm:$0xff]
        %v1872 = vld [vmem:[%s1816 + $0x1b8] sm:$0xff]
        %vm1877 = vcmask 1046528
        %v1878 = vrot.slane %v1812, 1
        %v1879 = vrot.slane %v1814, 1
        %v1880 = vsel %vm1877, %v1878, %v1879
        %v1881 = vrot.slane %v1813, 1
        %v1882 = vrot.slane %v1815, 1
        %v1883 = vsel %vm1877, %v1881, %v1882
        %v1886 = vsel %vm1725, %v1883, 0
        %v1888 = vsel %vm1725, %v1882, 0
        %1890 = vmatprep.subr.mxu0 %v1818
        %1891 = vmatpush1.msra.mxu0 %v1817
        %1892 = vmatprep.subr.mxu0 %v1820
        %1893 = vmatpush1.msra.mxu0 %v1819
        %1894 = vmatprep.subr.mxu0 %v1822
        %1895 = vmatpush1.msra.mxu0 %v1821
        %1896 = vmatprep.subr.mxu0 %v1824
        %1897 = vmatpush1.msra.mxu0 %v1823
        %1898 = vmatprep.subr.mxu0 %v1826
        %1899 = vmatpush1.msra.mxu0 %v1825
        %1900 = vmatprep.subr.mxu0 %v1828
        %1901 = vmatpush1.msra.mxu0 %v1827
        %1902 = vmatprep.subr.mxu0 %v1830
        %1903 = vmatpush1.msra.mxu0 %v1829
        %1904 = vmatprep.subr.mxu0 %v1832
        %1905 = vmatpush1.msra.mxu0 %v1831
        %1906 = vmatprep.subr.mxu0 %v1834
        %1907 = vmatpush1.msra.mxu0 %v1833
        %1908 = vmatprep.subr.mxu0 %v1836
        %1909 = vmatpush1.msra.mxu0 %v1835
        %1910 = vmatprep.subr.mxu0 %v1838
        %1911 = vmatpush1.msra.mxu0 %v1837
        %1912 = vmatprep.subr.mxu0 %v1840
        %1913 = vmatpush1.msra.mxu0 %v1839
        %1914 = vmatprep.subr.mxu0 %v1842
        %1915 = vmatpush1.msra.mxu0 %v1841
        %1916 = vmatprep.subr.mxu0 %v1844
        %1917 = vmatpush1.msra.mxu0 %v1843
        %1918 = vmatprep.subr.mxu0 %v1846
        %1919 = vmatpush1.msra.mxu0 %v1845
        %1920 = vmatprep.subr.mxu0 %v1848
        %1921 = vmatpush1.msra.mxu0 %v1847
        %1922 = vmatprep.subr.mxu0 %v1850
        %1923 = vmatpush1.msra.mxu0 %v1849
        %1924 = vmatprep.subr.mxu0 %v1852
        %1925 = vmatpush1.msra.mxu0 %v1851
        %1926 = vmatprep.subr.mxu0 %v1854
        %1927 = vmatpush1.msra.mxu0 %v1853
        %1928 = vmatprep.subr.mxu0 %v1856
        %1929 = vmatpush1.msra.mxu0 %v1855
        %1930 = vmatprep.subr.mxu0 %v1858
        %1931 = vmatpush1.msra.mxu0 %v1857
        %1932 = vmatprep.subr.mxu0 %v1860
        %1933 = vmatpush1.msra.mxu0 %v1859
        %1934 = vmatprep.subr.mxu0 %v1862
        %1935 = vmatpush1.msra.mxu0 %v1861
        %1936 = vmatprep.subr.mxu0 %v1864
        %1937 = vmatpush1.msra.mxu0 %v1863
        %1938 = vmatprep.subr.mxu0 %v1866
        %1939 = vmatpush1.msra.mxu0 %v1865
        %1940 = vmatprep.subr.mxu0 %v1868
        %1941 = vmatpush1.msra.mxu0 %v1867
        %1942 = vmatprep.subr.mxu0 %v1870
        %1943 = vmatpush1.msra.mxu0 %v1869
        %1944 = vmatprep.subr.mxu0 %v1872
        %1945 = vmatpush1.msra.mxu0 %v1871
        %1946 = vmatprep.subr.mxu0 0.0
        %1947 = vmatpush1.msra.mxu0 0.0
        %1948 = vmatprep.subr.mxu0 0.0
        %1949 = vmatpush1.msra.mxu0 0.0
        %1950 = vmatprep.subr.mxu0 0.0
        %1951 = vmatpush1.msra.mxu0 0.0
        %1952 = vmatprep.subr.mxu0 0.0
        %1953 = vmatpush1.msra.mxu0 0.0
        %1954 = vmatprep.mubr.f32.mxu0 %v1886
        %1955 = vmatmul.mubr.f32.gmra.mrb[0].mxu0 %v1880
        %v1956 = vpop.f32.mrb[0].mxu0
        %v1957 = vadd.f32 0.0, %v1956
        %v1958 = vpop.f32.mrb[0].mxu0
        %v1959 = vadd.f32 0.0, %v1958
        %1960 = vmatprep.mubr.f32.mxu0 %v1888
        %1961 = vmatmul.mubr.f32.gmra.mrb[0].mxu0 %v1879
        %v1962 = vpop.f32.mrb[0].mxu0
        %v1963 = vadd.f32 0.0, %v1962
        %v1964 = vpop.f32.mrb[0].mxu0
        %v1965 = vadd.f32 0.0, %v1964
        %1966 = vdwg.mxu0
        %v1968 = vsel %vm1725, %v1753, 0
        %v1971 = vsel %vm1725, %v1755, 0
        %1973 = vmatprep.subr.mxu0 %v1757
        %1974 = vmatpush1.msra.mxu0 %v1756
        %1975 = vmatprep.subr.mxu0 %v1759
        %1976 = vmatpush1.msra.mxu0 %v1758
        %1977 = vmatprep.subr.mxu0 %v1761
        %1978 = vmatpush1.msra.mxu0 %v1760
        %1979 = vmatprep.subr.mxu0 %v1763
        %1980 = vmatpush1.msra.mxu0 %v1762
        %1981 = vmatprep.subr.mxu0 %v1765
        %1982 = vmatpush1.msra.mxu0 %v1764
        %1983 = vmatprep.subr.mxu0 %v1767
        %1984 = vmatpush1.msra.mxu0 %v1766
        %1985 = vmatprep.subr.mxu0 %v1769
        %1986 = vmatpush1.msra.mxu0 %v1768
        %1987 = vmatprep.subr.mxu0 %v1771
        %1988 = vmatpush1.msra.mxu0 %v1770
        %1989 = vmatprep.subr.mxu0 %v1773
        %1990 = vmatpush1.msra.mxu0 %v1772
        %1991 = vmatprep.subr.mxu0 %v1775
        %1992 = vmatpush1.msra.mxu0 %v1774
        %1993 = vmatprep.subr.mxu0 %v1777
        %1994 = vmatpush1.msra.mxu0 %v1776
        %1995 = vmatprep.subr.mxu0 %v1779
        %1996 = vmatpush1.msra.mxu0 %v1778
        %1997 = vmatprep.subr.mxu0 %v1781
        %1998 = vmatpush1.msra.mxu0 %v1780
        %1999 = vmatprep.subr.mxu0 %v1783
        %2000 = vmatpush1.msra.mxu0 %v1782
        %2001 = vmatprep.subr.mxu0 %v1785
        %2002 = vmatpush1.msra.mxu0 %v1784
        %2003 = vmatprep.subr.mxu0 %v1787
        %2004 = vmatpush1.msra.mxu0 %v1786
        %2005 = vmatprep.subr.mxu0 %v1789
        %2006 = vmatpush1.msra.mxu0 %v1788
        %2007 = vmatprep.subr.mxu0 %v1791
        %2008 = vmatpush1.msra.mxu0 %v1790
        %2009 = vmatprep.subr.mxu0 %v1793
        %2010 = vmatpush1.msra.mxu0 %v1792
        %2011 = vmatprep.subr.mxu0 %v1795
        %2012 = vmatpush1.msra.mxu0 %v1794
        %2013 = vmatprep.subr.mxu0 %v1797
        %2014 = vmatpush1.msra.mxu0 %v1796
        %2015 = vmatprep.subr.mxu0 %v1799
        %2016 = vmatpush1.msra.mxu0 %v1798
        %2017 = vmatprep.subr.mxu0 %v1801
        %2018 = vmatpush1.msra.mxu0 %v1800
        %2019 = vmatprep.subr.mxu0 %v1803
        %2020 = vmatpush1.msra.mxu0 %v1802
        %2021 = vmatprep.subr.mxu0 %v1805
        %2022 = vmatpush1.msra.mxu0 %v1804
        %2023 = vmatprep.subr.mxu0 %v1807
        %2024 = vmatpush1.msra.mxu0 %v1806
        %2025 = vmatprep.subr.mxu0 %v1809
        %2026 = vmatpush1.msra.mxu0 %v1808
        %2027 = vmatprep.subr.mxu0 %v1811
        %2028 = vmatpush1.msra.mxu0 %v1810
        %2029 = vmatprep.subr.mxu0 0.0
        %2030 = vmatpush1.msra.mxu0 0.0
        %2031 = vmatprep.subr.mxu0 0.0
        %2032 = vmatpush1.msra.mxu0 0.0
        %2033 = vmatprep.subr.mxu0 0.0
        %2034 = vmatpush1.msra.mxu0 0.0
        %2035 = vmatprep.subr.mxu0 0.0
        %2036 = vmatpush1.msra.mxu0 0.0
        %2037 = vmatprep.mubr.f32.mxu0 %v1968
        %2038 = vmatmul.mubr.f32.gmra.mrb[0].mxu0 %v1752
        %v2039 = vpop.f32.mrb[0].mxu0
        %v2040 = vadd.f32 %v1957, %v2039
        %v2041 = vpop.f32.mrb[0].mxu0
        %v2042 = vadd.f32 %v1959, %v2041
        %2043 = vmatprep.mubr.f32.mxu0 %v1971
        %2044 = vmatmul.mubr.f32.gmra.mrb[0].mxu0 %v1754
        %v2045 = vpop.f32.mrb[0].mxu0
        %v2046 = vadd.f32 %v1963, %v2045
        %v2047 = vpop.f32.mrb[0].mxu0
        %v2048 = vadd.f32 %v1965, %v2047
        %2049 = vdwg.mxu0
        %v2050 = vld [vmem:[#allocation2] sm:$0xfc]
        %v2051 = vld [vmem:[#allocation2 + $0x8] sm:$0xfc]
        %v2052 = vld [vmem:[#allocation2 + $0x10] sm:$0xff]
        %v2053 = vld [vmem:[#allocation2 + $0x18] sm:$0xff]
        %s2054 = scalar_lea.vmem [#allocation8], 896
        %v2055 = vld [vmem:[%s2054] sm:$0xff]
        %v2056 = vld [vmem:[%s2054 + $0x8] sm:$0xff]
        %v2057 = vld [vmem:[%s2054 + $0x10] sm:$0xff]
        %v2058 = vld [vmem:[%s2054 + $0x18] sm:$0xff]
        %v2059 = vld [vmem:[%s2054 + $0x20] sm:$0xff]
        %v2060 = vld [vmem:[%s2054 + $0x28] sm:$0xff]
        %v2061 = vld [vmem:[%s2054 + $0x30] sm:$0xff]
        %v2062 = vld [vmem:[%s2054 + $0x38] sm:$0xff]
        %v2063 = vld [vmem:[%s2054 + $0x40] sm:$0xff]
        %v2064 = vld [vmem:[%s2054 + $0x48] sm:$0xff]
        %v2065 = vld [vmem:[%s2054 + $0x50] sm:$0xff]
        %v2066 = vld [vmem:[%s2054 + $0x58] sm:$0xff]
        %v2067 = vld [vmem:[%s2054 + $0x60] sm:$0xff]
        %v2068 = vld [vmem:[%s2054 + $0x68] sm:$0xff]
        %v2069 = vld [vmem:[%s2054 + $0x70] sm:$0xff]
        %v2070 = vld [vmem:[%s2054 + $0x78] sm:$0xff]
        %v2071 = vld [vmem:[%s2054 + $0x80] sm:$0xff]
        %v2072 = vld [vmem:[%s2054 + $0x88] sm:$0xff]
        %v2073 = vld [vmem:[%s2054 + $0x90] sm:$0xff]
        %v2074 = vld [vmem:[%s2054 + $0x98] sm:$0xff]
        %v2075 = vld [vmem:[%s2054 + $0xa0] sm:$0xff]
        %v2076 = vld [vmem:[%s2054 + $0xa8] sm:$0xff]
        %v2077 = vld [vmem:[%s2054 + $0xb0] sm:$0xff]
        %v2078 = vld [vmem:[%s2054 + $0xb8] sm:$0xff]
        %v2079 = vld [vmem:[%s2054 + $0xc0] sm:$0xff]
        %v2080 = vld [vmem:[%s2054 + $0xc8] sm:$0xff]
        %v2081 = vld [vmem:[%s2054 + $0xd0] sm:$0xff]
        %v2082 = vld [vmem:[%s2054 + $0xd8] sm:$0xff]
        %v2083 = vld [vmem:[%s2054 + $0xe0] sm:$0xff]
        %v2084 = vld [vmem:[%s2054 + $0xe8] sm:$0xff]
        %v2085 = vld [vmem:[%s2054 + $0xf0] sm:$0xff]
        %v2086 = vld [vmem:[%s2054 + $0xf8] sm:$0xff]
        %v2087 = vld [vmem:[%s2054 + $0x100] sm:$0xff]
        %v2088 = vld [vmem:[%s2054 + $0x108] sm:$0xff]
        %v2089 = vld [vmem:[%s2054 + $0x110] sm:$0xff]
        %v2090 = vld [vmem:[%s2054 + $0x118] sm:$0xff]
        %v2091 = vld [vmem:[%s2054 + $0x120] sm:$0xff]
        %v2092 = vld [vmem:[%s2054 + $0x128] sm:$0xff]
        %v2093 = vld [vmem:[%s2054 + $0x130] sm:$0xff]
        %v2094 = vld [vmem:[%s2054 + $0x138] sm:$0xff]
        %v2095 = vld [vmem:[%s2054 + $0x140] sm:$0xff]
        %v2096 = vld [vmem:[%s2054 + $0x148] sm:$0xff]
        %v2097 = vld [vmem:[%s2054 + $0x150] sm:$0xff]
        %v2098 = vld [vmem:[%s2054 + $0x158] sm:$0xff]
        %v2099 = vld [vmem:[%s2054 + $0x160] sm:$0xff]
        %v2100 = vld [vmem:[%s2054 + $0x168] sm:$0xff]
        %v2101 = vld [vmem:[%s2054 + $0x170] sm:$0xff]
        %v2102 = vld [vmem:[%s2054 + $0x178] sm:$0xff]
        %v2103 = vld [vmem:[%s2054 + $0x180] sm:$0xff]
        %v2104 = vld [vmem:[%s2054 + $0x188] sm:$0xff]
        %v2105 = vld [vmem:[%s2054 + $0x190] sm:$0xff]
        %v2106 = vld [vmem:[%s2054 + $0x198] sm:$0xff]
        %v2107 = vld [vmem:[%s2054 + $0x1a0] sm:$0xff]
        %v2108 = vld [vmem:[%s2054 + $0x1a8] sm:$0xff]
        %v2109 = vld [vmem:[%s2054 + $0x1b0] sm:$0xff]
        %v2110 = vld [vmem:[%s2054 + $0x1b8] sm:$0xff]
        %vm2115 = vcmask 1045504
        %v2116 = vrot.slane %v2050, 2
        %v2117 = vrot.slane %v2052, 2
        %v2118 = vsel %vm2115, %v2116, %v2117
        %v2119 = vrot.slane %v2051, 2
        %v2120 = vrot.slane %v2053, 2
        %v2121 = vsel %vm2115, %v2119, %v2120
        %v2124 = vsel %vm1725, %v2121, 0
        %v2126 = vsel %vm1725, %v2120, 0
        %2128 = vmatprep.subr.mxu0 %v2056
        %2129 = vmatpush1.msra.mxu0 %v2055
        %2130 = vmatprep.subr.mxu0 %v2058
        %2131 = vmatpush1.msra.mxu0 %v2057
        %2132 = vmatprep.subr.mxu0 %v2060
        %2133 = vmatpush1.msra.mxu0 %v2059
        %2134 = vmatprep.subr.mxu0 %v2062
        %2135 = vmatpush1.msra.mxu0 %v2061
        %2136 = vmatprep.subr.mxu0 %v2064
        %2137 = vmatpush1.msra.mxu0 %v2063
        %2138 = vmatprep.subr.mxu0 %v2066
        %2139 = vmatpush1.msra.mxu0 %v2065
        %2140 = vmatprep.subr.mxu0 %v2068
        %2141 = vmatpush1.msra.mxu0 %v2067
        %2142 = vmatprep.subr.mxu0 %v2070
        %2143 = vmatpush1.msra.mxu0 %v2069
        %2144 = vmatprep.subr.mxu0 %v2072
        %2145 = vmatpush1.msra.mxu0 %v2071
        %2146 = vmatprep.subr.mxu0 %v2074
        %2147 = vmatpush1.msra.mxu0 %v2073
        %2148 = vmatprep.subr.mxu0 %v2076
        %2149 = vmatpush1.msra.mxu0 %v2075
        %2150 = vmatprep.subr.mxu0 %v2078
        %2151 = vmatpush1.msra.mxu0 %v2077
        %2152 = vmatprep.subr.mxu0 %v2080
        %2153 = vmatpush1.msra.mxu0 %v2079
        %2154 = vmatprep.subr.mxu0 %v2082
        %2155 = vmatpush1.msra.mxu0 %v2081
        %2156 = vmatprep.subr.mxu0 %v2084
        %2157 = vmatpush1.msra.mxu0 %v2083
        %2158 = vmatprep.subr.mxu0 %v2086
        %2159 = vmatpush1.msra.mxu0 %v2085
        %2160 = vmatprep.subr.mxu0 %v2088
        %2161 = vmatpush1.msra.mxu0 %v2087
        %2162 = vmatprep.subr.mxu0 %v2090
        %2163 = vmatpush1.msra.mxu0 %v2089
        %2164 = vmatprep.subr.mxu0 %v2092
        %2165 = vmatpush1.msra.mxu0 %v2091
        %2166 = vmatprep.subr.mxu0 %v2094
        %2167 = vmatpush1.msra.mxu0 %v2093
        %2168 = vmatprep.subr.mxu0 %v2096
        %2169 = vmatpush1.msra.mxu0 %v2095
        %2170 = vmatprep.subr.mxu0 %v2098
        %2171 = vmatpush1.msra.mxu0 %v2097
        %2172 = vmatprep.subr.mxu0 %v2100
        %2173 = vmatpush1.msra.mxu0 %v2099
        %2174 = vmatprep.subr.mxu0 %v2102
        %2175 = vmatpush1.msra.mxu0 %v2101
        %2176 = vmatprep.subr.mxu0 %v2104
        %2177 = vmatpush1.msra.mxu0 %v2103
        %2178 = vmatprep.subr.mxu0 %v2106
        %2179 = vmatpush1.msra.mxu0 %v2105
        %2180 = vmatprep.subr.mxu0 %v2108
        %2181 = vmatpush1.msra.mxu0 %v2107
        %2182 = vmatprep.subr.mxu0 %v2110
        %2183 = vmatpush1.msra.mxu0 %v2109
        %2184 = vmatprep.subr.mxu0 0.0
        %2185 = vmatpush1.msra.mxu0 0.0
        %2186 = vmatprep.subr.mxu0 0.0
        %2187 = vmatpush1.msra.mxu0 0.0
        %2188 = vmatprep.subr.mxu0 0.0
        %2189 = vmatpush1.msra.mxu0 0.0
        %2190 = vmatprep.subr.mxu0 0.0
        %2191 = vmatpush1.msra.mxu0 0.0
        %2192 = vmatprep.mubr.f32.mxu0 %v2124
        %2193 = vmatmul.mubr.f32.gmra.mrb[0].mxu0 %v2118
        %v2194 = vpop.f32.mrb[0].mxu0
        %v2195 = vadd.f32 0.0, %v2194
        %v2196 = vpop.f32.mrb[0].mxu0
        %v2197 = vadd.f32 0.0, %v2196
        %2198 = vmatprep.mubr.f32.mxu0 %v2126
        %2199 = vmatmul.mubr.f32.gmra.mrb[0].mxu0 %v2117
        %v2200 = vpop.f32.mrb[0].mxu0
        %v2201 = vadd.f32 0.0, %v2200
        %v2202 = vpop.f32.mrb[0].mxu0
        %v2203 = vadd.f32 0.0, %v2202
        %2204 = vdwg.mxu0
        %v2205 = vadd.f32 %v2040, %v2195
        %v2206 = vadd.f32 %v2042, %v2197
        %v2207 = vadd.f32 %v2046, %v2201
        %v2208 = vadd.f32 %v2048, %v2203
        %v2209 = vld [vmem:[#allocation2] sm:$0xf8]
        %v2210 = vld [vmem:[#allocation2 + $0x8] sm:$0xf8]
        %v2211 = vld [vmem:[#allocation2 + $0x10] sm:$0xff]
        %v2212 = vld [vmem:[#allocation2 + $0x18] sm:$0xff]
        %v2213 = vld [vmem:[#allocation2 + $0x20] sm:$0x1]
        %v2214 = vld [vmem:[#allocation2 + $0x28] sm:$0x1]
        %s2215 = scalar_lea.vmem [#allocation8], 1344
        %v2216 = vld [vmem:[%s2215] sm:$0xff]
        %v2217 = vld [vmem:[%s2215 + $0x8] sm:$0xff]
        %v2218 = vld [vmem:[%s2215 + $0x10] sm:$0xff]
        %v2219 = vld [vmem:[%s2215 + $0x18] sm:$0xff]
        %v2220 = vld [vmem:[%s2215 + $0x20] sm:$0xff]
        %v2221 = vld [vmem:[%s2215 + $0x28] sm:$0xff]
        %v2222 = vld [vmem:[%s2215 + $0x30] sm:$0xff]
        %v2223 = vld [vmem:[%s2215 + $0x38] sm:$0xff]
        %v2224 = vld [vmem:[%s2215 + $0x40] sm:$0xff]
        %v2225 = vld [vmem:[%s2215 + $0x48] sm:$0xff]
        %v2226 = vld [vmem:[%s2215 + $0x50] sm:$0xff]
        %v2227 = vld [vmem:[%s2215 + $0x58] sm:$0xff]
        %v2228 = vld [vmem:[%s2215 + $0x60] sm:$0xff]
        %v2229 = vld [vmem:[%s2215 + $0x68] sm:$0xff]
        %v2230 = vld [vmem:[%s2215 + $0x70] sm:$0xff]
        %v2231 = vld [vmem:[%s2215 + $0x78] sm:$0xff]
        %v2232 = vld [vmem:[%s2215 + $0x80] sm:$0xff]
        %v2233 = vld [vmem:[%s2215 + $0x88] sm:$0xff]
        %v2234 = vld [vmem:[%s2215 + $0x90] sm:$0xff]
        %v2235 = vld [vmem:[%s2215 + $0x98] sm:$0xff]
        %v2236 = vld [vmem:[%s2215 + $0xa0] sm:$0xff]
        %v2237 = vld [vmem:[%s2215 + $0xa8] sm:$0xff]
        %v2238 = vld [vmem:[%s2215 + $0xb0] sm:$0xff]
        %v2239 = vld [vmem:[%s2215 + $0xb8] sm:$0xff]
        %v2240 = vld [vmem:[%s2215 + $0xc0] sm:$0xff]
        %v2241 = vld [vmem:[%s2215 + $0xc8] sm:$0xff]
        %v2242 = vld [vmem:[%s2215 + $0xd0] sm:$0xff]
        %v2243 = vld [vmem:[%s2215 + $0xd8] sm:$0xff]
        %v2244 = vld [vmem:[%s2215 + $0xe0] sm:$0xff]
        %v2245 = vld [vmem:[%s2215 + $0xe8] sm:$0xff]
        %v2246 = vld [vmem:[%s2215 + $0xf0] sm:$0xff]
        %v2247 = vld [vmem:[%s2215 + $0xf8] sm:$0xff]
        %v2248 = vld [vmem:[%s2215 + $0x100] sm:$0xff]
        %v2249 = vld [vmem:[%s2215 + $0x108] sm:$0xff]
        %v2250 = vld [vmem:[%s2215 + $0x110] sm:$0xff]
        %v2251 = vld [vmem:[%s2215 + $0x118] sm:$0xff]
        %v2252 = vld [vmem:[%s2215 + $0x120] sm:$0xff]
        %v2253 = vld [vmem:[%s2215 + $0x128] sm:$0xff]
        %v2254 = vld [vmem:[%s2215 + $0x130] sm:$0xff]
        %v2255 = vld [vmem:[%s2215 + $0x138] sm:$0xff]
        %v2256 = vld [vmem:[%s2215 + $0x140] sm:$0xff]
        %v2257 = vld [vmem:[%s2215 + $0x148] sm:$0xff]
        %v2258 = vld [vmem:[%s2215 + $0x150] sm:$0xff]
        %v2259 = vld [vmem:[%s2215 + $0x158] sm:$0xff]
        %v2260 = vld [vmem:[%s2215 + $0x160] sm:$0xff]
        %v2261 = vld [vmem:[%s2215 + $0x168] sm:$0xff]
        %v2262 = vld [vmem:[%s2215 + $0x170] sm:$0xff]
        %v2263 = vld [vmem:[%s2215 + $0x178] sm:$0xff]
        %v2264 = vld [vmem:[%s2215 + $0x180] sm:$0xff]
        %v2265 = vld [vmem:[%s2215 + $0x188] sm:$0xff]
        %v2266 = vld [vmem:[%s2215 + $0x190] sm:$0xff]
        %v2267 = vld [vmem:[%s2215 + $0x198] sm:$0xff]
        %v2268 = vld [vmem:[%s2215 + $0x1a0] sm:$0xff]
        %v2269 = vld [vmem:[%s2215 + $0x1a8] sm:$0xff]
        %v2270 = vld [vmem:[%s2215 + $0x1b0] sm:$0xff]
        %v2271 = vld [vmem:[%s2215 + $0x1b8] sm:$0xff]
        %vm2278 = vcmask 1044480
        %v2279 = vrot.slane %v2209, 3
        %v2280 = vrot.slane %v2211, 3
        %v2281 = vsel %vm2278, %v2279, %v2280
        %v2282 = vrot.slane %v2210, 3
        %v2283 = vrot.slane %v2212, 3
        %v2284 = vsel %vm2278, %v2282, %v2283
        %v2285 = vrot.slane %v2213, 3
        %v2286 = vsel %vm2278, %v2280, %v2285
        %v2287 = vrot.slane %v2214, 3
        %v2288 = vsel %vm2278, %v2283, %v2287
        %v2291 = vsel %vm1725, %v2284, 0
        %v2293 = vsel %vm1725, %v2288, 0
        %2295 = vmatprep.subr.mxu0 %v2217
        %2296 = vmatpush1.msra.mxu0 %v2216
        %2297 = vmatprep.subr.mxu0 %v2219
        %2298 = vmatpush1.msra.mxu0 %v2218
        %2299 = vmatprep.subr.mxu0 %v2221
        %2300 = vmatpush1.msra.mxu0 %v2220
        %2301 = vmatprep.subr.mxu0 %v2223
        %2302 = vmatpush1.msra.mxu0 %v2222
        %2303 = vmatprep.subr.mxu0 %v2225
        %2304 = vmatpush1.msra.mxu0 %v2224
        %2305 = vmatprep.subr.mxu0 %v2227
        %2306 = vmatpush1.msra.mxu0 %v2226
        %2307 = vmatprep.subr.mxu0 %v2229
        %2308 = vmatpush1.msra.mxu0 %v2228
        %2309 = vmatprep.subr.mxu0 %v2231
        %2310 = vmatpush1.msra.mxu0 %v2230
        %2311 = vmatprep.subr.mxu0 %v2233
        %2312 = vmatpush1.msra.mxu0 %v2232
        %2313 = vmatprep.subr.mxu0 %v2235
        %2314 = vmatpush1.msra.mxu0 %v2234
        %2315 = vmatprep.subr.mxu0 %v2237
        %2316 = vmatpush1.msra.mxu0 %v2236
        %2317 = vmatprep.subr.mxu0 %v2239
        %2318 = vmatpush1.msra.mxu0 %v2238
        %2319 = vmatprep.subr.mxu0 %v2241
        %2320 = vmatpush1.msra.mxu0 %v2240
        %2321 = vmatprep.subr.mxu0 %v2243
        %2322 = vmatpush1.msra.mxu0 %v2242
        %2323 = vmatprep.subr.mxu0 %v2245
        %2324 = vmatpush1.msra.mxu0 %v2244
        %2325 = vmatprep.subr.mxu0 %v2247
        %2326 = vmatpush1.msra.mxu0 %v2246
        %2327 = vmatprep.subr.mxu0 %v2249
        %2328 = vmatpush1.msra.mxu0 %v2248
        %2329 = vmatprep.subr.mxu0 %v2251
        %2330 = vmatpush1.msra.mxu0 %v2250
        %2331 = vmatprep.subr.mxu0 %v2253
        %2332 = vmatpush1.msra.mxu0 %v2252
        %2333 = vmatprep.subr.mxu0 %v2255
        %2334 = vmatpush1.msra.mxu0 %v2254
        %2335 = vmatprep.subr.mxu0 %v2257
        %2336 = vmatpush1.msra.mxu0 %v2256
        %2337 = vmatprep.subr.mxu0 %v2259
        %2338 = vmatpush1.msra.mxu0 %v2258
        %2339 = vmatprep.subr.mxu0 %v2261
        %2340 = vmatpush1.msra.mxu0 %v2260
        %2341 = vmatprep.subr.mxu0 %v2263
        %2342 = vmatpush1.msra.mxu0 %v2262
        %2343 = vmatprep.subr.mxu0 %v2265
        %2344 = vmatpush1.msra.mxu0 %v2264
        %2345 = vmatprep.subr.mxu0 %v2267
        %2346 = vmatpush1.msra.mxu0 %v2266
        %2347 = vmatprep.subr.mxu0 %v2269
        %2348 = vmatpush1.msra.mxu0 %v2268
        %2349 = vmatprep.subr.mxu0 %v2271
        %2350 = vmatpush1.msra.mxu0 %v2270
        %2351 = vmatprep.subr.mxu0 0.0
        %2352 = vmatpush1.msra.mxu0 0.0
        %2353 = vmatprep.subr.mxu0 0.0
        %2354 = vmatpush1.msra.mxu0 0.0
        %2355 = vmatprep.subr.mxu0 0.0
        %2356 = vmatpush1.msra.mxu0 0.0
        %2357 = vmatprep.subr.mxu0 0.0
        %2358 = vmatpush1.msra.mxu0 0.0
        %2359 = vmatprep.mubr.f32.mxu0 %v2291
        %2360 = vmatmul.mubr.f32.gmra.mrb[0].mxu0 %v2281
        %v2361 = vpop.f32.mrb[0].mxu0
        %v2362 = vadd.f32 0.0, %v2361
        %v2363 = vpop.f32.mrb[0].mxu0
        %v2364 = vadd.f32 0.0, %v2363
        %2365 = vmatprep.mubr.f32.mxu0 %v2293
        %2366 = vmatmul.mubr.f32.gmra.mrb[0].mxu0 %v2286
        %v2367 = vpop.f32.mrb[0].mxu0
        %v2368 = vadd.f32 0.0, %v2367
        %v2369 = vpop.f32.mrb[0].mxu0
        %v2370 = vadd.f32 0.0, %v2369
        %2371 = vdwg.mxu0
        %v2372 = vadd.f32 %v2205, %v2362
        %v2373 = vadd.f32 %v2206, %v2364
        %v2374 = vadd.f32 %v2207, %v2368
        %v2375 = vadd.f32 %v2208, %v2370
        %v2376 = vld [vmem:[#allocation2] sm:$0xf0]
        %v2377 = vld [vmem:[#allocation2 + $0x8] sm:$0xf0]
        %v2378 = vld [vmem:[#allocation2 + $0x20] sm:$0x3]
        %v2379 = vld [vmem:[#allocation2 + $0x28] sm:$0x3]
        %s2380 = scalar_lea.vmem [#allocation8], 1792
        %v2381 = vld [vmem:[%s2380] sm:$0xff]
        %v2382 = vld [vmem:[%s2380 + $0x8] sm:$0xff]
        %v2383 = vld [vmem:[%s2380 + $0x10] sm:$0xff]
        %v2384 = vld [vmem:[%s2380 + $0x18] sm:$0xff]
        %v2385 = vld [vmem:[%s2380 + $0x20] sm:$0xff]
        %v2386 = vld [vmem:[%s2380 + $0x28] sm:$0xff]
        %v2387 = vld [vmem:[%s2380 + $0x30] sm:$0xff]
        %v2388 = vld [vmem:[%s2380 + $0x38] sm:$0xff]
        %v2389 = vld [vmem:[%s2380 + $0x40] sm:$0xff]
        %v2390 = vld [vmem:[%s2380 + $0x48] sm:$0xff]
        %v2391 = vld [vmem:[%s2380 + $0x50] sm:$0xff]
        %v2392 = vld [vmem:[%s2380 + $0x58] sm:$0xff]
        %v2393 = vld [vmem:[%s2380 + $0x60] sm:$0xff]
        %v2394 = vld [vmem:[%s2380 + $0x68] sm:$0xff]
        %v2395 = vld [vmem:[%s2380 + $0x70] sm:$0xff]
        %v2396 = vld [vmem:[%s2380 + $0x78] sm:$0xff]
        %v2397 = vld [vmem:[%s2380 + $0x80] sm:$0xff]
        %v2398 = vld [vmem:[%s2380 + $0x88] sm:$0xff]
        %v2399 = vld [vmem:[%s2380 + $0x90] sm:$0xff]
        %v2400 = vld [vmem:[%s2380 + $0x98] sm:$0xff]
        %v2401 = vld [vmem:[%s2380 + $0xa0] sm:$0xff]
        %v2402 = vld [vmem:[%s2380 + $0xa8] sm:$0xff]
        %v2403 = vld [vmem:[%s2380 + $0xb0] sm:$0xff]
        %v2404 = vld [vmem:[%s2380 + $0xb8] sm:$0xff]
        %v2405 = vld [vmem:[%s2380 + $0xc0] sm:$0xff]
        %v2406 = vld [vmem:[%s2380 + $0xc8] sm:$0xff]
        %v2407 = vld [vmem:[%s2380 + $0xd0] sm:$0xff]
        %v2408 = vld [vmem:[%s2380 + $0xd8] sm:$0xff]
        %v2409 = vld [vmem:[%s2380 + $0xe0] sm:$0xff]
        %v2410 = vld [vmem:[%s2380 + $0xe8] sm:$0xff]
        %v2411 = vld [vmem:[%s2380 + $0xf0] sm:$0xff]
        %v2412 = vld [vmem:[%s2380 + $0xf8] sm:$0xff]
        %v2413 = vld [vmem:[%s2380 + $0x100] sm:$0xff]
        %v2414 = vld [vmem:[%s2380 + $0x108] sm:$0xff]
        %v2415 = vld [vmem:[%s2380 + $0x110] sm:$0xff]
        %v2416 = vld [vmem:[%s2380 + $0x118] sm:$0xff]
        %v2417 = vld [vmem:[%s2380 + $0x120] sm:$0xff]
        %v2418 = vld [vmem:[%s2380 + $0x128] sm:$0xff]
        %v2419 = vld [vmem:[%s2380 + $0x130] sm:$0xff]
        %v2420 = vld [vmem:[%s2380 + $0x138] sm:$0xff]
        %v2421 = vld [vmem:[%s2380 + $0x140] sm:$0xff]
        %v2422 = vld [vmem:[%s2380 + $0x148] sm:$0xff]
        %v2423 = vld [vmem:[%s2380 + $0x150] sm:$0xff]
        %v2424 = vld [vmem:[%s2380 + $0x158] sm:$0xff]
        %v2425 = vld [vmem:[%s2380 + $0x160] sm:$0xff]
        %v2426 = vld [vmem:[%s2380 + $0x168] sm:$0xff]
        %v2427 = vld [vmem:[%s2380 + $0x170] sm:$0xff]
        %v2428 = vld [vmem:[%s2380 + $0x178] sm:$0xff]
        %v2429 = vld [vmem:[%s2380 + $0x180] sm:$0xff]
        %v2430 = vld [vmem:[%s2380 + $0x188] sm:$0xff]
        %v2431 = vld [vmem:[%s2380 + $0x190] sm:$0xff]
        %v2432 = vld [vmem:[%s2380 + $0x198] sm:$0xff]
        %v2433 = vld [vmem:[%s2380 + $0x1a0] sm:$0xff]
        %v2434 = vld [vmem:[%s2380 + $0x1a8] sm:$0xff]
        %v2435 = vld [vmem:[%s2380 + $0x1b0] sm:$0xff]
        %v2436 = vld [vmem:[%s2380 + $0x1b8] sm:$0xff]
        %v2441 = vrot.slane %v2376, 4
        %v2442 = vrot.slane %v2211, 4
        %v2443 = vsel %vm1550, %v2441, %v2442
        %v2444 = vrot.slane %v2377, 4
        %v2445 = vrot.slane %v2212, 4
        %v2446 = vsel %vm1550, %v2444, %v2445
        %v2447 = vrot.slane %v2378, 4
        %v2448 = vsel %vm1550, %v2442, %v2447
        %v2449 = vrot.slane %v2379, 4
        %v2450 = vsel %vm1550, %v2445, %v2449
        %v2453 = vsel %vm1725, %v2446, 0
        %v2455 = vsel %vm1725, %v2450, 0
        %2457 = vmatprep.subr.mxu0 %v2382
        %2458 = vmatpush1.msra.mxu0 %v2381
        %2459 = vmatprep.subr.mxu0 %v2384
        %2460 = vmatpush1.msra.mxu0 %v2383
        %2461 = vmatprep.subr.mxu0 %v2386
        %2462 = vmatpush1.msra.mxu0 %v2385
        %2463 = vmatprep.subr.mxu0 %v2388
        %2464 = vmatpush1.msra.mxu0 %v2387
        %2465 = vmatprep.subr.mxu0 %v2390
        %2466 = vmatpush1.msra.mxu0 %v2389
        %2467 = vmatprep.subr.mxu0 %v2392
        %2468 = vmatpush1.msra.mxu0 %v2391
        %2469 = vmatprep.subr.mxu0 %v2394
        %2470 = vmatpush1.msra.mxu0 %v2393
        %2471 = vmatprep.subr.mxu0 %v2396
        %2472 = vmatpush1.msra.mxu0 %v2395
        %2473 = vmatprep.subr.mxu0 %v2398
        %2474 = vmatpush1.msra.mxu0 %v2397
        %2475 = vmatprep.subr.mxu0 %v2400
        %2476 = vmatpush1.msra.mxu0 %v2399
        %2477 = vmatprep.subr.mxu0 %v2402
        %2478 = vmatpush1.msra.mxu0 %v2401
        %2479 = vmatprep.subr.mxu0 %v2404
        %2480 = vmatpush1.msra.mxu0 %v2403
        %2481 = vmatprep.subr.mxu0 %v2406
        %2482 = vmatpush1.msra.mxu0 %v2405
        %2483 = vmatprep.subr.mxu0 %v2408
        %2484 = vmatpush1.msra.mxu0 %v2407
        %2485 = vmatprep.subr.mxu0 %v2410
        %2486 = vmatpush1.msra.mxu0 %v2409
        %2487 = vmatprep.subr.mxu0 %v2412
        %2488 = vmatpush1.msra.mxu0 %v2411
        %2489 = vmatprep.subr.mxu0 %v2414
        %2490 = vmatpush1.msra.mxu0 %v2413
        %2491 = vmatprep.subr.mxu0 %v2416
        %2492 = vmatpush1.msra.mxu0 %v2415
        %2493 = vmatprep.subr.mxu0 %v2418
        %2494 = vmatpush1.msra.mxu0 %v2417
        %2495 = vmatprep.subr.mxu0 %v2420
        %2496 = vmatpush1.msra.mxu0 %v2419
        %2497 = vmatprep.subr.mxu0 %v2422
        %2498 = vmatpush1.msra.mxu0 %v2421
        %2499 = vmatprep.subr.mxu0 %v2424
        %2500 = vmatpush1.msra.mxu0 %v2423
        %2501 = vmatprep.subr.mxu0 %v2426
        %2502 = vmatpush1.msra.mxu0 %v2425
        %2503 = vmatprep.subr.mxu0 %v2428
        %2504 = vmatpush1.msra.mxu0 %v2427
        %2505 = vmatprep.subr.mxu0 %v2430
        %2506 = vmatpush1.msra.mxu0 %v2429
        %2507 = vmatprep.subr.mxu0 %v2432
        %2508 = vmatpush1.msra.mxu0 %v2431
        %2509 = vmatprep.subr.mxu0 %v2434
        %2510 = vmatpush1.msra.mxu0 %v2433
        %2511 = vmatprep.subr.mxu0 %v2436
        %2512 = vmatpush1.msra.mxu0 %v2435
        %2513 = vmatprep.subr.mxu0 0.0
        %2514 = vmatpush1.msra.mxu0 0.0
        %2515 = vmatprep.subr.mxu0 0.0
        %2516 = vmatpush1.msra.mxu0 0.0
        %2517 = vmatprep.subr.mxu0 0.0
        %2518 = vmatpush1.msra.mxu0 0.0
        %2519 = vmatprep.subr.mxu0 0.0
        %2520 = vmatpush1.msra.mxu0 0.0
        %2521 = vmatprep.mubr.f32.mxu0 %v2453
        %2522 = vmatmul.mubr.f32.gmra.mrb[0].mxu0 %v2443
        %v2523 = vpop.f32.mrb[0].mxu0
        %v2524 = vadd.f32 0.0, %v2523
        %v2525 = vpop.f32.mrb[0].mxu0
        %v2526 = vadd.f32 0.0, %v2525
        %2527 = vmatprep.mubr.f32.mxu0 %v2455
        %2528 = vmatmul.mubr.f32.gmra.mrb[0].mxu0 %v2448
        %v2529 = vpop.f32.mrb[0].mxu0
        %v2530 = vadd.f32 0.0, %v2529
        %v2531 = vpop.f32.mrb[0].mxu0
        %v2532 = vadd.f32 0.0, %v2531
        %2533 = vdwg.mxu0
        %v2534 = vadd.f32 %v2372, %v2524
        %v2535 = vadd.f32 %v2373, %v2526
        %v2536 = vadd.f32 %v2374, %v2530
        %v2537 = vadd.f32 %v2375, %v2532
        %s2538 = scalar_lea.vmem [#allocation8], 2240
        %v2539 = vld [vmem:[%s2538] sm:$0xff]
        %v2540 = vld [vmem:[%s2538 + $0x8] sm:$0xff]
        %v2541 = vld [vmem:[%s2538 + $0x10] sm:$0xff]
        %v2542 = vld [vmem:[%s2538 + $0x18] sm:$0xff]
        %v2543 = vld [vmem:[%s2538 + $0x20] sm:$0xff]
        %v2544 = vld [vmem:[%s2538 + $0x28] sm:$0xff]
        %v2545 = vld [vmem:[%s2538 + $0x30] sm:$0xff]
        %v2546 = vld [vmem:[%s2538 + $0x38] sm:$0xff]
        %v2547 = vld [vmem:[%s2538 + $0x40] sm:$0xff]
        %v2548 = vld [vmem:[%s2538 + $0x48] sm:$0xff]
        %v2549 = vld [vmem:[%s2538 + $0x50] sm:$0xff]
        %v2550 = vld [vmem:[%s2538 + $0x58] sm:$0xff]
        %v2551 = vld [vmem:[%s2538 + $0x60] sm:$0xff]
        %v2552 = vld [vmem:[%s2538 + $0x68] sm:$0xff]
        %v2553 = vld [vmem:[%s2538 + $0x70] sm:$0xff]
        %v2554 = vld [vmem:[%s2538 + $0x78] sm:$0xff]
        %v2555 = vld [vmem:[%s2538 + $0x80] sm:$0xff]
        %v2556 = vld [vmem:[%s2538 + $0x88] sm:$0xff]
        %v2557 = vld [vmem:[%s2538 + $0x90] sm:$0xff]
        %v2558 = vld [vmem:[%s2538 + $0x98] sm:$0xff]
        %v2559 = vld [vmem:[%s2538 + $0xa0] sm:$0xff]
        %v2560 = vld [vmem:[%s2538 + $0xa8] sm:$0xff]
        %v2561 = vld [vmem:[%s2538 + $0xb0] sm:$0xff]
        %v2562 = vld [vmem:[%s2538 + $0xb8] sm:$0xff]
        %v2563 = vld [vmem:[%s2538 + $0xc0] sm:$0xff]
        %v2564 = vld [vmem:[%s2538 + $0xc8] sm:$0xff]
        %v2565 = vld [vmem:[%s2538 + $0xd0] sm:$0xff]
        %v2566 = vld [vmem:[%s2538 + $0xd8] sm:$0xff]
        %v2567 = vld [vmem:[%s2538 + $0xe0] sm:$0xff]
        %v2568 = vld [vmem:[%s2538 + $0xe8] sm:$0xff]
        %v2569 = vld [vmem:[%s2538 + $0xf0] sm:$0xff]
        %v2570 = vld [vmem:[%s2538 + $0xf8] sm:$0xff]
        %v2571 = vld [vmem:[%s2538 + $0x100] sm:$0xff]
        %v2572 = vld [vmem:[%s2538 + $0x108] sm:$0xff]
        %v2573 = vld [vmem:[%s2538 + $0x110] sm:$0xff]
        %v2574 = vld [vmem:[%s2538 + $0x118] sm:$0xff]
        %v2575 = vld [vmem:[%s2538 + $0x120] sm:$0xff]
        %v2576 = vld [vmem:[%s2538 + $0x128] sm:$0xff]
        %v2577 = vld [vmem:[%s2538 + $0x130] sm:$0xff]
        %v2578 = vld [vmem:[%s2538 + $0x138] sm:$0xff]
        %v2579 = vld [vmem:[%s2538 + $0x140] sm:$0xff]
        %v2580 = vld [vmem:[%s2538 + $0x148] sm:$0xff]
        %v2581 = vld [vmem:[%s2538 + $0x150] sm:$0xff]
        %v2582 = vld [vmem:[%s2538 + $0x158] sm:$0xff]
        %v2583 = vld [vmem:[%s2538 + $0x160] sm:$0xff]
        %v2584 = vld [vmem:[%s2538 + $0x168] sm:$0xff]
        %v2585 = vld [vmem:[%s2538 + $0x170] sm:$0xff]
        %v2586 = vld [vmem:[%s2538 + $0x178] sm:$0xff]
        %v2587 = vld [vmem:[%s2538 + $0x180] sm:$0xff]
        %v2588 = vld [vmem:[%s2538 + $0x188] sm:$0xff]
        %v2589 = vld [vmem:[%s2538 + $0x190] sm:$0xff]
        %v2590 = vld [vmem:[%s2538 + $0x198] sm:$0xff]
        %v2591 = vld [vmem:[%s2538 + $0x1a0] sm:$0xff]
        %v2592 = vld [vmem:[%s2538 + $0x1a8] sm:$0xff]
        %v2593 = vld [vmem:[%s2538 + $0x1b0] sm:$0xff]
        %v2594 = vld [vmem:[%s2538 + $0x1b8] sm:$0xff]
        %s2595 = scalar_lea.vmem [#allocation8], 2688
        %v2596 = vld [vmem:[%s2595] sm:$0xff]
        %v2597 = vld [vmem:[%s2595 + $0x8] sm:$0xff]
        %v2598 = vld [vmem:[%s2595 + $0x10] sm:$0xff]
        %v2599 = vld [vmem:[%s2595 + $0x18] sm:$0xff]
        %v2600 = vld [vmem:[%s2595 + $0x20] sm:$0xff]
        %v2601 = vld [vmem:[%s2595 + $0x28] sm:$0xff]
        %v2602 = vld [vmem:[%s2595 + $0x30] sm:$0xff]
        %v2603 = vld [vmem:[%s2595 + $0x38] sm:$0xff]
        %v2604 = vld [vmem:[%s2595 + $0x40] sm:$0xff]
        %v2605 = vld [vmem:[%s2595 + $0x48] sm:$0xff]
        %v2606 = vld [vmem:[%s2595 + $0x50] sm:$0xff]
        %v2607 = vld [vmem:[%s2595 + $0x58] sm:$0xff]
        %v2608 = vld [vmem:[%s2595 + $0x60] sm:$0xff]
        %v2609 = vld [vmem:[%s2595 + $0x68] sm:$0xff]
        %v2610 = vld [vmem:[%s2595 + $0x70] sm:$0xff]
        %v2611 = vld [vmem:[%s2595 + $0x78] sm:$0xff]
        %v2612 = vld [vmem:[%s2595 + $0x80] sm:$0xff]
        %v2613 = vld [vmem:[%s2595 + $0x88] sm:$0xff]
        %v2614 = vld [vmem:[%s2595 + $0x90] sm:$0xff]
        %v2615 = vld [vmem:[%s2595 + $0x98] sm:$0xff]
        %v2616 = vld [vmem:[%s2595 + $0xa0] sm:$0xff]
        %v2617 = vld [vmem:[%s2595 + $0xa8] sm:$0xff]
        %v2618 = vld [vmem:[%s2595 + $0xb0] sm:$0xff]
        %v2619 = vld [vmem:[%s2595 + $0xb8] sm:$0xff]
        %v2620 = vld [vmem:[%s2595 + $0xc0] sm:$0xff]
        %v2621 = vld [vmem:[%s2595 + $0xc8] sm:$0xff]
        %v2622 = vld [vmem:[%s2595 + $0xd0] sm:$0xff]
        %v2623 = vld [vmem:[%s2595 + $0xd8] sm:$0xff]
        %v2624 = vld [vmem:[%s2595 + $0xe0] sm:$0xff]
        %v2625 = vld [vmem:[%s2595 + $0xe8] sm:$0xff]
        %v2626 = vld [vmem:[%s2595 + $0xf0] sm:$0xff]
        %v2627 = vld [vmem:[%s2595 + $0xf8] sm:$0xff]
        %v2628 = vld [vmem:[%s2595 + $0x100] sm:$0xff]
        %v2629 = vld [vmem:[%s2595 + $0x108] sm:$0xff]
        %v2630 = vld [vmem:[%s2595 + $0x110] sm:$0xff]
        %v2631 = vld [vmem:[%s2595 + $0x118] sm:$0xff]
        %v2632 = vld [vmem:[%s2595 + $0x120] sm:$0xff]
        %v2633 = vld [vmem:[%s2595 + $0x128] sm:$0xff]
        %v2634 = vld [vmem:[%s2595 + $0x130] sm:$0xff]
        %v2635 = vld [vmem:[%s2595 + $0x138] sm:$0xff]
        %v2636 = vld [vmem:[%s2595 + $0x140] sm:$0xff]
        %v2637 = vld [vmem:[%s2595 + $0x148] sm:$0xff]
        %v2638 = vld [vmem:[%s2595 + $0x150] sm:$0xff]
        %v2639 = vld [vmem:[%s2595 + $0x158] sm:$0xff]
        %v2640 = vld [vmem:[%s2595 + $0x160] sm:$0xff]
        %v2641 = vld [vmem:[%s2595 + $0x168] sm:$0xff]
        %v2642 = vld [vmem:[%s2595 + $0x170] sm:$0xff]
        %v2643 = vld [vmem:[%s2595 + $0x178] sm:$0xff]
        %v2644 = vld [vmem:[%s2595 + $0x180] sm:$0xff]
        %v2645 = vld [vmem:[%s2595 + $0x188] sm:$0xff]
        %v2646 = vld [vmem:[%s2595 + $0x190] sm:$0xff]
        %v2647 = vld [vmem:[%s2595 + $0x198] sm:$0xff]
        %v2648 = vld [vmem:[%s2595 + $0x1a0] sm:$0xff]
        %v2649 = vld [vmem:[%s2595 + $0x1a8] sm:$0xff]
        %v2650 = vld [vmem:[%s2595 + $0x1b0] sm:$0xff]
        %v2651 = vld [vmem:[%s2595 + $0x1b8] sm:$0xff]
        %2652 = vmatprep.subr.mxu0 %v2597
        %2653 = vmatpush1.msra.mxu0 %v2596
        %2654 = vmatprep.subr.mxu0 %v2599
        %2655 = vmatpush1.msra.mxu0 %v2598
        %2656 = vmatprep.subr.mxu0 %v2601
        %2657 = vmatpush1.msra.mxu0 %v2600
        %2658 = vmatprep.subr.mxu0 %v2603
        %2659 = vmatpush1.msra.mxu0 %v2602
        %2660 = vmatprep.subr.mxu0 %v2605
        %2661 = vmatpush1.msra.mxu0 %v2604
        %2662 = vmatprep.subr.mxu0 %v2607
        %2663 = vmatpush1.msra.mxu0 %v2606
        %2664 = vmatprep.subr.mxu0 %v2609
        %2665 = vmatpush1.msra.mxu0 %v2608
        %2666 = vmatprep.subr.mxu0 %v2611
        %2667 = vmatpush1.msra.mxu0 %v2610
        %2668 = vmatprep.subr.mxu0 %v2613
        %2669 = vmatpush1.msra.mxu0 %v2612
        %2670 = vmatprep.subr.mxu0 %v2615
        %2671 = vmatpush1.msra.mxu0 %v2614
        %2672 = vmatprep.subr.mxu0 %v2617
        %2673 = vmatpush1.msra.mxu0 %v2616
        %2674 = vmatprep.subr.mxu0 %v2619
        %2675 = vmatpush1.msra.mxu0 %v2618
        %2676 = vmatprep.subr.mxu0 %v2621
        %2677 = vmatpush1.msra.mxu0 %v2620
        %2678 = vmatprep.subr.mxu0 %v2623
        %2679 = vmatpush1.msra.mxu0 %v2622
        %2680 = vmatprep.subr.mxu0 %v2625
        %2681 = vmatpush1.msra.mxu0 %v2624
        %2682 = vmatprep.subr.mxu0 %v2627
        %2683 = vmatpush1.msra.mxu0 %v2626
        %2684 = vmatprep.subr.mxu0 %v2629
        %2685 = vmatpush1.msra.mxu0 %v2628
        %2686 = vmatprep.subr.mxu0 %v2631
        %2687 = vmatpush1.msra.mxu0 %v2630
        %2688 = vmatprep.subr.mxu0 %v2633
        %2689 = vmatpush1.msra.mxu0 %v2632
        %2690 = vmatprep.subr.mxu0 %v2635
        %2691 = vmatpush1.msra.mxu0 %v2634
        %2692 = vmatprep.subr.mxu0 %v2637
        %2693 = vmatpush1.msra.mxu0 %v2636
        %2694 = vmatprep.subr.mxu0 %v2639
        %2695 = vmatpush1.msra.mxu0 %v2638
        %2696 = vmatprep.subr.mxu0 %v2641
        %2697 = vmatpush1.msra.mxu0 %v2640
        %2698 = vmatprep.subr.mxu0 %v2643
        %2699 = vmatpush1.msra.mxu0 %v2642
        %2700 = vmatprep.subr.mxu0 %v2645
        %2701 = vmatpush1.msra.mxu0 %v2644
        %2702 = vmatprep.subr.mxu0 %v2647
        %2703 = vmatpush1.msra.mxu0 %v2646
        %2704 = vmatprep.subr.mxu0 %v2649
        %2705 = vmatpush1.msra.mxu0 %v2648
        %2706 = vmatprep.subr.mxu0 %v2651
        %2707 = vmatpush1.msra.mxu0 %v2650
        %2708 = vmatprep.subr.mxu0 0.0
        %2709 = vmatpush1.msra.mxu0 0.0
        %2710 = vmatprep.subr.mxu0 0.0
        %2711 = vmatpush1.msra.mxu0 0.0
        %2712 = vmatprep.subr.mxu0 0.0
        %2713 = vmatpush1.msra.mxu0 0.0
        %2714 = vmatprep.subr.mxu0 0.0
        %2715 = vmatpush1.msra.mxu0 0.0
        %2716 = vmatprep.mubr.f32.mxu0 %v1886
        %2717 = vmatmul.mubr.f32.gmra.mrb[0].mxu0 %v1880
        %v2718 = vpop.f32.mrb[0].mxu0
        %v2719 = vadd.f32 0.0, %v2718
        %v2720 = vpop.f32.mrb[0].mxu0
        %v2721 = vadd.f32 0.0, %v2720
        %2722 = vmatprep.mubr.f32.mxu0 %v1888
        %2723 = vmatmul.mubr.f32.gmra.mrb[0].mxu0 %v1879
        %v2724 = vpop.f32.mrb[0].mxu0
        %v2725 = vadd.f32 0.0, %v2724
        %v2726 = vpop.f32.mrb[0].mxu0
        %v2727 = vadd.f32 0.0, %v2726
        %2728 = vdwg.mxu0
        %2729 = vmatprep.subr.mxu0 %v2540
        %2730 = vmatpush1.msra.mxu0 %v2539
        %2731 = vmatprep.subr.mxu0 %v2542
        %2732 = vmatpush1.msra.mxu0 %v2541
        %2733 = vmatprep.subr.mxu0 %v2544
        %2734 = vmatpush1.msra.mxu0 %v2543
        %2735 = vmatprep.subr.mxu0 %v2546
        %2736 = vmatpush1.msra.mxu0 %v2545
        %2737 = vmatprep.subr.mxu0 %v2548
        %2738 = vmatpush1.msra.mxu0 %v2547
        %2739 = vmatprep.subr.mxu0 %v2550
        %2740 = vmatpush1.msra.mxu0 %v2549
        %2741 = vmatprep.subr.mxu0 %v2552
        %2742 = vmatpush1.msra.mxu0 %v2551
        %2743 = vmatprep.subr.mxu0 %v2554
        %2744 = vmatpush1.msra.mxu0 %v2553
        %2745 = vmatprep.subr.mxu0 %v2556
        %2746 = vmatpush1.msra.mxu0 %v2555
        %2747 = vmatprep.subr.mxu0 %v2558
        %2748 = vmatpush1.msra.mxu0 %v2557
        %2749 = vmatprep.subr.mxu0 %v2560
        %2750 = vmatpush1.msra.mxu0 %v2559
        %2751 = vmatprep.subr.mxu0 %v2562
        %2752 = vmatpush1.msra.mxu0 %v2561
        %2753 = vmatprep.subr.mxu0 %v2564
        %2754 = vmatpush1.msra.mxu0 %v2563
        %2755 = vmatprep.subr.mxu0 %v2566
        %2756 = vmatpush1.msra.mxu0 %v2565
        %2757 = vmatprep.subr.mxu0 %v2568
        %2758 = vmatpush1.msra.mxu0 %v2567
        %2759 = vmatprep.subr.mxu0 %v2570
        %2760 = vmatpush1.msra.mxu0 %v2569
        %2761 = vmatprep.subr.mxu0 %v2572
        %2762 = vmatpush1.msra.mxu0 %v2571
        %2763 = vmatprep.subr.mxu0 %v2574
        %2764 = vmatpush1.msra.mxu0 %v2573
        %2765 = vmatprep.subr.mxu0 %v2576
        %2766 = vmatpush1.msra.mxu0 %v2575
        %2767 = vmatprep.subr.mxu0 %v2578
        %2768 = vmatpush1.msra.mxu0 %v2577
        %2769 = vmatprep.subr.mxu0 %v2580
        %2770 = vmatpush1.msra.mxu0 %v2579
        %2771 = vmatprep.subr.mxu0 %v2582
        %2772 = vmatpush1.msra.mxu0 %v2581
        %2773 = vmatprep.subr.mxu0 %v2584
        %2774 = vmatpush1.msra.mxu0 %v2583
        %2775 = vmatprep.subr.mxu0 %v2586
        %2776 = vmatpush1.msra.mxu0 %v2585
        %2777 = vmatprep.subr.mxu0 %v2588
        %2778 = vmatpush1.msra.mxu0 %v2587
        %2779 = vmatprep.subr.mxu0 %v2590
        %2780 = vmatpush1.msra.mxu0 %v2589
        %2781 = vmatprep.subr.mxu0 %v2592
        %2782 = vmatpush1.msra.mxu0 %v2591
        %2783 = vmatprep.subr.mxu0 %v2594
        %2784 = vmatpush1.msra.mxu0 %v2593
        %2785 = vmatprep.subr.mxu0 0.0
        %2786 = vmatpush1.msra.mxu0 0.0
        %2787 = vmatprep.subr.mxu0 0.0
        %2788 = vmatpush1.msra.mxu0 0.0
        %2789 = vmatprep.subr.mxu0 0.0
        %2790 = vmatpush1.msra.mxu0 0.0
        %2791 = vmatprep.subr.mxu0 0.0
        %2792 = vmatpush1.msra.mxu0 0.0
        %2793 = vmatprep.mubr.f32.mxu0 %v1968
        %2794 = vmatmul.mubr.f32.gmra.mrb[0].mxu0 %v1752
        %v2795 = vpop.f32.mrb[0].mxu0
        %v2796 = vadd.f32 %v2719, %v2795
        %v2797 = vpop.f32.mrb[0].mxu0
        %v2798 = vadd.f32 %v2721, %v2797
        %2799 = vmatprep.mubr.f32.mxu0 %v1971
        %2800 = vmatmul.mubr.f32.gmra.mrb[0].mxu0 %v1754
        %v2801 = vpop.f32.mrb[0].mxu0
        %v2802 = vadd.f32 %v2725, %v2801
        %v2803 = vpop.f32.mrb[0].mxu0
        %v2804 = vadd.f32 %v2727, %v2803
        %2805 = vdwg.mxu0
        %s2806 = scalar_lea.vmem [#allocation8], 3136
        %v2807 = vld [vmem:[%s2806] sm:$0xff]
        %v2808 = vld [vmem:[%s2806 + $0x8] sm:$0xff]
        %v2809 = vld [vmem:[%s2806 + $0x10] sm:$0xff]
        %v2810 = vld [vmem:[%s2806 + $0x18] sm:$0xff]
        %v2811 = vld [vmem:[%s2806 + $0x20] sm:$0xff]
        %v2812 = vld [vmem:[%s2806 + $0x28] sm:$0xff]
        %v2813 = vld [vmem:[%s2806 + $0x30] sm:$0xff]
        %v2814 = vld [vmem:[%s2806 + $0x38] sm:$0xff]
        %v2815 = vld [vmem:[%s2806 + $0x40] sm:$0xff]
        %v2816 = vld [vmem:[%s2806 + $0x48] sm:$0xff]
        %v2817 = vld [vmem:[%s2806 + $0x50] sm:$0xff]
        %v2818 = vld [vmem:[%s2806 + $0x58] sm:$0xff]
        %v2819 = vld [vmem:[%s2806 + $0x60] sm:$0xff]
        %v2820 = vld [vmem:[%s2806 + $0x68] sm:$0xff]
        %v2821 = vld [vmem:[%s2806 + $0x70] sm:$0xff]
        %v2822 = vld [vmem:[%s2806 + $0x78] sm:$0xff]
        %v2823 = vld [vmem:[%s2806 + $0x80] sm:$0xff]
        %v2824 = vld [vmem:[%s2806 + $0x88] sm:$0xff]
        %v2825 = vld [vmem:[%s2806 + $0x90] sm:$0xff]
        %v2826 = vld [vmem:[%s2806 + $0x98] sm:$0xff]
        %v2827 = vld [vmem:[%s2806 + $0xa0] sm:$0xff]
        %v2828 = vld [vmem:[%s2806 + $0xa8] sm:$0xff]
        %v2829 = vld [vmem:[%s2806 + $0xb0] sm:$0xff]
        %v2830 = vld [vmem:[%s2806 + $0xb8] sm:$0xff]
        %v2831 = vld [vmem:[%s2806 + $0xc0] sm:$0xff]
        %v2832 = vld [vmem:[%s2806 + $0xc8] sm:$0xff]
        %v2833 = vld [vmem:[%s2806 + $0xd0] sm:$0xff]
        %v2834 = vld [vmem:[%s2806 + $0xd8] sm:$0xff]
        %v2835 = vld [vmem:[%s2806 + $0xe0] sm:$0xff]
        %v2836 = vld [vmem:[%s2806 + $0xe8] sm:$0xff]
        %v2837 = vld [vmem:[%s2806 + $0xf0] sm:$0xff]
        %v2838 = vld [vmem:[%s2806 + $0xf8] sm:$0xff]
        %v2839 = vld [vmem:[%s2806 + $0x100] sm:$0xff]
        %v2840 = vld [vmem:[%s2806 + $0x108] sm:$0xff]
        %v2841 = vld [vmem:[%s2806 + $0x110] sm:$0xff]
        %v2842 = vld [vmem:[%s2806 + $0x118] sm:$0xff]
        %v2843 = vld [vmem:[%s2806 + $0x120] sm:$0xff]
        %v2844 = vld [vmem:[%s2806 + $0x128] sm:$0xff]
        %v2845 = vld [vmem:[%s2806 + $0x130] sm:$0xff]
        %v2846 = vld [vmem:[%s2806 + $0x138] sm:$0xff]
        %v2847 = vld [vmem:[%s2806 + $0x140] sm:$0xff]
        %v2848 = vld [vmem:[%s2806 + $0x148] sm:$0xff]
        %v2849 = vld [vmem:[%s2806 + $0x150] sm:$0xff]
        %v2850 = vld [vmem:[%s2806 + $0x158] sm:$0xff]
        %v2851 = vld [vmem:[%s2806 + $0x160] sm:$0xff]
        %v2852 = vld [vmem:[%s2806 + $0x168] sm:$0xff]
        %v2853 = vld [vmem:[%s2806 + $0x170] sm:$0xff]
        %v2854 = vld [vmem:[%s2806 + $0x178] sm:$0xff]
        %v2855 = vld [vmem:[%s2806 + $0x180] sm:$0xff]
        %v2856 = vld [vmem:[%s2806 + $0x188] sm:$0xff]
        %v2857 = vld [vmem:[%s2806 + $0x190] sm:$0xff]
        %v2858 = vld [vmem:[%s2806 + $0x198] sm:$0xff]
        %v2859 = vld [vmem:[%s2806 + $0x1a0] sm:$0xff]
        %v2860 = vld [vmem:[%s2806 + $0x1a8] sm:$0xff]
        %v2861 = vld [vmem:[%s2806 + $0x1b0] sm:$0xff]
        %v2862 = vld [vmem:[%s2806 + $0x1b8] sm:$0xff]
        %2863 = vmatprep.subr.mxu0 %v2808
        %2864 = vmatpush1.msra.mxu0 %v2807
        %2865 = vmatprep.subr.mxu0 %v2810
        %2866 = vmatpush1.msra.mxu0 %v2809
        %2867 = vmatprep.subr.mxu0 %v2812
        %2868 = vmatpush1.msra.mxu0 %v2811
        %2869 = vmatprep.subr.mxu0 %v2814
        %2870 = vmatpush1.msra.mxu0 %v2813
        %2871 = vmatprep.subr.mxu0 %v2816
        %2872 = vmatpush1.msra.mxu0 %v2815
        %2873 = vmatprep.subr.mxu0 %v2818
        %2874 = vmatpush1.msra.mxu0 %v2817
        %2875 = vmatprep.subr.mxu0 %v2820
        %2876 = vmatpush1.msra.mxu0 %v2819
        %2877 = vmatprep.subr.mxu0 %v2822
        %2878 = vmatpush1.msra.mxu0 %v2821
        %2879 = vmatprep.subr.mxu0 %v2824
        %2880 = vmatpush1.msra.mxu0 %v2823
        %2881 = vmatprep.subr.mxu0 %v2826
        %2882 = vmatpush1.msra.mxu0 %v2825
        %2883 = vmatprep.subr.mxu0 %v2828
        %2884 = vmatpush1.msra.mxu0 %v2827
        %2885 = vmatprep.subr.mxu0 %v2830
        %2886 = vmatpush1.msra.mxu0 %v2829
        %2887 = vmatprep.subr.mxu0 %v2832
        %2888 = vmatpush1.msra.mxu0 %v2831
        %2889 = vmatprep.subr.mxu0 %v2834
        %2890 = vmatpush1.msra.mxu0 %v2833
        %2891 = vmatprep.subr.mxu0 %v2836
        %2892 = vmatpush1.msra.mxu0 %v2835
        %2893 = vmatprep.subr.mxu0 %v2838
        %2894 = vmatpush1.msra.mxu0 %v2837
        %2895 = vmatprep.subr.mxu0 %v2840
        %2896 = vmatpush1.msra.mxu0 %v2839
        %2897 = vmatprep.subr.mxu0 %v2842
        %2898 = vmatpush1.msra.mxu0 %v2841
        %2899 = vmatprep.subr.mxu0 %v2844
        %2900 = vmatpush1.msra.mxu0 %v2843
        %2901 = vmatprep.subr.mxu0 %v2846
        %2902 = vmatpush1.msra.mxu0 %v2845
        %2903 = vmatprep.subr.mxu0 %v2848
        %2904 = vmatpush1.msra.mxu0 %v2847
        %2905 = vmatprep.subr.mxu0 %v2850
        %2906 = vmatpush1.msra.mxu0 %v2849
        %2907 = vmatprep.subr.mxu0 %v2852
        %2908 = vmatpush1.msra.mxu0 %v2851
        %2909 = vmatprep.subr.mxu0 %v2854
        %2910 = vmatpush1.msra.mxu0 %v2853
        %2911 = vmatprep.subr.mxu0 %v2856
        %2912 = vmatpush1.msra.mxu0 %v2855
        %2913 = vmatprep.subr.mxu0 %v2858
        %2914 = vmatpush1.msra.mxu0 %v2857
        %2915 = vmatprep.subr.mxu0 %v2860
        %2916 = vmatpush1.msra.mxu0 %v2859
        %2917 = vmatprep.subr.mxu0 %v2862
        %2918 = vmatpush1.msra.mxu0 %v2861
        %2919 = vmatprep.subr.mxu0 0.0
        %2920 = vmatpush1.msra.mxu0 0.0
        %2921 = vmatprep.subr.mxu0 0.0
        %2922 = vmatpush1.msra.mxu0 0.0
        %2923 = vmatprep.subr.mxu0 0.0
        %2924 = vmatpush1.msra.mxu0 0.0
        %2925 = vmatprep.subr.mxu0 0.0
        %2926 = vmatpush1.msra.mxu0 0.0
        %2927 = vmatprep.mubr.f32.mxu0 %v2124
        %2928 = vmatmul.mubr.f32.gmra.mrb[0].mxu0 %v2118
        %v2929 = vpop.f32.mrb[0].mxu0
        %v2930 = vadd.f32 0.0, %v2929
        %v2931 = vpop.f32.mrb[0].mxu0
        %v2932 = vadd.f32 0.0, %v2931
        %2933 = vmatprep.mubr.f32.mxu0 %v2126
        %2934 = vmatmul.mubr.f32.gmra.mrb[0].mxu0 %v2117
        %v2935 = vpop.f32.mrb[0].mxu0
        %v2936 = vadd.f32 0.0, %v2935
        %v2937 = vpop.f32.mrb[0].mxu0
        %v2938 = vadd.f32 0.0, %v2937
        %2939 = vdwg.mxu0
        %v2940 = vadd.f32 %v2796, %v2930
        %v2941 = vadd.f32 %v2798, %v2932
        %v2942 = vadd.f32 %v2802, %v2936
        %v2943 = vadd.f32 %v2804, %v2938
        %s2944 = scalar_lea.vmem [#allocation8], 3584
        %v2945 = vld [vmem:[%s2944] sm:$0xff]
        %v2946 = vld [vmem:[%s2944 + $0x8] sm:$0xff]
        %v2947 = vld [vmem:[%s2944 + $0x10] sm:$0xff]
        %v2948 = vld [vmem:[%s2944 + $0x18] sm:$0xff]
        %v2949 = vld [vmem:[%s2944 + $0x20] sm:$0xff]
        %v2950 = vld [vmem:[%s2944 + $0x28] sm:$0xff]
        %v2951 = vld [vmem:[%s2944 + $0x30] sm:$0xff]
        %v2952 = vld [vmem:[%s2944 + $0x38] sm:$0xff]
        %v2953 = vld [vmem:[%s2944 + $0x40] sm:$0xff]
        %v2954 = vld [vmem:[%s2944 + $0x48] sm:$0xff]
        %v2955 = vld [vmem:[%s2944 + $0x50] sm:$0xff]
        %v2956 = vld [vmem:[%s2944 + $0x58] sm:$0xff]
        %v2957 = vld [vmem:[%s2944 + $0x60] sm:$0xff]
        %v2958 = vld [vmem:[%s2944 + $0x68] sm:$0xff]
        %v2959 = vld [vmem:[%s2944 + $0x70] sm:$0xff]
        %v2960 = vld [vmem:[%s2944 + $0x78] sm:$0xff]
        %v2961 = vld [vmem:[%s2944 + $0x80] sm:$0xff]
        %v2962 = vld [vmem:[%s2944 + $0x88] sm:$0xff]
        %v2963 = vld [vmem:[%s2944 + $0x90] sm:$0xff]
        %v2964 = vld [vmem:[%s2944 + $0x98] sm:$0xff]
        %v2965 = vld [vmem:[%s2944 + $0xa0] sm:$0xff]
        %v2966 = vld [vmem:[%s2944 + $0xa8] sm:$0xff]
        %v2967 = vld [vmem:[%s2944 + $0xb0] sm:$0xff]
        %v2968 = vld [vmem:[%s2944 + $0xb8] sm:$0xff]
        %v2969 = vld [vmem:[%s2944 + $0xc0] sm:$0xff]
        %v2970 = vld [vmem:[%s2944 + $0xc8] sm:$0xff]
        %v2971 = vld [vmem:[%s2944 + $0xd0] sm:$0xff]
        %v2972 = vld [vmem:[%s2944 + $0xd8] sm:$0xff]
        %v2973 = vld [vmem:[%s2944 + $0xe0] sm:$0xff]
        %v2974 = vld [vmem:[%s2944 + $0xe8] sm:$0xff]
        %v2975 = vld [vmem:[%s2944 + $0xf0] sm:$0xff]
        %v2976 = vld [vmem:[%s2944 + $0xf8] sm:$0xff]
        %v2977 = vld [vmem:[%s2944 + $0x100] sm:$0xff]
        %v2978 = vld [vmem:[%s2944 + $0x108] sm:$0xff]
        %v2979 = vld [vmem:[%s2944 + $0x110] sm:$0xff]
        %v2980 = vld [vmem:[%s2944 + $0x118] sm:$0xff]
        %v2981 = vld [vmem:[%s2944 + $0x120] sm:$0xff]
        %v2982 = vld [vmem:[%s2944 + $0x128] sm:$0xff]
        %v2983 = vld [vmem:[%s2944 + $0x130] sm:$0xff]
        %v2984 = vld [vmem:[%s2944 + $0x138] sm:$0xff]
        %v2985 = vld [vmem:[%s2944 + $0x140] sm:$0xff]
        %v2986 = vld [vmem:[%s2944 + $0x148] sm:$0xff]
        %v2987 = vld [vmem:[%s2944 + $0x150] sm:$0xff]
        %v2988 = vld [vmem:[%s2944 + $0x158] sm:$0xff]
        %v2989 = vld [vmem:[%s2944 + $0x160] sm:$0xff]
        %v2990 = vld [vmem:[%s2944 + $0x168] sm:$0xff]
        %v2991 = vld [vmem:[%s2944 + $0x170] sm:$0xff]
        %v2992 = vld [vmem:[%s2944 + $0x178] sm:$0xff]
        %v2993 = vld [vmem:[%s2944 + $0x180] sm:$0xff]
        %v2994 = vld [vmem:[%s2944 + $0x188] sm:$0xff]
        %v2995 = vld [vmem:[%s2944 + $0x190] sm:$0xff]
        %v2996 = vld [vmem:[%s2944 + $0x198] sm:$0xff]
        %v2997 = vld [vmem:[%s2944 + $0x1a0] sm:$0xff]
        %v2998 = vld [vmem:[%s2944 + $0x1a8] sm:$0xff]
        %v2999 = vld [vmem:[%s2944 + $0x1b0] sm:$0xff]
        %v3000 = vld [vmem:[%s2944 + $0x1b8] sm:$0xff]
        %3001 = vmatprep.subr.mxu0 %v2946
        %3002 = vmatpush1.msra.mxu0 %v2945
        %3003 = vmatprep.subr.mxu0 %v2948
        %3004 = vmatpush1.msra.mxu0 %v2947
        %3005 = vmatprep.subr.mxu0 %v2950
        %3006 = vmatpush1.msra.mxu0 %v2949
        %3007 = vmatprep.subr.mxu0 %v2952
        %3008 = vmatpush1.msra.mxu0 %v2951
        %3009 = vmatprep.subr.mxu0 %v2954
        %3010 = vmatpush1.msra.mxu0 %v2953
        %3011 = vmatprep.subr.mxu0 %v2956
        %3012 = vmatpush1.msra.mxu0 %v2955
        %3013 = vmatprep.subr.mxu0 %v2958
        %3014 = vmatpush1.msra.mxu0 %v2957
        %3015 = vmatprep.subr.mxu0 %v2960
        %3016 = vmatpush1.msra.mxu0 %v2959
        %3017 = vmatprep.subr.mxu0 %v2962
        %3018 = vmatpush1.msra.mxu0 %v2961
        %3019 = vmatprep.subr.mxu0 %v2964
        %3020 = vmatpush1.msra.mxu0 %v2963
        %3021 = vmatprep.subr.mxu0 %v2966
        %3022 = vmatpush1.msra.mxu0 %v2965
        %3023 = vmatprep.subr.mxu0 %v2968
        %3024 = vmatpush1.msra.mxu0 %v2967
        %3025 = vmatprep.subr.mxu0 %v2970
        %3026 = vmatpush1.msra.mxu0 %v2969
        %3027 = vmatprep.subr.mxu0 %v2972
        %3028 = vmatpush1.msra.mxu0 %v2971
        %3029 = vmatprep.subr.mxu0 %v2974
        %3030 = vmatpush1.msra.mxu0 %v2973
        %3031 = vmatprep.subr.mxu0 %v2976
        %3032 = vmatpush1.msra.mxu0 %v2975
        %3033 = vmatprep.subr.mxu0 %v2978
        %3034 = vmatpush1.msra.mxu0 %v2977
        %3035 = vmatprep.subr.mxu0 %v2980
        %3036 = vmatpush1.msra.mxu0 %v2979
        %3037 = vmatprep.subr.mxu0 %v2982
        %3038 = vmatpush1.msra.mxu0 %v2981
        %3039 = vmatprep.subr.mxu0 %v2984
        %3040 = vmatpush1.msra.mxu0 %v2983
        %3041 = vmatprep.subr.mxu0 %v2986
        %3042 = vmatpush1.msra.mxu0 %v2985
        %3043 = vmatprep.subr.mxu0 %v2988
        %3044 = vmatpush1.msra.mxu0 %v2987
        %3045 = vmatprep.subr.mxu0 %v2990
        %3046 = vmatpush1.msra.mxu0 %v2989
        %3047 = vmatprep.subr.mxu0 %v2992
        %3048 = vmatpush1.msra.mxu0 %v2991
        %3049 = vmatprep.subr.mxu0 %v2994
        %3050 = vmatpush1.msra.mxu0 %v2993
        %3051 = vmatprep.subr.mxu0 %v2996
        %3052 = vmatpush1.msra.mxu0 %v2995
        %3053 = vmatprep.subr.mxu0 %v2998
        %3054 = vmatpush1.msra.mxu0 %v2997
        %3055 = vmatprep.subr.mxu0 %v3000
        %3056 = vmatpush1.msra.mxu0 %v2999
        %3057 = vmatprep.subr.mxu0 0.0
        %3058 = vmatpush1.msra.mxu0 0.0
        %3059 = vmatprep.subr.mxu0 0.0
        %3060 = vmatpush1.msra.mxu0 0.0
        %3061 = vmatprep.subr.mxu0 0.0
        %3062 = vmatpush1.msra.mxu0 0.0
        %3063 = vmatprep.subr.mxu0 0.0
        %3064 = vmatpush1.msra.mxu0 0.0
        %3065 = vmatprep.mubr.f32.mxu0 %v2291
        %3066 = vmatmul.mubr.f32.gmra.mrb[0].mxu0 %v2281
        %v3067 = vpop.f32.mrb[0].mxu0
        %v3068 = vadd.f32 0.0, %v3067
        %v3069 = vpop.f32.mrb[0].mxu0
        %v3070 = vadd.f32 0.0, %v3069
        %3071 = vmatprep.mubr.f32.mxu0 %v2293
        %3072 = vmatmul.mubr.f32.gmra.mrb[0].mxu0 %v2286
        %v3073 = vpop.f32.mrb[0].mxu0
        %v3074 = vadd.f32 0.0, %v3073
        %v3075 = vpop.f32.mrb[0].mxu0
        %v3076 = vadd.f32 0.0, %v3075
        %3077 = vdwg.mxu0
        %v3078 = vadd.f32 %v2940, %v3068
        %v3079 = vadd.f32 %v2941, %v3070
        %v3080 = vadd.f32 %v2942, %v3074
        %v3081 = vadd.f32 %v2943, %v3076
        %s3082 = scalar_lea.vmem [#allocation8], 4032
        %v3083 = vld [vmem:[%s3082] sm:$0xff]
        %v3084 = vld [vmem:[%s3082 + $0x8] sm:$0xff]
        %v3085 = vld [vmem:[%s3082 + $0x10] sm:$0xff]
        %v3086 = vld [vmem:[%s3082 + $0x18] sm:$0xff]
        %v3087 = vld [vmem:[%s3082 + $0x20] sm:$0xff]
        %v3088 = vld [vmem:[%s3082 + $0x28] sm:$0xff]
        %v3089 = vld [vmem:[%s3082 + $0x30] sm:$0xff]
        %v3090 = vld [vmem:[%s3082 + $0x38] sm:$0xff]
        %v3091 = vld [vmem:[%s3082 + $0x40] sm:$0xff]
        %v3092 = vld [vmem:[%s3082 + $0x48] sm:$0xff]
        %v3093 = vld [vmem:[%s3082 + $0x50] sm:$0xff]
        %v3094 = vld [vmem:[%s3082 + $0x58] sm:$0xff]
        %v3095 = vld [vmem:[%s3082 + $0x60] sm:$0xff]
        %v3096 = vld [vmem:[%s3082 + $0x68] sm:$0xff]
        %v3097 = vld [vmem:[%s3082 + $0x70] sm:$0xff]
        %v3098 = vld [vmem:[%s3082 + $0x78] sm:$0xff]
        %v3099 = vld [vmem:[%s3082 + $0x80] sm:$0xff]
        %v3100 = vld [vmem:[%s3082 + $0x88] sm:$0xff]
        %v3101 = vld [vmem:[%s3082 + $0x90] sm:$0xff]
        %v3102 = vld [vmem:[%s3082 + $0x98] sm:$0xff]
        %v3103 = vld [vmem:[%s3082 + $0xa0] sm:$0xff]
        %v3104 = vld [vmem:[%s3082 + $0xa8] sm:$0xff]
        %v3105 = vld [vmem:[%s3082 + $0xb0] sm:$0xff]
        %v3106 = vld [vmem:[%s3082 + $0xb8] sm:$0xff]
        %v3107 = vld [vmem:[%s3082 + $0xc0] sm:$0xff]
        %v3108 = vld [vmem:[%s3082 + $0xc8] sm:$0xff]
        %v3109 = vld [vmem:[%s3082 + $0xd0] sm:$0xff]
        %v3110 = vld [vmem:[%s3082 + $0xd8] sm:$0xff]
        %v3111 = vld [vmem:[%s3082 + $0xe0] sm:$0xff]
        %v3112 = vld [vmem:[%s3082 + $0xe8] sm:$0xff]
        %v3113 = vld [vmem:[%s3082 + $0xf0] sm:$0xff]
        %v3114 = vld [vmem:[%s3082 + $0xf8] sm:$0xff]
        %v3115 = vld [vmem:[%s3082 + $0x100] sm:$0xff]
        %v3116 = vld [vmem:[%s3082 + $0x108] sm:$0xff]
        %v3117 = vld [vmem:[%s3082 + $0x110] sm:$0xff]
        %v3118 = vld [vmem:[%s3082 + $0x118] sm:$0xff]
        %v3119 = vld [vmem:[%s3082 + $0x120] sm:$0xff]
        %v3120 = vld [vmem:[%s3082 + $0x128] sm:$0xff]
        %v3121 = vld [vmem:[%s3082 + $0x130] sm:$0xff]
        %v3122 = vld [vmem:[%s3082 + $0x138] sm:$0xff]
        %v3123 = vld [vmem:[%s3082 + $0x140] sm:$0xff]
        %v3124 = vld [vmem:[%s3082 + $0x148] sm:$0xff]
        %v3125 = vld [vmem:[%s3082 + $0x150] sm:$0xff]
        %v3126 = vld [vmem:[%s3082 + $0x158] sm:$0xff]
        %v3127 = vld [vmem:[%s3082 + $0x160] sm:$0xff]
        %v3128 = vld [vmem:[%s3082 + $0x168] sm:$0xff]
        %v3129 = vld [vmem:[%s3082 + $0x170] sm:$0xff]
        %v3130 = vld [vmem:[%s3082 + $0x178] sm:$0xff]
        %v3131 = vld [vmem:[%s3082 + $0x180] sm:$0xff]
        %v3132 = vld [vmem:[%s3082 + $0x188] sm:$0xff]
        %v3133 = vld [vmem:[%s3082 + $0x190] sm:$0xff]
        %v3134 = vld [vmem:[%s3082 + $0x198] sm:$0xff]
        %v3135 = vld [vmem:[%s3082 + $0x1a0] sm:$0xff]
        %v3136 = vld [vmem:[%s3082 + $0x1a8] sm:$0xff]
        %v3137 = vld [vmem:[%s3082 + $0x1b0] sm:$0xff]
        %v3138 = vld [vmem:[%s3082 + $0x1b8] sm:$0xff]
        %3139 = vmatprep.subr.mxu0 %v3084
        %3140 = vmatpush1.msra.mxu0 %v3083
        %3141 = vmatprep.subr.mxu0 %v3086
        %3142 = vmatpush1.msra.mxu0 %v3085
        %3143 = vmatprep.subr.mxu0 %v3088
        %3144 = vmatpush1.msra.mxu0 %v3087
        %3145 = vmatprep.subr.mxu0 %v3090
        %3146 = vmatpush1.msra.mxu0 %v3089
        %3147 = vmatprep.subr.mxu0 %v3092
        %3148 = vmatpush1.msra.mxu0 %v3091
        %3149 = vmatprep.subr.mxu0 %v3094
        %3150 = vmatpush1.msra.mxu0 %v3093
        %3151 = vmatprep.subr.mxu0 %v3096
        %3152 = vmatpush1.msra.mxu0 %v3095
        %3153 = vmatprep.subr.mxu0 %v3098
        %3154 = vmatpush1.msra.mxu0 %v3097
        %3155 = vmatprep.subr.mxu0 %v3100
        %3156 = vmatpush1.msra.mxu0 %v3099
        %3157 = vmatprep.subr.mxu0 %v3102
        %3158 = vmatpush1.msra.mxu0 %v3101
        %3159 = vmatprep.subr.mxu0 %v3104
        %3160 = vmatpush1.msra.mxu0 %v3103
        %3161 = vmatprep.subr.mxu0 %v3106
        %3162 = vmatpush1.msra.mxu0 %v3105
        %3163 = vmatprep.subr.mxu0 %v3108
        %3164 = vmatpush1.msra.mxu0 %v3107
        %3165 = vmatprep.subr.mxu0 %v3110
        %3166 = vmatpush1.msra.mxu0 %v3109
        %3167 = vmatprep.subr.mxu0 %v3112
        %3168 = vmatpush1.msra.mxu0 %v3111
        %3169 = vmatprep.subr.mxu0 %v3114
        %3170 = vmatpush1.msra.mxu0 %v3113
        %3171 = vmatprep.subr.mxu0 %v3116
        %3172 = vmatpush1.msra.mxu0 %v3115
        %3173 = vmatprep.subr.mxu0 %v3118
        %3174 = vmatpush1.msra.mxu0 %v3117
        %3175 = vmatprep.subr.mxu0 %v3120
        %3176 = vmatpush1.msra.mxu0 %v3119
        %3177 = vmatprep.subr.mxu0 %v3122
        %3178 = vmatpush1.msra.mxu0 %v3121
        %3179 = vmatprep.subr.mxu0 %v3124
        %3180 = vmatpush1.msra.mxu0 %v3123
        %3181 = vmatprep.subr.mxu0 %v3126
        %3182 = vmatpush1.msra.mxu0 %v3125
        %3183 = vmatprep.subr.mxu0 %v3128
        %3184 = vmatpush1.msra.mxu0 %v3127
        %3185 = vmatprep.subr.mxu0 %v3130
        %3186 = vmatpush1.msra.mxu0 %v3129
        %3187 = vmatprep.subr.mxu0 %v3132
        %3188 = vmatpush1.msra.mxu0 %v3131
        %3189 = vmatprep.subr.mxu0 %v3134
        %3190 = vmatpush1.msra.mxu0 %v3133
        %3191 = vmatprep.subr.mxu0 %v3136
        %3192 = vmatpush1.msra.mxu0 %v3135
        %3193 = vmatprep.subr.mxu0 %v3138
        %3194 = vmatpush1.msra.mxu0 %v3137
        %3195 = vmatprep.subr.mxu0 0.0
        %3196 = vmatpush1.msra.mxu0 0.0
        %3197 = vmatprep.subr.mxu0 0.0
        %3198 = vmatpush1.msra.mxu0 0.0
        %3199 = vmatprep.subr.mxu0 0.0
        %3200 = vmatpush1.msra.mxu0 0.0
        %3201 = vmatprep.subr.mxu0 0.0
        %3202 = vmatpush1.msra.mxu0 0.0
        %3203 = vmatprep.mubr.f32.mxu0 %v2453
        %3204 = vmatmul.mubr.f32.gmra.mrb[0].mxu0 %v2443
        %v3205 = vpop.f32.mrb[0].mxu0
        %v3206 = vadd.f32 0.0, %v3205
        %v3207 = vpop.f32.mrb[0].mxu0
        %v3208 = vadd.f32 0.0, %v3207
        %3209 = vmatprep.mubr.f32.mxu0 %v2455
        %3210 = vmatmul.mubr.f32.gmra.mrb[0].mxu0 %v2448
        %v3211 = vpop.f32.mrb[0].mxu0
        %v3212 = vadd.f32 0.0, %v3211
        %v3213 = vpop.f32.mrb[0].mxu0
        %v3214 = vadd.f32 0.0, %v3213
        %3215 = vdwg.mxu0
        %v3216 = vadd.f32 %v3078, %v3206
        %v3217 = vadd.f32 %v3079, %v3208
        %v3218 = vadd.f32 %v3080, %v3212
        %v3219 = vadd.f32 %v3081, %v3214
        %v3220 = vmax.f32 %v2534, %v3216
        %v3221 = vmax.f32 %v2535, %v3217
        %v3222 = vmax.f32 %v2536, %v3218
        %v3223 = vmax.f32 %v2537, %v3219
        %v3224 = vld [vmem:[#allocation9] sm:$0x3]
        %v3226 = vlaneseq
        %v3227 = vshrl.u32 %v3226, 7
        %v3228 = vsub.s32 0, %v3227
        %v3229 = vrot.slane %v3224, %v3228
        %v3230 = vlaneseq
        %v3231 = vshrl.u32 %v3230, 7
        %v3232 = vsub.s32 1, %v3231
        %v3233 = vrot.slane %v3224, %v3232
        %v3236 = vadd.f32 %v3220, %v3229
        %v3237 = vadd.f32 %v3221, %v3233
        %v3238 = vadd.f32 %v3222, %v3229
        %v3239 = vadd.f32 %v3223, %v3233
        %v3240 = vmax.f32 %v3236, 0.0
        %v3241 = vmax.f32 %v3237, 0.0
        %v3242 = vmax.f32 %v3238, 0.0
        %v3243 = vmax.f32 %v3239, 0.0
        %v3244 = vld [vmem:[%s6] sm:$0x7f]
        %vm3245 = vcmask 113664
        %v3247 = vsel %vm3245, %v3244, 0
        %v3250 = vsel %vm2115, %v3242, 0
        %v3253 = vsel %vm2115, %v3243, 0
        %3255 = vmatprep.subr.mxu0 %v3241
        %3256 = vmatpush1.msra.mxu0 %v3240
        %3257 = vmatprep.subr.mxu0 %v3253
        %3258 = vmatpush1.msra.mxu0 %v3250
        %3259 = vmatprep.subr.mxu0 0.0
        %3260 = vmatpush1.msra.mxu0 0.0
        %3261 = vmatprep.subr.mxu0 0.0
        %3262 = vmatpush1.msra.mxu0 0.0
        %3263 = vmatprep.subr.mxu0 0.0
        %3264 = vmatpush1.msra.mxu0 0.0
        %3265 = vmatprep.subr.mxu0 0.0
        %3266 = vmatpush1.msra.mxu0 0.0
        %3267 = vmatprep.subr.mxu0 0.0
        %3268 = vmatpush1.msra.mxu0 0.0
        %3269 = vmatprep.subr.mxu0 0.0
        %3270 = vmatpush1.msra.mxu0 0.0
        %3271 = vmatprep.subr.mxu0 0.0
        %3272 = vmatpush1.msra.mxu0 0.0
        %3273 = vmatprep.subr.mxu0 0.0
        %3274 = vmatpush1.msra.mxu0 0.0
        %3275 = vmatprep.subr.mxu0 0.0
        %3276 = vmatpush1.msra.mxu0 0.0
        %3277 = vmatprep.subr.mxu0 0.0
        %3278 = vmatpush1.msra.mxu0 0.0
        %3279 = vmatprep.subr.mxu0 0.0
        %3280 = vmatpush1.msra.mxu0 0.0
        %3281 = vmatprep.subr.mxu0 0.0
        %3282 = vmatpush1.msra.mxu0 0.0
        %3283 = vmatprep.subr.mxu0 0.0
        %3284 = vmatpush1.msra.mxu0 0.0
        %3285 = vmatprep.subr.mxu0 0.0
        %3286 = vmatpush1.msra.mxu0 0.0
        %3287 = vmatprep.subr.mxu0 0.0
        %3288 = vmatpush1.msra.mxu0 0.0
        %3289 = vmatprep.subr.mxu0 0.0
        %3290 = vmatpush1.msra.mxu0 0.0
        %3291 = vmatprep.subr.mxu0 0.0
        %3292 = vmatpush1.msra.mxu0 0.0
        %3293 = vmatprep.subr.mxu0 0.0
        %3294 = vmatpush1.msra.mxu0 0.0
        %3295 = vmatprep.subr.mxu0 0.0
        %3296 = vmatpush1.msra.mxu0 0.0
        %3297 = vmatprep.subr.mxu0 0.0
        %3298 = vmatpush1.msra.mxu0 0.0
        %3299 = vmatprep.subr.mxu0 0.0
        %3300 = vmatpush1.msra.mxu0 0.0
        %3301 = vmatprep.subr.mxu0 0.0
        %3302 = vmatpush1.msra.mxu0 0.0
        %3303 = vmatprep.subr.mxu0 0.0
        %3304 = vmatpush1.msra.mxu0 0.0
        %3305 = vmatprep.subr.mxu0 0.0
        %3306 = vmatpush1.msra.mxu0 0.0
        %3307 = vmatprep.subr.mxu0 0.0
        %3308 = vmatpush1.msra.mxu0 0.0
        %3309 = vmatprep.subr.mxu0 0.0
        %3310 = vmatpush1.msra.mxu0 0.0
        %3311 = vmatprep.subr.mxu0 0.0
        %3312 = vmatpush1.msra.mxu0 0.0
        %3313 = vmatprep.subr.mxu0 0.0
        %3314 = vmatpush1.msra.mxu0 0.0
        %3315 = vmatprep.subr.mxu0 0.0
        %3316 = vmatpush1.msra.mxu0 0.0
        %3317 = vmatprep.subr.mxu0 0.0
        %3318 = vmatpush1.msra.mxu0 0.0
        %3319 = vmatprep.mubr.f32.mxu0 0.0
        %3320 = vmatmul.mubr.f32.gmra.mrb[0].mxu0 %v3247
        %v3321 = vpop.f32.mrb[0].mxu0
        %v3322 = vadd.f32 0.0, %v3321
        %v3323 = vpop.f32.mrb[0].mxu0
        %v3324 = vadd.f32 0.0, %v3323
        %3325 = vdwg.mxu0
        %s3326 = scalar_lea.vmem %s6, 8
        %v3327 = vld [vmem:[%s3326] sm:$0x7f]
        %v3329 = vsel %vm3245, %v3327, 0
        %3331 = vmatprep.subr.mxu0 %v3241
        %3332 = vmatpush1.msra.mxu0 %v3240
        %3333 = vmatprep.subr.mxu0 %v3253
        %3334 = vmatpush1.msra.mxu0 %v3250
        %3335 = vmatprep.subr.mxu0 0.0
        %3336 = vmatpush1.msra.mxu0 0.0
        %3337 = vmatprep.subr.mxu0 0.0
        %3338 = vmatpush1.msra.mxu0 0.0
        %3339 = vmatprep.subr.mxu0 0.0
        %3340 = vmatpush1.msra.mxu0 0.0
        %3341 = vmatprep.subr.mxu0 0.0
        %3342 = vmatpush1.msra.mxu0 0.0
        %3343 = vmatprep.subr.mxu0 0.0
        %3344 = vmatpush1.msra.mxu0 0.0
        %3345 = vmatprep.subr.mxu0 0.0
        %3346 = vmatpush1.msra.mxu0 0.0
        %3347 = vmatprep.subr.mxu0 0.0
        %3348 = vmatpush1.msra.mxu0 0.0
        %3349 = vmatprep.subr.mxu0 0.0
        %3350 = vmatpush1.msra.mxu0 0.0
        %3351 = vmatprep.subr.mxu0 0.0
        %3352 = vmatpush1.msra.mxu0 0.0
        %3353 = vmatprep.subr.mxu0 0.0
        %3354 = vmatpush1.msra.mxu0 0.0
        %3355 = vmatprep.subr.mxu0 0.0
        %3356 = vmatpush1.msra.mxu0 0.0
        %3357 = vmatprep.subr.mxu0 0.0
        %3358 = vmatpush1.msra.mxu0 0.0
        %3359 = vmatprep.subr.mxu0 0.0
        %3360 = vmatpush1.msra.mxu0 0.0
        %3361 = vmatprep.subr.mxu0 0.0
        %3362 = vmatpush1.msra.mxu0 0.0
        %3363 = vmatprep.subr.mxu0 0.0
        %3364 = vmatpush1.msra.mxu0 0.0
        %3365 = vmatprep.subr.mxu0 0.0
        %3366 = vmatpush1.msra.mxu0 0.0
        %3367 = vmatprep.subr.mxu0 0.0
        %3368 = vmatpush1.msra.mxu0 0.0
        %3369 = vmatprep.subr.mxu0 0.0
        %3370 = vmatpush1.msra.mxu0 0.0
        %3371 = vmatprep.subr.mxu0 0.0
        %3372 = vmatpush1.msra.mxu0 0.0
        %3373 = vmatprep.subr.mxu0 0.0
        %3374 = vmatpush1.msra.mxu0 0.0
        %3375 = vmatprep.subr.mxu0 0.0
        %3376 = vmatpush1.msra.mxu0 0.0
        %3377 = vmatprep.subr.mxu0 0.0
        %3378 = vmatpush1.msra.mxu0 0.0
        %3379 = vmatprep.subr.mxu0 0.0
        %3380 = vmatpush1.msra.mxu0 0.0
        %3381 = vmatprep.subr.mxu0 0.0
        %3382 = vmatpush1.msra.mxu0 0.0
        %3383 = vmatprep.subr.mxu0 0.0
        %3384 = vmatpush1.msra.mxu0 0.0
        %3385 = vmatprep.subr.mxu0 0.0
        %3386 = vmatpush1.msra.mxu0 0.0
        %3387 = vmatprep.subr.mxu0 0.0
        %3388 = vmatpush1.msra.mxu0 0.0
        %3389 = vmatprep.subr.mxu0 0.0
        %3390 = vmatpush1.msra.mxu0 0.0
        %3391 = vmatprep.subr.mxu0 0.0
        %3392 = vmatpush1.msra.mxu0 0.0
        %3393 = vmatprep.subr.mxu0 0.0
        %3394 = vmatpush1.msra.mxu0 0.0
        %3395 = vmatprep.mubr.f32.mxu0 0.0
        %3396 = vmatmul.mubr.f32.gmra.mrb[0].mxu0 %v3329
        %v3397 = vpop.f32.mrb[0].mxu0
        %v3398 = vadd.f32 0.0, %v3397
        %v3399 = vpop.f32.mrb[0].mxu0
        %v3400 = vadd.f32 0.0, %v3399
        %3401 = vdwg.mxu0
        %v3402 = vmax.f32 %v3322, %v3398
        %v3403 = vmax.f32 %v3324, %v3400
        %v3404 = vld [vmem:[#allocation11] sm:$0x1]
        %v3405 = vld [vmem:[%s7] sm:$0xff]
        %v3406 = vld [vmem:[%s7 + $0x8] sm:$0xff]
        %v3407 = vld [vmem:[%s7 + $0x10] sm:$0xff]
        %v3408 = vld [vmem:[%s7 + $0x18] sm:$0xff]
        %v3409 = vld [vmem:[%s7 + $0x20] sm:$0xff]
        %v3410 = vld [vmem:[%s7 + $0x28] sm:$0xff]
        %v3411 = vld [vmem:[%s7 + $0x30] sm:$0xff]
        %v3412 = vld [vmem:[%s7 + $0x38] sm:$0xff]
        %v3413 = vld [vmem:[%s7 + $0x40] sm:$0xff]
        %v3414 = vld [vmem:[%s7 + $0x48] sm:$0xff]
        %v3415 = vld [vmem:[%s7 + $0x50] sm:$0xff]
        %v3416 = vld [vmem:[%s7 + $0x58] sm:$0xff]
        %v3417 = vld [vmem:[%s7 + $0x60] sm:$0xff]
        %v3418 = vld [vmem:[%s7 + $0x68] sm:$0xff]
        %v3419 = vld [vmem:[%s7 + $0x70] sm:$0xff]
        %v3420 = vld [vmem:[%s7 + $0x78] sm:$0xff]
        %v3421 = vld [vmem:[%s7 + $0x80] sm:$0xff]
        %v3422 = vld [vmem:[%s7 + $0x88] sm:$0xff]
        %v3423 = vld [vmem:[%s7 + $0x90] sm:$0xff]
        %v3424 = vld [vmem:[%s7 + $0x98] sm:$0xff]
        %v3425 = vld [vmem:[%s7 + $0xa0] sm:$0xff]
        %v3426 = vld [vmem:[%s7 + $0xa8] sm:$0xff]
        %v3427 = vld [vmem:[%s7 + $0xb0] sm:$0xff]
        %v3428 = vld [vmem:[%s7 + $0xb8] sm:$0xff]
        %v3429 = vld [vmem:[%s7 + $0xc0] sm:$0xff]
        %v3430 = vld [vmem:[%s7 + $0xc8] sm:$0xff]
        %v3431 = vld [vmem:[%s7 + $0xd0] sm:$0xff]
        %v3432 = vld [vmem:[%s7 + $0xd8] sm:$0xff]
        %v3434 = vsel %vm1725, %v3403, 0
        %3436 = vmatprep.subr.mxu0 0.0
        %3437 = vmatpush1.msra.mxu0 %v3405
        %3438 = vmatprep.subr.mxu0 0.0
        %3439 = vmatpush1.msra.mxu0 %v3406
        %3440 = vmatprep.subr.mxu0 0.0
        %3441 = vmatpush1.msra.mxu0 %v3407
        %3442 = vmatprep.subr.mxu0 0.0
        %3443 = vmatpush1.msra.mxu0 %v3408
        %3444 = vmatprep.subr.mxu0 0.0
        %3445 = vmatpush1.msra.mxu0 %v3409
        %3446 = vmatprep.subr.mxu0 0.0
        %3447 = vmatpush1.msra.mxu0 %v3410
        %3448 = vmatprep.subr.mxu0 0.0
        %3449 = vmatpush1.msra.mxu0 %v3411
        %3450 = vmatprep.subr.mxu0 0.0
        %3451 = vmatpush1.msra.mxu0 %v3412
        %3452 = vmatprep.subr.mxu0 0.0
        %3453 = vmatpush1.msra.mxu0 %v3413
        %3454 = vmatprep.subr.mxu0 0.0
        %3455 = vmatpush1.msra.mxu0 %v3414
        %3456 = vmatprep.subr.mxu0 0.0
        %3457 = vmatpush1.msra.mxu0 %v3415
        %3458 = vmatprep.subr.mxu0 0.0
        %3459 = vmatpush1.msra.mxu0 %v3416
        %3460 = vmatprep.subr.mxu0 0.0
        %3461 = vmatpush1.msra.mxu0 %v3417
        %3462 = vmatprep.subr.mxu0 0.0
        %3463 = vmatpush1.msra.mxu0 %v3418
        %3464 = vmatprep.subr.mxu0 0.0
        %3465 = vmatpush1.msra.mxu0 %v3419
        %3466 = vmatprep.subr.mxu0 0.0
        %3467 = vmatpush1.msra.mxu0 %v3420
        %3468 = vmatprep.subr.mxu0 0.0
        %3469 = vmatpush1.msra.mxu0 %v3421
        %3470 = vmatprep.subr.mxu0 0.0
        %3471 = vmatpush1.msra.mxu0 %v3422
        %3472 = vmatprep.subr.mxu0 0.0
        %3473 = vmatpush1.msra.mxu0 %v3423
        %3474 = vmatprep.subr.mxu0 0.0
        %3475 = vmatpush1.msra.mxu0 %v3424
        %3476 = vmatprep.subr.mxu0 0.0
        %3477 = vmatpush1.msra.mxu0 %v3425
        %3478 = vmatprep.subr.mxu0 0.0
        %3479 = vmatpush1.msra.mxu0 %v3426
        %3480 = vmatprep.subr.mxu0 0.0
        %3481 = vmatpush1.msra.mxu0 %v3427
        %3482 = vmatprep.subr.mxu0 0.0
        %3483 = vmatpush1.msra.mxu0 %v3428
        %3484 = vmatprep.subr.mxu0 0.0
        %3485 = vmatpush1.msra.mxu0 %v3429
        %3486 = vmatprep.subr.mxu0 0.0
        %3487 = vmatpush1.msra.mxu0 %v3430
        %3488 = vmatprep.subr.mxu0 0.0
        %3489 = vmatpush1.msra.mxu0 %v3431
        %3490 = vmatprep.subr.mxu0 0.0
        %3491 = vmatpush1.msra.mxu0 %v3432
        %3492 = vmatprep.subr.mxu0 0.0
        %3493 = vmatpush1.msra.mxu0 0.0
        %3494 = vmatprep.subr.mxu0 0.0
        %3495 = vmatpush1.msra.mxu0 0.0
        %3496 = vmatprep.subr.mxu0 0.0
        %3497 = vmatpush1.msra.mxu0 0.0
        %3498 = vmatprep.subr.mxu0 0.0
        %3499 = vmatpush1.msra.mxu0 0.0
        %3500 = vmatprep.mubr.f32.mxu0 %v3434
        %3501 = vmatmul.mubr.f32.gmra.mrb[0].mxu0 %v3402
        %v3502 = vpop.f32.mrb[0].mxu0
        %v3503 = vadd.f32 0.0, %v3502
        %v3504 = vpop.f32.mrb[0].mxu0
        %3505 = vdwg.mxu0
        %v3506 = vadd.f32 %v3404, %v3503
        %s3507 = scalar_lea.vmem %s7, 224
        %v3508 = vld [vmem:[%s3507] sm:$0xff]
        %v3509 = vld [vmem:[%s3507 + $0x8] sm:$0xff]
        %v3510 = vld [vmem:[%s3507 + $0x10] sm:$0xff]
        %v3511 = vld [vmem:[%s3507 + $0x18] sm:$0xff]
        %v3512 = vld [vmem:[%s3507 + $0x20] sm:$0xff]
        %v3513 = vld [vmem:[%s3507 + $0x28] sm:$0xff]
        %v3514 = vld [vmem:[%s3507 + $0x30] sm:$0xff]
        %v3515 = vld [vmem:[%s3507 + $0x38] sm:$0xff]
        %v3516 = vld [vmem:[%s3507 + $0x40] sm:$0xff]
        %v3517 = vld [vmem:[%s3507 + $0x48] sm:$0xff]
        %v3518 = vld [vmem:[%s3507 + $0x50] sm:$0xff]
        %v3519 = vld [vmem:[%s3507 + $0x58] sm:$0xff]
        %v3520 = vld [vmem:[%s3507 + $0x60] sm:$0xff]
        %v3521 = vld [vmem:[%s3507 + $0x68] sm:$0xff]
        %v3522 = vld [vmem:[%s3507 + $0x70] sm:$0xff]
        %v3523 = vld [vmem:[%s3507 + $0x78] sm:$0xff]
        %v3524 = vld [vmem:[%s3507 + $0x80] sm:$0xff]
        %v3525 = vld [vmem:[%s3507 + $0x88] sm:$0xff]
        %v3526 = vld [vmem:[%s3507 + $0x90] sm:$0xff]
        %v3527 = vld [vmem:[%s3507 + $0x98] sm:$0xff]
        %v3528 = vld [vmem:[%s3507 + $0xa0] sm:$0xff]
        %v3529 = vld [vmem:[%s3507 + $0xa8] sm:$0xff]
        %v3530 = vld [vmem:[%s3507 + $0xb0] sm:$0xff]
        %v3531 = vld [vmem:[%s3507 + $0xb8] sm:$0xff]
        %v3532 = vld [vmem:[%s3507 + $0xc0] sm:$0xff]
        %v3533 = vld [vmem:[%s3507 + $0xc8] sm:$0xff]
        %v3534 = vld [vmem:[%s3507 + $0xd0] sm:$0xff]
        %v3535 = vld [vmem:[%s3507 + $0xd8] sm:$0xff]
        %v3537 = vrot.slane %v3402, 1
        %v3538 = vrot.slane %v3403, 1
        %v3540 = vsel %vm1725, %v3538, 0
        %3542 = vmatprep.subr.mxu0 0.0
        %3543 = vmatpush1.msra.mxu0 %v3508
        %3544 = vmatprep.subr.mxu0 0.0
        %3545 = vmatpush1.msra.mxu0 %v3509
        %3546 = vmatprep.subr.mxu0 0.0
        %3547 = vmatpush1.msra.mxu0 %v3510
        %3548 = vmatprep.subr.mxu0 0.0
        %3549 = vmatpush1.msra.mxu0 %v3511
        %3550 = vmatprep.subr.mxu0 0.0
        %3551 = vmatpush1.msra.mxu0 %v3512
        %3552 = vmatprep.subr.mxu0 0.0
        %3553 = vmatpush1.msra.mxu0 %v3513
        %3554 = vmatprep.subr.mxu0 0.0
        %3555 = vmatpush1.msra.mxu0 %v3514
        %3556 = vmatprep.subr.mxu0 0.0
        %3557 = vmatpush1.msra.mxu0 %v3515
        %3558 = vmatprep.subr.mxu0 0.0
        %3559 = vmatpush1.msra.mxu0 %v3516
        %3560 = vmatprep.subr.mxu0 0.0
        %3561 = vmatpush1.msra.mxu0 %v3517
        %3562 = vmatprep.subr.mxu0 0.0
        %3563 = vmatpush1.msra.mxu0 %v3518
        %3564 = vmatprep.subr.mxu0 0.0
        %3565 = vmatpush1.msra.mxu0 %v3519
        %3566 = vmatprep.subr.mxu0 0.0
        %3567 = vmatpush1.msra.mxu0 %v3520
        %3568 = vmatprep.subr.mxu0 0.0
        %3569 = vmatpush1.msra.mxu0 %v3521
        %3570 = vmatprep.subr.mxu0 0.0
        %3571 = vmatpush1.msra.mxu0 %v3522
        %3572 = vmatprep.subr.mxu0 0.0
        %3573 = vmatpush1.msra.mxu0 %v3523
        %3574 = vmatprep.subr.mxu0 0.0
        %3575 = vmatpush1.msra.mxu0 %v3524
        %3576 = vmatprep.subr.mxu0 0.0
        %3577 = vmatpush1.msra.mxu0 %v3525
        %3578 = vmatprep.subr.mxu0 0.0
        %3579 = vmatpush1.msra.mxu0 %v3526
        %3580 = vmatprep.subr.mxu0 0.0
        %3581 = vmatpush1.msra.mxu0 %v3527
        %3582 = vmatprep.subr.mxu0 0.0
        %3583 = vmatpush1.msra.mxu0 %v3528
        %3584 = vmatprep.subr.mxu0 0.0
        %3585 = vmatpush1.msra.mxu0 %v3529
        %3586 = vmatprep.subr.mxu0 0.0
        %3587 = vmatpush1.msra.mxu0 %v3530
        %3588 = vmatprep.subr.mxu0 0.0
        %3589 = vmatpush1.msra.mxu0 %v3531
        %3590 = vmatprep.subr.mxu0 0.0
        %3591 = vmatpush1.msra.mxu0 %v3532
        %3592 = vmatprep.subr.mxu0 0.0
        %3593 = vmatpush1.msra.mxu0 %v3533
        %3594 = vmatprep.subr.mxu0 0.0
        %3595 = vmatpush1.msra.mxu0 %v3534
        %3596 = vmatprep.subr.mxu0 0.0
        %3597 = vmatpush1.msra.mxu0 %v3535
        %3598 = vmatprep.subr.mxu0 0.0
        %3599 = vmatpush1.msra.mxu0 0.0
        %3600 = vmatprep.subr.mxu0 0.0
        %3601 = vmatpush1.msra.mxu0 0.0
        %3602 = vmatprep.subr.mxu0 0.0
        %3603 = vmatpush1.msra.mxu0 0.0
        %3604 = vmatprep.subr.mxu0 0.0
        %3605 = vmatpush1.msra.mxu0 0.0
        %3606 = vmatprep.mubr.f32.mxu0 %v3540
        %3607 = vmatmul.mubr.f32.gmra.mrb[0].mxu0 %v3537
        %v3608 = vpop.f32.mrb[0].mxu0
        %v3609 = vadd.f32 0.0, %v3608
        %v3610 = vpop.f32.mrb[0].mxu0
        %3611 = vdwg.mxu0
        %v3612 = vadd.f32 %v3506, %v3609
        %s3613 = scalar_lea.vmem %s7, 448
        %v3614 = vld [vmem:[%s3613] sm:$0xff]
        %v3615 = vld [vmem:[%s3613 + $0x8] sm:$0xff]
        %v3616 = vld [vmem:[%s3613 + $0x10] sm:$0xff]
        %v3617 = vld [vmem:[%s3613 + $0x18] sm:$0xff]
        %v3618 = vld [vmem:[%s3613 + $0x20] sm:$0xff]
        %v3619 = vld [vmem:[%s3613 + $0x28] sm:$0xff]
        %v3620 = vld [vmem:[%s3613 + $0x30] sm:$0xff]
        %v3621 = vld [vmem:[%s3613 + $0x38] sm:$0xff]
        %v3622 = vld [vmem:[%s3613 + $0x40] sm:$0xff]
        %v3623 = vld [vmem:[%s3613 + $0x48] sm:$0xff]
        %v3624 = vld [vmem:[%s3613 + $0x50] sm:$0xff]
        %v3625 = vld [vmem:[%s3613 + $0x58] sm:$0xff]
        %v3626 = vld [vmem:[%s3613 + $0x60] sm:$0xff]
        %v3627 = vld [vmem:[%s3613 + $0x68] sm:$0xff]
        %v3628 = vld [vmem:[%s3613 + $0x70] sm:$0xff]
        %v3629 = vld [vmem:[%s3613 + $0x78] sm:$0xff]
        %v3630 = vld [vmem:[%s3613 + $0x80] sm:$0xff]
        %v3631 = vld [vmem:[%s3613 + $0x88] sm:$0xff]
        %v3632 = vld [vmem:[%s3613 + $0x90] sm:$0xff]
        %v3633 = vld [vmem:[%s3613 + $0x98] sm:$0xff]
        %v3634 = vld [vmem:[%s3613 + $0xa0] sm:$0xff]
        %v3635 = vld [vmem:[%s3613 + $0xa8] sm:$0xff]
        %v3636 = vld [vmem:[%s3613 + $0xb0] sm:$0xff]
        %v3637 = vld [vmem:[%s3613 + $0xb8] sm:$0xff]
        %v3638 = vld [vmem:[%s3613 + $0xc0] sm:$0xff]
        %v3639 = vld [vmem:[%s3613 + $0xc8] sm:$0xff]
        %v3640 = vld [vmem:[%s3613 + $0xd0] sm:$0xff]
        %v3641 = vld [vmem:[%s3613 + $0xd8] sm:$0xff]
        %v3642 = vrot.slane %v3402, 2
        %v3643 = vrot.slane %v3403, 2
        %v3645 = vsel %vm1725, %v3643, 0
        %3647 = vmatprep.subr.mxu0 0.0
        %3648 = vmatpush1.msra.mxu0 %v3614
        %3649 = vmatprep.subr.mxu0 0.0
        %3650 = vmatpush1.msra.mxu0 %v3615
        %3651 = vmatprep.subr.mxu0 0.0
        %3652 = vmatpush1.msra.mxu0 %v3616
        %3653 = vmatprep.subr.mxu0 0.0
        %3654 = vmatpush1.msra.mxu0 %v3617
        %3655 = vmatprep.subr.mxu0 0.0
        %3656 = vmatpush1.msra.mxu0 %v3618
        %3657 = vmatprep.subr.mxu0 0.0
        %3658 = vmatpush1.msra.mxu0 %v3619
        %3659 = vmatprep.subr.mxu0 0.0
        %3660 = vmatpush1.msra.mxu0 %v3620
        %3661 = vmatprep.subr.mxu0 0.0
        %3662 = vmatpush1.msra.mxu0 %v3621
        %3663 = vmatprep.subr.mxu0 0.0
        %3664 = vmatpush1.msra.mxu0 %v3622
        %3665 = vmatprep.subr.mxu0 0.0
        %3666 = vmatpush1.msra.mxu0 %v3623
        %3667 = vmatprep.subr.mxu0 0.0
        %3668 = vmatpush1.msra.mxu0 %v3624
        %3669 = vmatprep.subr.mxu0 0.0
        %3670 = vmatpush1.msra.mxu0 %v3625
        %3671 = vmatprep.subr.mxu0 0.0
        %3672 = vmatpush1.msra.mxu0 %v3626
        %3673 = vmatprep.subr.mxu0 0.0
        %3674 = vmatpush1.msra.mxu0 %v3627
        %3675 = vmatprep.subr.mxu0 0.0
        %3676 = vmatpush1.msra.mxu0 %v3628
        %3677 = vmatprep.subr.mxu0 0.0
        %3678 = vmatpush1.msra.mxu0 %v3629
        %3679 = vmatprep.subr.mxu0 0.0
        %3680 = vmatpush1.msra.mxu0 %v3630
        %3681 = vmatprep.subr.mxu0 0.0
        %3682 = vmatpush1.msra.mxu0 %v3631
        %3683 = vmatprep.subr.mxu0 0.0
        %3684 = vmatpush1.msra.mxu0 %v3632
        %3685 = vmatprep.subr.mxu0 0.0
        %3686 = vmatpush1.msra.mxu0 %v3633
        %3687 = vmatprep.subr.mxu0 0.0
        %3688 = vmatpush1.msra.mxu0 %v3634
        %3689 = vmatprep.subr.mxu0 0.0
        %3690 = vmatpush1.msra.mxu0 %v3635
        %3691 = vmatprep.subr.mxu0 0.0
        %3692 = vmatpush1.msra.mxu0 %v3636
        %3693 = vmatprep.subr.mxu0 0.0
        %3694 = vmatpush1.msra.mxu0 %v3637
        %3695 = vmatprep.subr.mxu0 0.0
        %3696 = vmatpush1.msra.mxu0 %v3638
        %3697 = vmatprep.subr.mxu0 0.0
        %3698 = vmatpush1.msra.mxu0 %v3639
        %3699 = vmatprep.subr.mxu0 0.0
        %3700 = vmatpush1.msra.mxu0 %v3640
        %3701 = vmatprep.subr.mxu0 0.0
        %3702 = vmatpush1.msra.mxu0 %v3641
        %3703 = vmatprep.subr.mxu0 0.0
        %3704 = vmatpush1.msra.mxu0 0.0
        %3705 = vmatprep.subr.mxu0 0.0
        %3706 = vmatpush1.msra.mxu0 0.0
        %3707 = vmatprep.subr.mxu0 0.0
        %3708 = vmatpush1.msra.mxu0 0.0
        %3709 = vmatprep.subr.mxu0 0.0
        %3710 = vmatpush1.msra.mxu0 0.0
        %3711 = vmatprep.mubr.f32.mxu0 %v3645
        %3712 = vmatmul.mubr.f32.gmra.mrb[0].mxu0 %v3642
        %v3713 = vpop.f32.mrb[0].mxu0
        %v3714 = vadd.f32 0.0, %v3713
        %v3715 = vpop.f32.mrb[0].mxu0
        %3716 = vdwg.mxu0
        %v3717 = vadd.f32 %v3612, %v3714
        %s3718 = scalar_lea.vmem %s7, 672
        %v3719 = vld [vmem:[%s3718] sm:$0xff]
        %v3720 = vld [vmem:[%s3718 + $0x8] sm:$0xff]
        %v3721 = vld [vmem:[%s3718 + $0x10] sm:$0xff]
        %v3722 = vld [vmem:[%s3718 + $0x18] sm:$0xff]
        %v3723 = vld [vmem:[%s3718 + $0x20] sm:$0xff]
        %v3724 = vld [vmem:[%s3718 + $0x28] sm:$0xff]
        %v3725 = vld [vmem:[%s3718 + $0x30] sm:$0xff]
        %v3726 = vld [vmem:[%s3718 + $0x38] sm:$0xff]
        %v3727 = vld [vmem:[%s3718 + $0x40] sm:$0xff]
        %v3728 = vld [vmem:[%s3718 + $0x48] sm:$0xff]
        %v3729 = vld [vmem:[%s3718 + $0x50] sm:$0xff]
        %v3730 = vld [vmem:[%s3718 + $0x58] sm:$0xff]
        %v3731 = vld [vmem:[%s3718 + $0x60] sm:$0xff]
        %v3732 = vld [vmem:[%s3718 + $0x68] sm:$0xff]
        %v3733 = vld [vmem:[%s3718 + $0x70] sm:$0xff]
        %v3734 = vld [vmem:[%s3718 + $0x78] sm:$0xff]
        %v3735 = vld [vmem:[%s3718 + $0x80] sm:$0xff]
        %v3736 = vld [vmem:[%s3718 + $0x88] sm:$0xff]
        %v3737 = vld [vmem:[%s3718 + $0x90] sm:$0xff]
        %v3738 = vld [vmem:[%s3718 + $0x98] sm:$0xff]
        %v3739 = vld [vmem:[%s3718 + $0xa0] sm:$0xff]
        %v3740 = vld [vmem:[%s3718 + $0xa8] sm:$0xff]
        %v3741 = vld [vmem:[%s3718 + $0xb0] sm:$0xff]
        %v3742 = vld [vmem:[%s3718 + $0xb8] sm:$0xff]
        %v3743 = vld [vmem:[%s3718 + $0xc0] sm:$0xff]
        %v3744 = vld [vmem:[%s3718 + $0xc8] sm:$0xff]
        %v3745 = vld [vmem:[%s3718 + $0xd0] sm:$0xff]
        %v3746 = vld [vmem:[%s3718 + $0xd8] sm:$0xff]
        %v3747 = vrot.slane %v3402, 3
        %v3748 = vrot.slane %v3403, 3
        %v3750 = vsel %vm1725, %v3748, 0
        %3752 = vmatprep.subr.mxu0 0.0
        %3753 = vmatpush1.msra.mxu0 %v3719
        %3754 = vmatprep.subr.mxu0 0.0
        %3755 = vmatpush1.msra.mxu0 %v3720
        %3756 = vmatprep.subr.mxu0 0.0
        %3757 = vmatpush1.msra.mxu0 %v3721
        %3758 = vmatprep.subr.mxu0 0.0
        %3759 = vmatpush1.msra.mxu0 %v3722
        %3760 = vmatprep.subr.mxu0 0.0
        %3761 = vmatpush1.msra.mxu0 %v3723
        %3762 = vmatprep.subr.mxu0 0.0
        %3763 = vmatpush1.msra.mxu0 %v3724
        %3764 = vmatprep.subr.mxu0 0.0
        %3765 = vmatpush1.msra.mxu0 %v3725
        %3766 = vmatprep.subr.mxu0 0.0
        %3767 = vmatpush1.msra.mxu0 %v3726
        %3768 = vmatprep.subr.mxu0 0.0
        %3769 = vmatpush1.msra.mxu0 %v3727
        %3770 = vmatprep.subr.mxu0 0.0
        %3771 = vmatpush1.msra.mxu0 %v3728
        %3772 = vmatprep.subr.mxu0 0.0
        %3773 = vmatpush1.msra.mxu0 %v3729
        %3774 = vmatprep.subr.mxu0 0.0
        %3775 = vmatpush1.msra.mxu0 %v3730
        %3776 = vmatprep.subr.mxu0 0.0
        %3777 = vmatpush1.msra.mxu0 %v3731
        %3778 = vmatprep.subr.mxu0 0.0
        %3779 = vmatpush1.msra.mxu0 %v3732
        %3780 = vmatprep.subr.mxu0 0.0
        %3781 = vmatpush1.msra.mxu0 %v3733
        %3782 = vmatprep.subr.mxu0 0.0
        %3783 = vmatpush1.msra.mxu0 %v3734
        %3784 = vmatprep.subr.mxu0 0.0
        %3785 = vmatpush1.msra.mxu0 %v3735
        %3786 = vmatprep.subr.mxu0 0.0
        %3787 = vmatpush1.msra.mxu0 %v3736
        %3788 = vmatprep.subr.mxu0 0.0
        %3789 = vmatpush1.msra.mxu0 %v3737
        %3790 = vmatprep.subr.mxu0 0.0
        %3791 = vmatpush1.msra.mxu0 %v3738
        %3792 = vmatprep.subr.mxu0 0.0
        %3793 = vmatpush1.msra.mxu0 %v3739
        %3794 = vmatprep.subr.mxu0 0.0
        %3795 = vmatpush1.msra.mxu0 %v3740
        %3796 = vmatprep.subr.mxu0 0.0
        %3797 = vmatpush1.msra.mxu0 %v3741
        %3798 = vmatprep.subr.mxu0 0.0
        %3799 = vmatpush1.msra.mxu0 %v3742
        %3800 = vmatprep.subr.mxu0 0.0
        %3801 = vmatpush1.msra.mxu0 %v3743
        %3802 = vmatprep.subr.mxu0 0.0
        %3803 = vmatpush1.msra.mxu0 %v3744
        %3804 = vmatprep.subr.mxu0 0.0
        %3805 = vmatpush1.msra.mxu0 %v3745
        %3806 = vmatprep.subr.mxu0 0.0
        %3807 = vmatpush1.msra.mxu0 %v3746
        %3808 = vmatprep.subr.mxu0 0.0
        %3809 = vmatpush1.msra.mxu0 0.0
        %3810 = vmatprep.subr.mxu0 0.0
        %3811 = vmatpush1.msra.mxu0 0.0
        %3812 = vmatprep.subr.mxu0 0.0
        %3813 = vmatpush1.msra.mxu0 0.0
        %3814 = vmatprep.subr.mxu0 0.0
        %3815 = vmatpush1.msra.mxu0 0.0
        %3816 = vmatprep.mubr.f32.mxu0 %v3750
        %3817 = vmatmul.mubr.f32.gmra.mrb[0].mxu0 %v3747
        %v3818 = vpop.f32.mrb[0].mxu0
        %v3819 = vadd.f32 0.0, %v3818
        %v3820 = vpop.f32.mrb[0].mxu0
        %3821 = vdwg.mxu0
        %v3822 = vadd.f32 %v3717, %v3819
        %s3823 = scalar_lea.vmem %s7, 896
        %v3824 = vld [vmem:[%s3823] sm:$0xff]
        %v3825 = vld [vmem:[%s3823 + $0x8] sm:$0xff]
        %v3826 = vld [vmem:[%s3823 + $0x10] sm:$0xff]
        %v3827 = vld [vmem:[%s3823 + $0x18] sm:$0xff]
        %v3828 = vld [vmem:[%s3823 + $0x20] sm:$0xff]
        %v3829 = vld [vmem:[%s3823 + $0x28] sm:$0xff]
        %v3830 = vld [vmem:[%s3823 + $0x30] sm:$0xff]
        %v3831 = vld [vmem:[%s3823 + $0x38] sm:$0xff]
        %v3832 = vld [vmem:[%s3823 + $0x40] sm:$0xff]
        %v3833 = vld [vmem:[%s3823 + $0x48] sm:$0xff]
        %v3834 = vld [vmem:[%s3823 + $0x50] sm:$0xff]
        %v3835 = vld [vmem:[%s3823 + $0x58] sm:$0xff]
        %v3836 = vld [vmem:[%s3823 + $0x60] sm:$0xff]
        %v3837 = vld [vmem:[%s3823 + $0x68] sm:$0xff]
        %v3838 = vld [vmem:[%s3823 + $0x70] sm:$0xff]
        %v3839 = vld [vmem:[%s3823 + $0x78] sm:$0xff]
        %v3840 = vld [vmem:[%s3823 + $0x80] sm:$0xff]
        %v3841 = vld [vmem:[%s3823 + $0x88] sm:$0xff]
        %v3842 = vld [vmem:[%s3823 + $0x90] sm:$0xff]
        %v3843 = vld [vmem:[%s3823 + $0x98] sm:$0xff]
        %v3844 = vld [vmem:[%s3823 + $0xa0] sm:$0xff]
        %v3845 = vld [vmem:[%s3823 + $0xa8] sm:$0xff]
        %v3846 = vld [vmem:[%s3823 + $0xb0] sm:$0xff]
        %v3847 = vld [vmem:[%s3823 + $0xb8] sm:$0xff]
        %v3848 = vld [vmem:[%s3823 + $0xc0] sm:$0xff]
        %v3849 = vld [vmem:[%s3823 + $0xc8] sm:$0xff]
        %v3850 = vld [vmem:[%s3823 + $0xd0] sm:$0xff]
        %v3851 = vld [vmem:[%s3823 + $0xd8] sm:$0xff]
        %v3852 = vrot.slane %v3402, 4
        %v3853 = vrot.slane %v3403, 4
        %v3855 = vsel %vm1725, %v3853, 0
        %3857 = vmatprep.subr.mxu0 0.0
        %3858 = vmatpush1.msra.mxu0 %v3824
        %3859 = vmatprep.subr.mxu0 0.0
        %3860 = vmatpush1.msra.mxu0 %v3825
        %3861 = vmatprep.subr.mxu0 0.0
        %3862 = vmatpush1.msra.mxu0 %v3826
        %3863 = vmatprep.subr.mxu0 0.0
        %3864 = vmatpush1.msra.mxu0 %v3827
        %3865 = vmatprep.subr.mxu0 0.0
        %3866 = vmatpush1.msra.mxu0 %v3828
        %3867 = vmatprep.subr.mxu0 0.0
        %3868 = vmatpush1.msra.mxu0 %v3829
        %3869 = vmatprep.subr.mxu0 0.0
        %3870 = vmatpush1.msra.mxu0 %v3830
        %3871 = vmatprep.subr.mxu0 0.0
        %3872 = vmatpush1.msra.mxu0 %v3831
        %3873 = vmatprep.subr.mxu0 0.0
        %3874 = vmatpush1.msra.mxu0 %v3832
        %3875 = vmatprep.subr.mxu0 0.0
        %3876 = vmatpush1.msra.mxu0 %v3833
        %3877 = vmatprep.subr.mxu0 0.0
        %3878 = vmatpush1.msra.mxu0 %v3834
        %3879 = vmatprep.subr.mxu0 0.0
        %3880 = vmatpush1.msra.mxu0 %v3835
        %3881 = vmatprep.subr.mxu0 0.0
        %3882 = vmatpush1.msra.mxu0 %v3836
        %3883 = vmatprep.subr.mxu0 0.0
        %3884 = vmatpush1.msra.mxu0 %v3837
        %3885 = vmatprep.subr.mxu0 0.0
        %3886 = vmatpush1.msra.mxu0 %v3838
        %3887 = vmatprep.subr.mxu0 0.0
        %3888 = vmatpush1.msra.mxu0 %v3839
        %3889 = vmatprep.subr.mxu0 0.0
        %3890 = vmatpush1.msra.mxu0 %v3840
        %3891 = vmatprep.subr.mxu0 0.0
        %3892 = vmatpush1.msra.mxu0 %v3841
        %3893 = vmatprep.subr.mxu0 0.0
        %3894 = vmatpush1.msra.mxu0 %v3842
        %3895 = vmatprep.subr.mxu0 0.0
        %3896 = vmatpush1.msra.mxu0 %v3843
        %3897 = vmatprep.subr.mxu0 0.0
        %3898 = vmatpush1.msra.mxu0 %v3844
        %3899 = vmatprep.subr.mxu0 0.0
        %3900 = vmatpush1.msra.mxu0 %v3845
        %3901 = vmatprep.subr.mxu0 0.0
        %3902 = vmatpush1.msra.mxu0 %v3846
        %3903 = vmatprep.subr.mxu0 0.0
        %3904 = vmatpush1.msra.mxu0 %v3847
        %3905 = vmatprep.subr.mxu0 0.0
        %3906 = vmatpush1.msra.mxu0 %v3848
        %3907 = vmatprep.subr.mxu0 0.0
        %3908 = vmatpush1.msra.mxu0 %v3849
        %3909 = vmatprep.subr.mxu0 0.0
        %3910 = vmatpush1.msra.mxu0 %v3850
        %3911 = vmatprep.subr.mxu0 0.0
        %3912 = vmatpush1.msra.mxu0 %v3851
        %3913 = vmatprep.subr.mxu0 0.0
        %3914 = vmatpush1.msra.mxu0 0.0
        %3915 = vmatprep.subr.mxu0 0.0
        %3916 = vmatpush1.msra.mxu0 0.0
        %3917 = vmatprep.subr.mxu0 0.0
        %3918 = vmatpush1.msra.mxu0 0.0
        %3919 = vmatprep.subr.mxu0 0.0
        %3920 = vmatpush1.msra.mxu0 0.0
        %3921 = vmatprep.mubr.f32.mxu0 %v3855
        %3922 = vmatmul.mubr.f32.gmra.mrb[0].mxu0 %v3852
        %v3923 = vpop.f32.mrb[0].mxu0
        %v3924 = vadd.f32 0.0, %v3923
        %v3925 = vpop.f32.mrb[0].mxu0
        %3926 = vdwg.mxu0
        %v3927 = vadd.f32 %v3822, %v3924
        %s3928 = scalar_lea.vmem %s7, 1120
        %v3929 = vld [vmem:[%s3928] sm:$0xff]
        %v3930 = vld [vmem:[%s3928 + $0x8] sm:$0xff]
        %v3931 = vld [vmem:[%s3928 + $0x10] sm:$0xff]
        %v3932 = vld [vmem:[%s3928 + $0x18] sm:$0xff]
        %v3933 = vld [vmem:[%s3928 + $0x20] sm:$0xff]
        %v3934 = vld [vmem:[%s3928 + $0x28] sm:$0xff]
        %v3935 = vld [vmem:[%s3928 + $0x30] sm:$0xff]
        %v3936 = vld [vmem:[%s3928 + $0x38] sm:$0xff]
        %v3937 = vld [vmem:[%s3928 + $0x40] sm:$0xff]
        %v3938 = vld [vmem:[%s3928 + $0x48] sm:$0xff]
        %v3939 = vld [vmem:[%s3928 + $0x50] sm:$0xff]
        %v3940 = vld [vmem:[%s3928 + $0x58] sm:$0xff]
        %v3941 = vld [vmem:[%s3928 + $0x60] sm:$0xff]
        %v3942 = vld [vmem:[%s3928 + $0x68] sm:$0xff]
        %v3943 = vld [vmem:[%s3928 + $0x70] sm:$0xff]
        %v3944 = vld [vmem:[%s3928 + $0x78] sm:$0xff]
        %v3945 = vld [vmem:[%s3928 + $0x80] sm:$0xff]
        %v3946 = vld [vmem:[%s3928 + $0x88] sm:$0xff]
        %v3947 = vld [vmem:[%s3928 + $0x90] sm:$0xff]
        %v3948 = vld [vmem:[%s3928 + $0x98] sm:$0xff]
        %v3949 = vld [vmem:[%s3928 + $0xa0] sm:$0xff]
        %v3950 = vld [vmem:[%s3928 + $0xa8] sm:$0xff]
        %v3951 = vld [vmem:[%s3928 + $0xb0] sm:$0xff]
        %v3952 = vld [vmem:[%s3928 + $0xb8] sm:$0xff]
        %v3953 = vld [vmem:[%s3928 + $0xc0] sm:$0xff]
        %v3954 = vld [vmem:[%s3928 + $0xc8] sm:$0xff]
        %v3955 = vld [vmem:[%s3928 + $0xd0] sm:$0xff]
        %v3956 = vld [vmem:[%s3928 + $0xd8] sm:$0xff]
        %v3957 = vrot.slane %v3402, 5
        %v3958 = vrot.slane %v3403, 5
        %v3960 = vsel %vm1725, %v3958, 0
        %3962 = vmatprep.subr.mxu0 0.0
        %3963 = vmatpush1.msra.mxu0 %v3929
        %3964 = vmatprep.subr.mxu0 0.0
        %3965 = vmatpush1.msra.mxu0 %v3930
        %3966 = vmatprep.subr.mxu0 0.0
        %3967 = vmatpush1.msra.mxu0 %v3931
        %3968 = vmatprep.subr.mxu0 0.0
        %3969 = vmatpush1.msra.mxu0 %v3932
        %3970 = vmatprep.subr.mxu0 0.0
        %3971 = vmatpush1.msra.mxu0 %v3933
        %3972 = vmatprep.subr.mxu0 0.0
        %3973 = vmatpush1.msra.mxu0 %v3934
        %3974 = vmatprep.subr.mxu0 0.0
        %3975 = vmatpush1.msra.mxu0 %v3935
        %3976 = vmatprep.subr.mxu0 0.0
        %3977 = vmatpush1.msra.mxu0 %v3936
        %3978 = vmatprep.subr.mxu0 0.0
        %3979 = vmatpush1.msra.mxu0 %v3937
        %3980 = vmatprep.subr.mxu0 0.0
        %3981 = vmatpush1.msra.mxu0 %v3938
        %3982 = vmatprep.subr.mxu0 0.0
        %3983 = vmatpush1.msra.mxu0 %v3939
        %3984 = vmatprep.subr.mxu0 0.0
        %3985 = vmatpush1.msra.mxu0 %v3940
        %3986 = vmatprep.subr.mxu0 0.0
        %3987 = vmatpush1.msra.mxu0 %v3941
        %3988 = vmatprep.subr.mxu0 0.0
        %3989 = vmatpush1.msra.mxu0 %v3942
        %3990 = vmatprep.subr.mxu0 0.0
        %3991 = vmatpush1.msra.mxu0 %v3943
        %3992 = vmatprep.subr.mxu0 0.0
        %3993 = vmatpush1.msra.mxu0 %v3944
        %3994 = vmatprep.subr.mxu0 0.0
        %3995 = vmatpush1.msra.mxu0 %v3945
        %3996 = vmatprep.subr.mxu0 0.0
        %3997 = vmatpush1.msra.mxu0 %v3946
        %3998 = vmatprep.subr.mxu0 0.0
        %3999 = vmatpush1.msra.mxu0 %v3947
        %4000 = vmatprep.subr.mxu0 0.0
        %4001 = vmatpush1.msra.mxu0 %v3948
        %4002 = vmatprep.subr.mxu0 0.0
        %4003 = vmatpush1.msra.mxu0 %v3949
        %4004 = vmatprep.subr.mxu0 0.0
        %4005 = vmatpush1.msra.mxu0 %v3950
        %4006 = vmatprep.subr.mxu0 0.0
        %4007 = vmatpush1.msra.mxu0 %v3951
        %4008 = vmatprep.subr.mxu0 0.0
        %4009 = vmatpush1.msra.mxu0 %v3952
        %4010 = vmatprep.subr.mxu0 0.0
        %4011 = vmatpush1.msra.mxu0 %v3953
        %4012 = vmatprep.subr.mxu0 0.0
        %4013 = vmatpush1.msra.mxu0 %v3954
        %4014 = vmatprep.subr.mxu0 0.0
        %4015 = vmatpush1.msra.mxu0 %v3955
        %4016 = vmatprep.subr.mxu0 0.0
        %4017 = vmatpush1.msra.mxu0 %v3956
        %4018 = vmatprep.subr.mxu0 0.0
        %4019 = vmatpush1.msra.mxu0 0.0
        %4020 = vmatprep.subr.mxu0 0.0
        %4021 = vmatpush1.msra.mxu0 0.0
        %4022 = vmatprep.subr.mxu0 0.0
        %4023 = vmatpush1.msra.mxu0 0.0
        %4024 = vmatprep.subr.mxu0 0.0
        %4025 = vmatpush1.msra.mxu0 0.0
        %4026 = vmatprep.mubr.f32.mxu0 %v3960
        %4027 = vmatmul.mubr.f32.gmra.mrb[0].mxu0 %v3957
        %v4028 = vpop.f32.mrb[0].mxu0
        %v4029 = vadd.f32 0.0, %v4028
        %v4030 = vpop.f32.mrb[0].mxu0
        %4031 = vdwg.mxu0
        %v4032 = vadd.f32 %v3927, %v4029
        %s4033 = scalar_lea.vmem %s7, 1344
        %v4034 = vld [vmem:[%s4033] sm:$0xff]
        %v4035 = vld [vmem:[%s4033 + $0x8] sm:$0xff]
        %v4036 = vld [vmem:[%s4033 + $0x10] sm:$0xff]
        %v4037 = vld [vmem:[%s4033 + $0x18] sm:$0xff]
        %v4038 = vld [vmem:[%s4033 + $0x20] sm:$0xff]
        %v4039 = vld [vmem:[%s4033 + $0x28] sm:$0xff]
        %v4040 = vld [vmem:[%s4033 + $0x30] sm:$0xff]
        %v4041 = vld [vmem:[%s4033 + $0x38] sm:$0xff]
        %v4042 = vld [vmem:[%s4033 + $0x40] sm:$0xff]
        %v4043 = vld [vmem:[%s4033 + $0x48] sm:$0xff]
        %v4044 = vld [vmem:[%s4033 + $0x50] sm:$0xff]
        %v4045 = vld [vmem:[%s4033 + $0x58] sm:$0xff]
        %v4046 = vld [vmem:[%s4033 + $0x60] sm:$0xff]
        %v4047 = vld [vmem:[%s4033 + $0x68] sm:$0xff]
        %v4048 = vld [vmem:[%s4033 + $0x70] sm:$0xff]
        %v4049 = vld [vmem:[%s4033 + $0x78] sm:$0xff]
        %v4050 = vld [vmem:[%s4033 + $0x80] sm:$0xff]
        %v4051 = vld [vmem:[%s4033 + $0x88] sm:$0xff]
        %v4052 = vld [vmem:[%s4033 + $0x90] sm:$0xff]
        %v4053 = vld [vmem:[%s4033 + $0x98] sm:$0xff]
        %v4054 = vld [vmem:[%s4033 + $0xa0] sm:$0xff]
        %v4055 = vld [vmem:[%s4033 + $0xa8] sm:$0xff]
        %v4056 = vld [vmem:[%s4033 + $0xb0] sm:$0xff]
        %v4057 = vld [vmem:[%s4033 + $0xb8] sm:$0xff]
        %v4058 = vld [vmem:[%s4033 + $0xc0] sm:$0xff]
        %v4059 = vld [vmem:[%s4033 + $0xc8] sm:$0xff]
        %v4060 = vld [vmem:[%s4033 + $0xd0] sm:$0xff]
        %v4061 = vld [vmem:[%s4033 + $0xd8] sm:$0xff]
        %v4062 = vrot.slane %v3402, 6
        %v4063 = vrot.slane %v3403, 6
        %v4065 = vsel %vm1725, %v4063, 0
        %4067 = vmatprep.subr.mxu0 0.0
        %4068 = vmatpush1.msra.mxu0 %v4034
        %4069 = vmatprep.subr.mxu0 0.0
        %4070 = vmatpush1.msra.mxu0 %v4035
        %4071 = vmatprep.subr.mxu0 0.0
        %4072 = vmatpush1.msra.mxu0 %v4036
        %4073 = vmatprep.subr.mxu0 0.0
        %4074 = vmatpush1.msra.mxu0 %v4037
        %4075 = vmatprep.subr.mxu0 0.0
        %4076 = vmatpush1.msra.mxu0 %v4038
        %4077 = vmatprep.subr.mxu0 0.0
        %4078 = vmatpush1.msra.mxu0 %v4039
        %4079 = vmatprep.subr.mxu0 0.0
        %4080 = vmatpush1.msra.mxu0 %v4040
        %4081 = vmatprep.subr.mxu0 0.0
        %4082 = vmatpush1.msra.mxu0 %v4041
        %4083 = vmatprep.subr.mxu0 0.0
        %4084 = vmatpush1.msra.mxu0 %v4042
        %4085 = vmatprep.subr.mxu0 0.0
        %4086 = vmatpush1.msra.mxu0 %v4043
        %4087 = vmatprep.subr.mxu0 0.0
        %4088 = vmatpush1.msra.mxu0 %v4044
        %4089 = vmatprep.subr.mxu0 0.0
        %4090 = vmatpush1.msra.mxu0 %v4045
        %4091 = vmatprep.subr.mxu0 0.0
        %4092 = vmatpush1.msra.mxu0 %v4046
        %4093 = vmatprep.subr.mxu0 0.0
        %4094 = vmatpush1.msra.mxu0 %v4047
        %4095 = vmatprep.subr.mxu0 0.0
        %4096 = vmatpush1.msra.mxu0 %v4048
        %4097 = vmatprep.subr.mxu0 0.0
        %4098 = vmatpush1.msra.mxu0 %v4049
        %4099 = vmatprep.subr.mxu0 0.0
        %4100 = vmatpush1.msra.mxu0 %v4050
        %4101 = vmatprep.subr.mxu0 0.0
        %4102 = vmatpush1.msra.mxu0 %v4051
        %4103 = vmatprep.subr.mxu0 0.0
        %4104 = vmatpush1.msra.mxu0 %v4052
        %4105 = vmatprep.subr.mxu0 0.0
        %4106 = vmatpush1.msra.mxu0 %v4053
        %4107 = vmatprep.subr.mxu0 0.0
        %4108 = vmatpush1.msra.mxu0 %v4054
        %4109 = vmatprep.subr.mxu0 0.0
        %4110 = vmatpush1.msra.mxu0 %v4055
        %4111 = vmatprep.subr.mxu0 0.0
        %4112 = vmatpush1.msra.mxu0 %v4056
        %4113 = vmatprep.subr.mxu0 0.0
        %4114 = vmatpush1.msra.mxu0 %v4057
        %4115 = vmatprep.subr.mxu0 0.0
        %4116 = vmatpush1.msra.mxu0 %v4058
        %4117 = vmatprep.subr.mxu0 0.0
        %4118 = vmatpush1.msra.mxu0 %v4059
        %4119 = vmatprep.subr.mxu0 0.0
        %4120 = vmatpush1.msra.mxu0 %v4060
        %4121 = vmatprep.subr.mxu0 0.0
        %4122 = vmatpush1.msra.mxu0 %v4061
        %4123 = vmatprep.subr.mxu0 0.0
        %4124 = vmatpush1.msra.mxu0 0.0
        %4125 = vmatprep.subr.mxu0 0.0
        %4126 = vmatpush1.msra.mxu0 0.0
        %4127 = vmatprep.subr.mxu0 0.0
        %4128 = vmatpush1.msra.mxu0 0.0
        %4129 = vmatprep.subr.mxu0 0.0
        %4130 = vmatpush1.msra.mxu0 0.0
        %4131 = vmatprep.mubr.f32.mxu0 %v4065
        %4132 = vmatmul.mubr.f32.gmra.mrb[0].mxu0 %v4062
        %v4133 = vpop.f32.mrb[0].mxu0
        %v4134 = vadd.f32 0.0, %v4133
        %v4135 = vpop.f32.mrb[0].mxu0
        %4136 = vdwg.mxu0
        %v4137 = vadd.f32 %v4032, %v4134
        %vm4138 = vcmask 73728
        %4139 = vst.msk [vmem:[%s391] sm:$0x1] %vm4138, %v4137
        %s4140 = sand.u32 %s228, 1
        %s4141 = scalar_lea.sflag [#allocation5], %s4140
        %s4142 = sand.u32 %s228, 1
        %s4143 = scalar_lea.vmem [#allocation12], %s4142
        // Predicated region
        $region77: #{cnn_forward.1} parent=55 // pred_check
          %p4144 = pneg %p238
        $region78: #{cnn_forward.1} parent=55 // pred_check_branch
          %4146 = sbr.rel (%p4144) target = $region80
        $region79: #{cnn_forward.1} parent=55 // pred_region
          %s4148 = ssub.s32 16, 16
          %4149 = vsyncadd %s4141, %s4148
          %s4150 = smul.addr %s26, 16
          %s4151 = scalar_lea.hbm %s9, %s4150
          %s4153 = sshll.u32 %s4143, 4
          %s4154 = int_to_ptr.vmem [resolvable:$true] %s4153
          %4156 = dma.vmem_to_hbm [thread:$0]  %s4154, 16, %s4151, %s4141
        $region80: #{cnn_forward.1} parent=55 // pred_fallthru
          _
      $region56: #{cnn_forward.1} parent=5 // pred_fallthru
        _
      %p4157 = scmp.le.s32.totalorder 2, %s21
      // Predicated region
      $region81: #{cnn_forward.1} parent=5 // pred_check
        %p4158 = pneg %p4157
      $region82: #{cnn_forward.1} parent=5 // pred_check_branch
        %4160 = sbr.rel (%p4158) target = $region84
      $region83: #{cnn_forward.1} parent=5 // pred_region
        %s4161 = ssub.s32 %s21, 2
        // Predicated region
        $region85: #{cnn_forward.1} parent=83 // pred_check
          %p4162 = pneg %p244
        $region86: #{cnn_forward.1} parent=83 // pred_check_branch
          %4164 = sbr.rel (%p4162) target = $region88
        $region87: #{cnn_forward.1} parent=83 // pred_region
          %s4165 = sand.u32 %s229, 1
          %s4166 = scalar_lea.sflag [#allocation5], %s4165
          %s4167 = sand.u32 %s229, 1
          %s4168 = scalar_lea.vmem [#allocation12], %s4167
          %4169 = dma.done %s4166, 16
        $region88: #{cnn_forward.1} parent=83 // pred_fallthru
          _
      $region84: #{cnn_forward.1} parent=5 // pred_fallthru
        _
    $region6: #{cnn_forward.1} parent=1 // loop_footer
      %s25 = sadd.s32 1, %s21
    $region7: #{cnn_forward.1} parent=1 // loop_footer_branch
      %20 = sbr.rel target = $region3
    $region8: #{cnn_forward.1} parent=1 // loop_exit
      _
    %4170 = vsyncpa [#allocation4], 1
    %s4171 = scalar_lea.sflag [#allocation4], 1
    %4172 = vsyncpa %s4171, 1
    %4173 = vsyncpa [#allocation7], 1
    %4174 = vsyncpa [#allocation10], 1
    %4175 = vsyncpa [#allocation5], 1
    %s4176 = scalar_lea.sflag [#allocation5], 1
    %4177 = vsyncpa %s4176, 1

</llo_original>
